<compile_context>
chip_gen: v7x
topology: tpu7x:2x2x1
jax: 0.10.0
libtpu: 0.0.40
codegen_flags: <defaults>
</compile_context>

<pallas_src>
import functools

import jax
import jax.numpy as jnp
import numpy as np
from jax import lax
from jax.experimental import pallas as pl
from jax.experimental.pallas import tpu as pltpu


# ----------------------------------------------------------------------------------------
# Kernel 1: D-FPS (per-batch sequential farthest point sampling, seed index 0).
# ----------------------------------------------------------------------------------------
def _fps_kernel(xyz_ref, idx_ref, nxyz_ref, mind_ref, *, num_point):
    # xyz_ref:  (1, 3, N) f32  -- lane-dense, N in lanes
    # idx_ref:  (1, 1, S) i32  -- selected indices
    # nxyz_ref: (1, 3, S) f32  -- coordinates of selected points (channel-major)
    # mind_ref: (1, N)    f32  -- min-squared-distance buffer (VMEM scratch)
    xyz = xyz_ref[0]                                           # (3, N)
    N = xyz.shape[1]
    S = num_point
    px, py, pz = xyz[0:1, :], xyz[1:2, :], xyz[2:3, :]         # (1, N) each

    lane_n = lax.broadcasted_iota(jnp.int32, (1, N), 1)
    lane_s = lax.broadcasted_iota(jnp.int32, (1, S), 1)

    mind_ref[...] = jnp.full((1, N), 1e10, dtype=jnp.float32)

    cur0 = xyz[:, 0:1]                                         # (3, 1) seed = point 0
    idx0 = jnp.zeros((1, S), jnp.int32)
    nxyz0 = jnp.where(lane_s == 0, cur0, jnp.zeros((3, S), jnp.float32))

    def body(i, carry):
        cur, idx_vec, nxyz_acc = carry                         # cur: (3, 1) last selected point
        dx = px - cur[0:1, :]
        dy = py - cur[1:2, :]
        dz = pz - cur[2:3, :]
        d = dx * dx + dy * dy + dz * dz                        # (1, N) full-lane VPU
        mind = jnp.minimum(mind_ref[...], d)
        mind_ref[...] = mind
        maxv = jnp.max(mind)
        # argmax with first-index tie-break (CUDA reference tie-break is impl-defined).
        nxt = jnp.min(jnp.where(mind == maxv, lane_n, N)).astype(jnp.int32)
        sel_n = (lane_n == nxt).astype(jnp.float32)            # (1, N)
        nxt_xyz = jnp.sum(xyz * sel_n, axis=1, keepdims=True)  # (3, 1) exact (single nonzero)
        sel_s = lane_s == i
        idx_vec = jnp.where(sel_s, nxt, idx_vec)               # register accumulation
        nxyz_acc = jnp.where(sel_s, nxt_xyz, nxyz_acc)
        return nxt_xyz, idx_vec, nxyz_acc

    _, idx_vec, nxyz_acc = lax.fori_loop(1, S, body, (cur0, idx0, nxyz0))
    idx_ref[0] = idx_vec                                       # single vector store
    nxyz_ref[0] = nxyz_acc


def fps(xyz_cn, num_point):
    """xyz_cn: (B, 3, N) f32.  Returns fps_idx (B, S) i32 and new_xyz_cn (B, 3, S) f32."""
    B, _, N = xyz_cn.shape
    kern = functools.partial(_fps_kernel, num_point=num_point)
    idx, new_xyz_cn = pl.pallas_call(
        kern,
        out_shape=(jax.ShapeDtypeStruct((B, 1, num_point), jnp.int32),
                   jax.ShapeDtypeStruct((B, 3, num_point), jnp.float32)),
        grid=(B,),
        in_specs=[pl.BlockSpec((1, 3, N), lambda b: (b, 0, 0))],
        out_specs=(pl.BlockSpec((1, 1, num_point), lambda b: (b, 0, 0)),
                   pl.BlockSpec((1, 3, num_point), lambda b: (b, 0, 0))),
        scratch_shapes=[pltpu.VMEM((1, N), jnp.float32)],
        compiler_params=pltpu.CompilerParams(dimension_semantics=("parallel",)),
    )(xyz_cn)
    return idx.reshape(B, num_point), new_xyz_cn


# ----------------------------------------------------------------------------------------
# Kernel 2: ball query + grouping (mmcv semantics: first K in-radius indices in scan order,
# missing slots filled with the first found index, index 0 if nothing is in radius).
# ----------------------------------------------------------------------------------------
def _group_kernel(table_ref, qcs_ref, qsc_ref, out_ref, *, radius, num_sample):
    # table_ref: (1, 3+C, N) f32 -- rows 0:3 = xyz (channel-major), rows 3: = features
    # qcs_ref:   (1, 3, S)   f32 -- centers, channel-major
    # qsc_ref:   (1, S, 3)   f32 -- centers, row-major (per-center coords in sublanes)
    # out_ref:   (1, 3+C, K*S) f32 -- k-major flattening: column k*S + s
    table = table_ref[0]                                       # (CH, N)
    q_cs = qcs_ref[0]                                          # (3, S)
    q_sc = qsc_ref[0]                                          # (S, 3)
    CH, N = table.shape
    S = q_cs.shape[1]
    K = num_sample
    r2 = jnp.float32(radius * radius)

    px, py, pz = table[0:1, :], table[1:2, :], table[2:3, :]   # (1, N)
    qx, qy, qz = q_sc[:, 0:1], q_sc[:, 1:2], q_sc[:, 2:3]      # (S, 1)

    # direct squared-distance form on the VPU (no tiny-contraction matmuls, no cancellation)
    dx = px - qx
    dy = py - qy
    dz = pz - qz
    d2 = dx * dx + dy * dy + dz * dz                           # (S, N)
    mask = d2 < r2                                             # (S, N) bool

    lane_n = lax.broadcasted_iota(jnp.int32, (1, N), 1)
    big = jnp.int32(N)
    qpad = jnp.concatenate(
        [q_cs, jnp.zeros((CH - 3, S), jnp.float32)], axis=0)   # (CH, S), hoisted out of loop

    dn = (((1,), (1,)), ((), ()))                              # contract last dims: A @ B^T
    first = None
    for k in range(K):                                         # unrolled; K is small (16-64)
        cand = jnp.where(mask, lane_n, big)                    # (S, N)
        idx_k = jnp.min(cand, axis=1, keepdims=True)           # (S, 1) first remaining index
        found = idx_k < big
        if k == 0:
            first = jnp.where(found, idx_k, 0)                 # fallback index 0 if none
            sel = first
        else:
            sel = jnp.where(found, idx_k, first)               # fill with first-found index
        mask = mask & (lane_n != idx_k)                        # remove taken index
        # fused gather of [xyz ; features] via one one-hot MXU pass, channel-major output
        onehot = (lane_n == sel).astype(jnp.float32)           # (S, N)
        gk = lax.dot_general(table, onehot, dn,
                             preferred_element_type=jnp.float32)  # (CH, S)
        # relative coords for rows 0:3 (use_xyz=True); lane-dense contiguous store
        out_ref[0, :, k * S:(k + 1) * S] = gk - qpad


def query_and_group(table, new_xyz_cn, new_xyz_sc, radius, num_sample):
    B, CH, N = table.shape
    S = new_xyz_cn.shape[2]
    kern = functools.partial(_group_kernel, radius=radius, num_sample=num_sample)
    return pl.pallas_call(
        kern,
        out_shape=jax.ShapeDtypeStruct((B, CH, num_sample * S), jnp.float32),
        grid=(B,),
        in_specs=[pl.BlockSpec((1, CH, N), lambda b: (b, 0, 0)),
                  pl.BlockSpec((1, 3, S), lambda b: (b, 0, 0)),
                  pl.BlockSpec((1, S, 3), lambda b: (b, 0, 0))],
        out_specs=pl.BlockSpec((1, CH, num_sample * S), lambda b: (b, 0, 0)),
        compiler_params=pltpu.CompilerParams(dimension_semantics=("parallel",)),
    )(table, new_xyz_cn, new_xyz_sc)


# ----------------------------------------------------------------------------------------
# Wrapper matching LocalGrouper.forward
# ----------------------------------------------------------------------------------------
def local_grouper(xyz, features, *, num_point, radius, num_sample):
    """xyz (B, N, 3) f32, features (B, C, N) f32 -> (new_xyz, grouped, fps_idx)."""
    B, N, _ = xyz.shape
    C = features.shape[1]
    xyz_cn = jnp.transpose(xyz, (0, 2, 1))                      # (B, 3, N) lane-dense
    fps_idx, new_xyz_cn = fps(xyz_cn, num_point)                # (B, S) i32, (B, 3, S) f32
    new_xyz = jnp.transpose(new_xyz_cn, (0, 2, 1))              # (B, S, 3) (torch layout)
    table = jnp.concatenate([xyz_cn, features], axis=1)         # (B, 3+C, N) fused gather table
    grouped_km = query_and_group(table, new_xyz_cn, new_xyz,
                                 radius, num_sample)            # (B, 3+C, K*S), k-major
    grouped = grouped_km.reshape(B, 3 + C, num_sample, num_point)
    grouped = jnp.swapaxes(grouped, 2, 3)                       # (B, 3+C, S, K)
    return new_xyz, grouped, fps_idx


# ----------------------------------------------------------------------------------------
# Pure-numpy reference for correctness checking.
# ----------------------------------------------------------------------------------------
def _reference(xyz, features, num_point, radius, num_sample):
    xyz = np.asarray(xyz, np.float32)
    features = np.asarray(features, np.float32)
    B, N, _ = xyz.shape
    C = features.shape[1]
    r2 = np.float32(radius * radius)
    fps_idx = np.zeros((B, num_point), np.int32)
    for b in range(B):
        mind = np.full((N,), 1e10, np.float32)
        last = 0
        for i in range(1, num_point):
            d = np.sum((xyz[b] - xyz[b, last]) ** 2, axis=1).astype(np.float32)
            mind = np.minimum(mind, d)
            last = int(np.argmax(mind))
            fps_idx[b, i] = last
    new_xyz = np.take_along_axis(xyz, fps_idx[..., None].astype(np.int64), axis=1)
    grouped = np.zeros((B, 3 + C, num_point, num_sample), np.float32)
    for b in range(B):
        for s in range(num_point):
            d2 = np.sum((xyz[b] - new_xyz[b, s]) ** 2, axis=1).astype(np.float32)
            inr = np.nonzero(d2 < r2)[0]
            if len(inr) == 0:
                sel = np.zeros((num_sample,), np.int64)
            else:
                sel = np.full((num_sample,), inr[0], np.int64)
                m = min(num_sample, len(inr))
                sel[:m] = inr[:m]
            grouped[b, 0:3, s, :] = (xyz[b, sel] - new_xyz[b, s]).T
            grouped[b, 3:, s, :] = features[b][:, sel]
    return new_xyz, grouped, fps_idx


if __name__ == "__main__":
    # LocalGrouper has no learnable parameters; only (num_point, radius, num_sample, use_xyz=True).
    B, N, C = 2, 128, 4
    num_point, radius, num_sample = 32, 0.3, 16

    key = jax.random.PRNGKey(0)
    kx, kf = jax.random.split(key)
    xyz = jax.random.uniform(kx, (B, N, 3), dtype=jnp.float32)            # points in unit cube
    features = jax.random.normal(kf, (B, C, N), dtype=jnp.float32)        # torch (B, C, N) layout

    fn = jax.jit(functools.partial(local_grouper, num_point=num_point,
                                   radius=radius, num_sample=num_sample))
    new_xyz, grouped, fps_idx = jax.block_until_ready(fn(xyz, features))

    assert new_xyz.shape == (B, num_point, 3) and new_xyz.dtype == jnp.float32
    assert grouped.shape == (B, 3 + C, num_point, num_sample) and grouped.dtype == jnp.float32
    assert fps_idx.shape == (B, num_point) and fps_idx.dtype == jnp.int32

    ref_new_xyz, ref_grouped, ref_idx = _reference(xyz, features, num_point, radius, num_sample)
    np.testing.assert_array_equal(np.asarray(fps_idx), ref_idx)
    np.testing.assert_allclose(np.asarray(new_xyz), ref_new_xyz, rtol=1e-5, atol=1e-5)
    np.testing.assert_allclose(np.asarray(grouped), ref_grouped, rtol=1e-2, atol=1e-2)
    print("KERNEL_OK")
</pallas_src>

<mosaic_0001>
module attributes {stable_mosaic.version = 11 : i64} {
  func.func @_fps_kernel(%arg0: i32, %arg1: memref<1x3x128xf32, #tpu.memory_space<vmem>>, %arg2: memref<1x1x32xi32, #tpu.memory_space<vmem>>, %arg3: memref<1x3x32xf32, #tpu.memory_space<vmem>>, %arg4: memref<1x128xf32, #tpu.memory_space<vmem>>) attributes {dimension_semantics = [#tpu.dimension_semantics<parallel>], iteration_bounds = array<i64: 2>, scalar_prefetch = 0 : i64, scratch_operands = 1 : i64, tpu.core_type = #tpu.core_type<tc>, window_params = [{transform_indices = @transform_0, window_bounds = array<i64: 1, 3, 128>}, {transform_indices = @transform_1, window_bounds = array<i64: 1, 1, 32>}, {transform_indices = @transform_2, window_bounds = array<i64: 1, 3, 32>}]} {
    %c0 = arith.constant 0 : index
    %c0_0 = arith.constant 0 : index
    %c0_1 = arith.constant 0 : index
    %0 = vector.load %arg1[%c0, %c0_0, %c0_1] : memref<1x3x128xf32, #tpu.memory_space<vmem>>, vector<1x3x128xf32>
    %1 = vector.shape_cast %0 : vector<1x3x128xf32> to vector<3x128xf32>
    %2 = vector.extract_strided_slice %1 {offsets = [0, 0], sizes = [1, 128], strides = [1, 1]} : vector<3x128xf32> to vector<1x128xf32>
    %3 = vector.extract_strided_slice %1 {offsets = [1, 0], sizes = [1, 128], strides = [1, 1]} : vector<3x128xf32> to vector<1x128xf32>
    %4 = vector.extract_strided_slice %1 {offsets = [2, 0], sizes = [1, 128], strides = [1, 1]} : vector<3x128xf32> to vector<1x128xf32>
    %5 = tpu.iota {dimensions = array<i32: 1>} : vector<1x128xi32>
    %6 = tpu.iota {dimensions = array<i32: 1>} : vector<1x32xi32>
    %cst = arith.constant 1.000000e+10 : f32
    %7 = vector.broadcast %cst : f32 to vector<1x128xf32>
    %c0_2 = arith.constant 0 : index
    %c0_3 = arith.constant 0 : index
    %8 = vector.load %arg4[%c0_2, %c0_3] : memref<1x128xf32, #tpu.memory_space<vmem>>, vector<1x128xf32>
    tpu.vector_store %arg4[%c0_2, %c0_3], %7 {strides = array<i32>} : memref<1x128xf32, #tpu.memory_space<vmem>>, vector<1x128xf32>,
    %9 = vector.extract_strided_slice %1 {offsets = [0, 0], sizes = [3, 1], strides = [1, 1]} : vector<3x128xf32> to vector<3x1xf32>
    %c0_i32 = arith.constant 0 : i32
    %10 = vector.broadcast %c0_i32 : i32 to vector<1x32xi32>
    %c0_i32_4 = arith.constant 0 : i32
    %11 = vector.broadcast %c0_i32_4 : i32 to vector<1x32xi32>
    %12 = arith.cmpi eq, %6, %11 : vector<1x32xi32>
    %cst_5 = arith.constant 0.000000e+00 : f32
    %13 = vector.broadcast %cst_5 : f32 to vector<3x32xf32>
    %14 = vector.shape_cast %12 : vector<1x32xi1> to vector<1x32xi1>
    %15 = vector.broadcast %14 : vector<1x32xi1> to vector<3x32xi1>
    %16 = vector.shape_cast %9 : vector<3x1xf32> to vector<3x1xf32>
    %17 = vector.broadcast %16 : vector<3x1xf32> to vector<3x32xf32>
    %18 = arith.select %15, %17, %13 : vector<3x32xi1>, vector<3x32xf32>
    %c1_i32 = arith.constant 1 : i32
    %c31_i32 = arith.constant 31 : i32
    %19 = arith.addi %c1_i32, %c31_i32 : i32
    %c1_i32_6 = arith.constant 1 : i32
    %20:3 = scf.for %arg5 = %c1_i32 to %19 step %c1_i32_6 iter_args(%arg6 = %9, %arg7 = %10, %arg8 = %18) -> (vector<3x1xf32>, vector<1x32xi32>, vector<3x32xf32>)  : i32 {
      %27 = vector.extract_strided_slice %arg6 {offsets = [0, 0], sizes = [1, 1], strides = [1, 1]} : vector<3x1xf32> to vector<1x1xf32>
      %28 = vector.broadcast %27 : vector<1x1xf32> to vector<1x128xf32>
      %29 = arith.subf %2, %28 : vector<1x128xf32>
      %30 = vector.extract_strided_slice %arg6 {offsets = [1, 0], sizes = [1, 1], strides = [1, 1]} : vector<3x1xf32> to vector<1x1xf32>
      %31 = vector.broadcast %30 : vector<1x1xf32> to vector<1x128xf32>
      %32 = arith.subf %3, %31 : vector<1x128xf32>
      %33 = vector.extract_strided_slice %arg6 {offsets = [2, 0], sizes = [1, 1], strides = [1, 1]} : vector<3x1xf32> to vector<1x1xf32>
      %34 = vector.broadcast %33 : vector<1x1xf32> to vector<1x128xf32>
      %35 = arith.subf %4, %34 : vector<1x128xf32>
      %36 = arith.mulf %29, %29 : vector<1x128xf32>
      %37 = arith.mulf %32, %32 : vector<1x128xf32>
      %38 = arith.addf %36, %37 : vector<1x128xf32>
      %39 = arith.mulf %35, %35 : vector<1x128xf32>
      %40 = arith.addf %38, %39 : vector<1x128xf32>
      %c0_14 = arith.constant 0 : index
      %c0_15 = arith.constant 0 : index
      %41 = vector.load %arg4[%c0_14, %c0_15] : memref<1x128xf32, #tpu.memory_space<vmem>>, vector<1x128xf32>
      %42 = arith.minimumf %41, %40 : vector<1x128xf32>
      %c0_16 = arith.constant 0 : index
      %c0_17 = arith.constant 0 : index
      %43 = vector.load %arg4[%c0_16, %c0_17] : memref<1x128xf32, #tpu.memory_space<vmem>>, vector<1x128xf32>
      tpu.vector_store %arg4[%c0_16, %c0_17], %42 {strides = array<i32>} : memref<1x128xf32, #tpu.memory_space<vmem>>, vector<1x128xf32>,
      %44 = vector.shape_cast %42 : vector<1x128xf32> to vector<1x1x128xf32>
      %cst_18 = arith.constant dense<0xFF800000> : vector<1xf32>
      %45 = vector.multi_reduction <maximumf>, %44, %cst_18 [1, 2] : vector<1x1x128xf32> to vector<1xf32>
      %46 = vector.shape_cast %45 : vector<1xf32> to vector<1x1x1xf32>
      %47 = vector.extract %46[0, 0, 0] : f32 from vector<1x1x1xf32>
      %48 = vector.broadcast %47 : f32 to vector<1x128xf32>
      %49 = arith.cmpf oeq, %42, %48 : vector<1x128xf32>
      %c128_i32 = arith.constant 128 : i32
      %50 = vector.broadcast %c128_i32 : i32 to vector<1x128xi32>
      %51 = arith.select %49, %5, %50 : vector<1x128xi1>, vector<1x128xi32>
      %52 = vector.shape_cast %51 : vector<1x128xi32> to vector<1x1x128xi32>
      %cst_19 = arith.constant dense<2147483647> : vector<1xi32>
      %53 = vector.multi_reduction <minsi>, %52, %cst_19 [1, 2] : vector<1x1x128xi32> to vector<1xi32>
      %54 = vector.shape_cast %53 : vector<1xi32> to vector<1x1x1xi32>
      %55 = vector.extract %54[0, 0, 0] : i32 from vector<1x1x1xi32>
      %56 = vector.broadcast %55 : i32 to vector<1x128xi32>
      %57 = arith.cmpi eq, %5, %56 : vector<1x128xi32>
      %58 = arith.extui %57 : vector<1x128xi1> to vector<1x128xi32>
      %59 = arith.sitofp %58 : vector<1x128xi32> to vector<1x128xf32>
      %60 = vector.broadcast %59 : vector<1x128xf32> to vector<3x128xf32>
      %61 = arith.mulf %1, %60 : vector<3x128xf32>
      %cst_20 = arith.constant dense<0.000000e+00> : vector<3xf32>
      %62 = vector.multi_reduction <add>, %61, %cst_20 [1] : vector<3x128xf32> to vector<3xf32>
      %63 = vector.shape_cast %62 : vector<3xf32> to vector<3x1xf32>
      %64 = vector.broadcast %arg5 : i32 to vector<1x32xi32>
      %65 = arith.cmpi eq, %6, %64 : vector<1x32xi32>
      %66 = vector.broadcast %55 : i32 to vector<1x32xi32>
      %67 = arith.select %65, %66, %arg7 : vector<1x32xi1>, vector<1x32xi32>
      %68 = vector.shape_cast %65 : vector<1x32xi1> to vector<1x32xi1>
      %69 = vector.broadcast %68 : vector<1x32xi1> to vector<3x32xi1>
      %70 = vector.shape_cast %63 : vector<3x1xf32> to vector<3x1xf32>
      %71 = vector.broadcast %70 : vector<3x1xf32> to vector<3x32xf32>
      %72 = arith.select %69, %71, %arg8 : vector<3x32xi1>, vector<3x32xf32>
      scf.yield %63, %67, %72 : vector<3x1xf32>, vector<1x32xi32>, vector<3x32xf32>
    }
    %c31_i32_7 = arith.constant 31 : i32
    %c0_8 = arith.constant 0 : index
    %c0_9 = arith.constant 0 : index
    %c0_10 = arith.constant 0 : index
    %21 = vector.load %arg2[%c0_8, %c0_9, %c0_10] : memref<1x1x32xi32, #tpu.memory_space<vmem>>, vector<1x1x32xi32>
    %22 = vector.shape_cast %21 : vector<1x1x32xi32> to vector<1x32xi32>
    %23 = vector.shape_cast %20#1 : vector<1x32xi32> to vector<1x1x32xi32>
    tpu.vector_store %arg2[%c0_8, %c0_9, %c0_10], %23 {strides = array<i32>} : memref<1x1x32xi32, #tpu.memory_space<vmem>>, vector<1x1x32xi32>,
    %c0_11 = arith.constant 0 : index
    %c0_12 = arith.constant 0 : index
    %c0_13 = arith.constant 0 : index
    %24 = vector.load %arg3[%c0_11, %c0_12, %c0_13] : memref<1x3x32xf32, #tpu.memory_space<vmem>>, vector<1x3x32xf32>
    %25 = vector.shape_cast %24 : vector<1x3x32xf32> to vector<3x32xf32>
    %26 = vector.shape_cast %20#2 : vector<3x32xf32> to vector<1x3x32xf32>
    tpu.vector_store %arg3[%c0_11, %c0_12, %c0_13], %26 {strides = array<i32>} : memref<1x3x32xf32, #tpu.memory_space<vmem>>, vector<1x3x32xf32>,
    return
  }
  func.func @transform_0(%arg0: i32) -> (i32, i32, i32) {
    %c0_i32 = arith.constant 0 : i32
    %c0_i32_0 = arith.constant 0 : i32
    %c0_i32_1 = arith.constant 0 : i32
    return %arg0, %c0_i32, %c0_i32_0 : i32, i32, i32
  }
  func.func @transform_1(%arg0: i32) -> (i32, i32, i32) {
    %c0_i32 = arith.constant 0 : i32
    %c0_i32_0 = arith.constant 0 : i32
    %c0_i32_1 = arith.constant 0 : i32
    return %arg0, %c0_i32, %c0_i32_0 : i32, i32, i32
  }
  func.func @transform_2(%arg0: i32) -> (i32, i32, i32) {
    %c0_i32 = arith.constant 0 : i32
    %c0_i32_0 = arith.constant 0 : i32
    %c0_i32_1 = arith.constant 0 : i32
    return %arg0, %c0_i32, %c0_i32_0 : i32, i32, i32
  }
}

module attributes {stable_mosaic.version = 11 : i64} {
  func.func @_group_kernel(%arg0: i32, %arg1: memref<1x7x128xf32, #tpu.memory_space<vmem>>, %arg2: memref<1x3x32xf32, #tpu.memory_space<vmem>>, %arg3: memref<1x32x3xf32, #tpu.memory_space<vmem>>, %arg4: memref<1x7x512xf32, #tpu.memory_space<vmem>>) attributes {dimension_semantics = [#tpu.dimension_semantics<parallel>], iteration_bounds = array<i64: 2>, scalar_prefetch = 0 : i64, scratch_operands = 0 : i64, tpu.core_type = #tpu.core_type<tc>, window_params = [{transform_indices = @transform_0, window_bounds = array<i64: 1, 7, 128>}, {transform_indices = @transform_1, window_bounds = array<i64: 1, 3, 32>}, {transform_indices = @transform_2, window_bounds = array<i64: 1, 32, 3>}, {transform_indices = @transform_3, window_bounds = array<i64: 1, 7, 512>}]} {
    %c0 = arith.constant 0 : index
    %c0_0 = arith.constant 0 : index
    %c0_1 = arith.constant 0 : index
    %0 = vector.load %arg1[%c0, %c0_0, %c0_1] : memref<1x7x128xf32, #tpu.memory_space<vmem>>, vector<1x7x128xf32>
    %1 = vector.shape_cast %0 : vector<1x7x128xf32> to vector<7x128xf32>
    %c0_2 = arith.constant 0 : index
    %c0_3 = arith.constant 0 : index
    %c0_4 = arith.constant 0 : index
    %2 = vector.load %arg2[%c0_2, %c0_3, %c0_4] : memref<1x3x32xf32, #tpu.memory_space<vmem>>, vector<1x3x32xf32>
    %3 = vector.shape_cast %2 : vector<1x3x32xf32> to vector<3x32xf32>
    %c0_5 = arith.constant 0 : index
    %c0_6 = arith.constant 0 : index
    %c0_7 = arith.constant 0 : index
    %4 = vector.load %arg3[%c0_5, %c0_6, %c0_7] : memref<1x32x3xf32, #tpu.memory_space<vmem>>, vector<1x32x3xf32>
    %5 = vector.shape_cast %4 : vector<1x32x3xf32> to vector<32x3xf32>
    %6 = vector.extract_strided_slice %1 {offsets = [0, 0], sizes = [1, 128], strides = [1, 1]} : vector<7x128xf32> to vector<1x128xf32>
    %7 = vector.extract_strided_slice %1 {offsets = [1, 0], sizes = [1, 128], strides = [1, 1]} : vector<7x128xf32> to vector<1x128xf32>
    %8 = vector.extract_strided_slice %1 {offsets = [2, 0], sizes = [1, 128], strides = [1, 1]} : vector<7x128xf32> to vector<1x128xf32>
    %9 = vector.extract_strided_slice %5 {offsets = [0, 0], sizes = [32, 1], strides = [1, 1]} : vector<32x3xf32> to vector<32x1xf32>
    %10 = vector.extract_strided_slice %5 {offsets = [0, 1], sizes = [32, 1], strides = [1, 1]} : vector<32x3xf32> to vector<32x1xf32>
    %11 = vector.extract_strided_slice %5 {offsets = [0, 2], sizes = [32, 1], strides = [1, 1]} : vector<32x3xf32> to vector<32x1xf32>
    %12 = vector.broadcast %6 : vector<1x128xf32> to vector<32x128xf32>
    %13 = vector.broadcast %9 : vector<32x1xf32> to vector<32x128xf32>
    %14 = arith.subf %12, %13 : vector<32x128xf32>
    %15 = vector.broadcast %7 : vector<1x128xf32> to vector<32x128xf32>
    %16 = vector.broadcast %10 : vector<32x1xf32> to vector<32x128xf32>
    %17 = arith.subf %15, %16 : vector<32x128xf32>
    %18 = vector.broadcast %8 : vector<1x128xf32> to vector<32x128xf32>
    %19 = vector.broadcast %11 : vector<32x1xf32> to vector<32x128xf32>
    %20 = arith.subf %18, %19 : vector<32x128xf32>
    %21 = arith.mulf %14, %14 : vector<32x128xf32>
    %22 = arith.mulf %17, %17 : vector<32x128xf32>
    %23 = arith.addf %21, %22 : vector<32x128xf32>
    %24 = arith.mulf %20, %20 : vector<32x128xf32>
    %25 = arith.addf %23, %24 : vector<32x128xf32>
    %cst = arith.constant 9.000000e-02 : f32
    %26 = vector.broadcast %cst : f32 to vector<32x128xf32>
    %27 = arith.cmpf olt, %25, %26 : vector<32x128xf32>
    %28 = tpu.iota {dimensions = array<i32: 1>} : vector<1x128xi32>
    %cst_8 = arith.constant 0.000000e+00 : f32
    %29 = vector.broadcast %cst_8 : f32 to vector<4x32xf32>
    %30 = tpu.concatenate %3, %29 in 0 : vector<3x32xf32>, vector<4x32xf32> -> vector<7x32xf32>
    %c128_i32 = arith.constant 128 : i32
    %31 = vector.shape_cast %28 : vector<1x128xi32> to vector<1x128xi32>
    %32 = vector.broadcast %31 : vector<1x128xi32> to vector<32x128xi32>
    %33 = vector.broadcast %c128_i32 : i32 to vector<32x128xi32>
    %34 = arith.select %27, %32, %33 : vector<32x128xi1>, vector<32x128xi32>
    %cst_9 = arith.constant dense<2147483647> : vector<32xi32>
    %35 = vector.multi_reduction <minsi>, %34, %cst_9 [1] : vector<32x128xi32> to vector<32xi32>
    %36 = vector.shape_cast %35 : vector<32xi32> to vector<32x1xi32>
    %c128_i32_10 = arith.constant 128 : i32
    %37 = vector.broadcast %c128_i32_10 : i32 to vector<32x1xi32>
    %38 = arith.cmpi slt, %36, %37 : vector<32x1xi32>
    %c0_i32 = arith.constant 0 : i32
    %39 = vector.broadcast %c0_i32 : i32 to vector<32x1xi32>
    %40 = arith.select %38, %36, %39 : vector<32x1xi1>, vector<32x1xi32>
    %41 = vector.broadcast %28 : vector<1x128xi32> to vector<32x128xi32>
    %42 = vector.broadcast %36 : vector<32x1xi32> to vector<32x128xi32>
    %43 = arith.cmpi ne, %41, %42 : vector<32x128xi32>
    %44 = arith.andi %27, %43 : vector<32x128xi1>
    %45 = vector.broadcast %28 : vector<1x128xi32> to vector<32x128xi32>
    %46 = vector.broadcast %40 : vector<32x1xi32> to vector<32x128xi32>
    %47 = arith.cmpi eq, %45, %46 : vector<32x128xi32>
    %48 = arith.extui %47 : vector<32x128xi1> to vector<32x128xi32>
    %49 = arith.sitofp %48 : vector<32x128xi32> to vector<32x128xf32>
    %cst_11 = arith.constant dense<0.000000e+00> : vector<7x32xf32>
    %50 = tpu.matmul %1, %49, %cst_11 {dimension_numbers = #tpu.dot_dimension_numbers<[1], [1], [0], [0], [0, 0, 1, 0], [], []>} : vector<7x128xf32>, vector<32x128xf32>, vector<7x32xf32> -> vector<7x32xf32>
    %51 = arith.subf %50, %30 : vector<7x32xf32>
    %c0_12 = arith.constant 0 : index
    %c0_13 = arith.constant 0 : index
    %c0_14 = arith.constant 0 : index
    %52 = vector.load %arg4[%c0_12, %c0_13, %c0_14] : memref<1x7x512xf32, #tpu.memory_space<vmem>>, vector<1x7x32xf32>
    %53 = vector.shape_cast %52 : vector<1x7x32xf32> to vector<7x32xf32>
    %54 = vector.shape_cast %51 : vector<7x32xf32> to vector<1x7x32xf32>
    tpu.vector_store %arg4[%c0_12, %c0_13, %c0_14], %54 {strides = array<i32>} : memref<1x7x512xf32, #tpu.memory_space<vmem>>, vector<1x7x32xf32>,
    %c128_i32_15 = arith.constant 128 : i32
    %55 = vector.shape_cast %28 : vector<1x128xi32> to vector<1x128xi32>
    %56 = vector.broadcast %55 : vector<1x128xi32> to vector<32x128xi32>
    %57 = vector.broadcast %c128_i32_15 : i32 to vector<32x128xi32>
    %58 = arith.select %44, %56, %57 : vector<32x128xi1>, vector<32x128xi32>
    %cst_16 = arith.constant dense<2147483647> : vector<32xi32>
    %59 = vector.multi_reduction <minsi>, %58, %cst_16 [1] : vector<32x128xi32> to vector<32xi32>
    %60 = vector.shape_cast %59 : vector<32xi32> to vector<32x1xi32>
    %c128_i32_17 = arith.constant 128 : i32
    %61 = vector.broadcast %c128_i32_17 : i32 to vector<32x1xi32>
    %62 = arith.cmpi slt, %60, %61 : vector<32x1xi32>
    %63 = arith.select %62, %60, %40 : vector<32x1xi1>, vector<32x1xi32>
    %64 = vector.broadcast %28 : vector<1x128xi32> to vector<32x128xi32>
    %65 = vector.broadcast %60 : vector<32x1xi32> to vector<32x128xi32>
    %66 = arith.cmpi ne, %64, %65 : vector<32x128xi32>
    %67 = arith.andi %44, %66 : vector<32x128xi1>
    %68 = vector.broadcast %28 : vector<1x128xi32> to vector<32x128xi32>
    %69 = vector.broadcast %63 : vector<32x1xi32> to vector<32x128xi32>
    %70 = arith.cmpi eq, %68, %69 : vector<32x128xi32>
    %71 = arith.extui %70 : vector<32x128xi1> to vector<32x128xi32>
    %72 = arith.sitofp %71 : vector<32x128xi32> to vector<32x128xf32>
    %cst_18 = arith.constant dense<0.000000e+00> : vector<7x32xf32>
    %73 = tpu.matmul %1, %72, %cst_18 {dimension_numbers = #tpu.dot_dimension_numbers<[1], [1], [0], [0], [0, 0, 1, 0], [], []>} : vector<7x128xf32>, vector<32x128xf32>, vector<7x32xf32> -> vector<7x32xf32>
    %74 = arith.subf %73, %30 : vector<7x32xf32>
    %c0_19 = arith.constant 0 : index
    %c0_20 = arith.constant 0 : index
    %c32 = arith.constant 32 : index
    %75 = vector.load %arg4[%c0_19, %c0_20, %c32] : memref<1x7x512xf32, #tpu.memory_space<vmem>>, vector<1x7x32xf32>
    %76 = vector.shape_cast %75 : vector<1x7x32xf32> to vector<7x32xf32>
    %77 = vector.shape_cast %74 : vector<7x32xf32> to vector<1x7x32xf32>
    tpu.vector_store %arg4[%c0_19, %c0_20, %c32], %77 {strides = array<i32>} : memref<1x7x512xf32, #tpu.memory_space<vmem>>, vector<1x7x32xf32>,
    %c128_i32_21 = arith.constant 128 : i32
    %78 = vector.shape_cast %28 : vector<1x128xi32> to vector<1x128xi32>
    %79 = vector.broadcast %78 : vector<1x128xi32> to vector<32x128xi32>
    %80 = vector.broadcast %c128_i32_21 : i32 to vector<32x128xi32>
    %81 = arith.select %67, %79, %80 : vector<32x128xi1>, vector<32x128xi32>
    %cst_22 = arith.constant dense<2147483647> : vector<32xi32>
    %82 = vector.multi_reduction <minsi>, %81, %cst_22 [1] : vector<32x128xi32> to vector<32xi32>
    %83 = vector.shape_cast %82 : vector<32xi32> to vector<32x1xi32>
    %c128_i32_23 = arith.constant 128 : i32
    %84 = vector.broadcast %c128_i32_23 : i32 to vector<32x1xi32>
    %85 = arith.cmpi slt, %83, %84 : vector<32x1xi32>
    %86 = arith.select %85, %83, %40 : vector<32x1xi1>, vector<32x1xi32>
    %87 = vector.broadcast %28 : vector<1x128xi32> to vector<32x128xi32>
    %88 = vector.broadcast %83 : vector<32x1xi32> to vector<32x128xi32>
    %89 = arith.cmpi ne, %87, %88 : vector<32x128xi32>
    %90 = arith.andi %67, %89 : vector<32x128xi1>
    %91 = vector.broadcast %28 : vector<1x128xi32> to vector<32x128xi32>
    %92 = vector.broadcast %86 : vector<32x1xi32> to vector<32x128xi32>
    %93 = arith.cmpi eq, %91, %92 : vector<32x128xi32>
    %94 = arith.extui %93 : vector<32x128xi1> to vector<32x128xi32>
    %95 = arith.sitofp %94 : vector<32x128xi32> to vector<32x128xf32>
    %cst_24 = arith.constant dense<0.000000e+00> : vector<7x32xf32>
    %96 = tpu.matmul %1, %95, %cst_24 {dimension_numbers = #tpu.dot_dimension_numbers<[1], [1], [0], [0], [0, 0, 1, 0], [], []>} : vector<7x128xf32>, vector<32x128xf32>, vector<7x32xf32> -> vector<7x32xf32>
    %97 = arith.subf %96, %30 : vector<7x32xf32>
    %c0_25 = arith.constant 0 : index
    %c0_26 = arith.constant 0 : index
    %c64 = arith.constant 64 : index
    %98 = vector.load %arg4[%c0_25, %c0_26, %c64] : memref<1x7x512xf32, #tpu.memory_space<vmem>>, vector<1x7x32xf32>
    %99 = vector.shape_cast %98 : vector<1x7x32xf32> to vector<7x32xf32>
    %100 = vector.shape_cast %97 : vector<7x32xf32> to vector<1x7x32xf32>
    tpu.vector_store %arg4[%c0_25, %c0_26, %c64], %100 {strides = array<i32>} : memref<1x7x512xf32, #tpu.memory_space<vmem>>, vector<1x7x32xf32>,
    %c128_i32_27 = arith.constant 128 : i32
    %101 = vector.shape_cast %28 : vector<1x128xi32> to vector<1x128xi32>
    %102 = vector.broadcast %101 : vector<1x128xi32> to vector<32x128xi32>
    %103 = vector.broadcast %c128_i32_27 : i32 to vector<32x128xi32>
    %104 = arith.select %90, %102, %103 : vector<32x128xi1>, vector<32x128xi32>
    %cst_28 = arith.constant dense<2147483647> : vector<32xi32>
    %105 = vector.multi_reduction <minsi>, %104, %cst_28 [1] : vector<32x128xi32> to vector<32xi32>
    %106 = vector.shape_cast %105 : vector<32xi32> to vector<32x1xi32>
    %c128_i32_29 = arith.constant 128 : i32
    %107 = vector.broadcast %c128_i32_29 : i32 to vector<32x1xi32>
    %108 = arith.cmpi slt, %106, %107 : vector<32x1xi32>
    %109 = arith.select %108, %106, %40 : vector<32x1xi1>, vector<32x1xi32>
    %110 = vector.broadcast %28 : vector<1x128xi32> to vector<32x128xi32>
    %111 = vector.broadcast %106 : vector<32x1xi32> to vector<32x128xi32>
    %112 = arith.cmpi ne, %110, %111 : vector<32x128xi32>
    %113 = arith.andi %90, %112 : vector<32x128xi1>
    %114 = vector.broadcast %28 : vector<1x128xi32> to vector<32x128xi32>
    %115 = vector.broadcast %109 : vector<32x1xi32> to vector<32x128xi32>
    %116 = arith.cmpi eq, %114, %115 : vector<32x128xi32>
    %117 = arith.extui %116 : vector<32x128xi1> to vector<32x128xi32>
    %118 = arith.sitofp %117 : vector<32x128xi32> to vector<32x128xf32>
    %cst_30 = arith.constant dense<0.000000e+00> : vector<7x32xf32>
    %119 = tpu.matmul %1, %118, %cst_30 {dimension_numbers = #tpu.dot_dimension_numbers<[1], [1], [0], [0], [0, 0, 1, 0], [], []>} : vector<7x128xf32>, vector<32x128xf32>, vector<7x32xf32> -> vector<7x32xf32>
    %120 = arith.subf %119, %30 : vector<7x32xf32>
    %c0_31 = arith.constant 0 : index
    %c0_32 = arith.constant 0 : index
    %c96 = arith.constant 96 : index
    %121 = vector.load %arg4[%c0_31, %c0_32, %c96] : memref<1x7x512xf32, #tpu.memory_space<vmem>>, vector<1x7x32xf32>
    %122 = vector.shape_cast %121 : vector<1x7x32xf32> to vector<7x32xf32>
    %123 = vector.shape_cast %120 : vector<7x32xf32> to vector<1x7x32xf32>
    tpu.vector_store %arg4[%c0_31, %c0_32, %c96], %123 {strides = array<i32>} : memref<1x7x512xf32, #tpu.memory_space<vmem>>, vector<1x7x32xf32>,
    %c128_i32_33 = arith.constant 128 : i32
    %124 = vector.shape_cast %28 : vector<1x128xi32> to vector<1x128xi32>
    %125 = vector.broadcast %124 : vector<1x128xi32> to vector<32x128xi32>
    %126 = vector.broadcast %c128_i32_33 : i32 to vector<32x128xi32>
    %127 = arith.select %113, %125, %126 : vector<32x128xi1>, vector<32x128xi32>
    %cst_34 = arith.constant dense<2147483647> : vector<32xi32>
    %128 = vector.multi_reduction <minsi>, %127, %cst_34 [1] : vector<32x128xi32> to vector<32xi32>
    %129 = vector.shape_cast %128 : vector<32xi32> to vector<32x1xi32>
    %c128_i32_35 = arith.constant 128 : i32
    %130 = vector.broadcast %c128_i32_35 : i32 to vector<32x1xi32>
    %131 = arith.cmpi slt, %129, %130 : vector<32x1xi32>
    %132 = arith.select %131, %129, %40 : vector<32x1xi1>, vector<32x1xi32>
    %133 = vector.broadcast %28 : vector<1x128xi32> to vector<32x128xi32>
    %134 = vector.broadcast %129 : vector<32x1xi32> to vector<32x128xi32>
    %135 = arith.cmpi ne, %133, %134 : vector<32x128xi32>
    %136 = arith.andi %113, %135 : vector<32x128xi1>
    %137 = vector.broadcast %28 : vector<1x128xi32> to vector<32x128xi32>
    %138 = vector.broadcast %132 : vector<32x1xi32> to vector<32x128xi32>
    %139 = arith.cmpi eq, %137, %138 : vector<32x128xi32>
    %140 = arith.extui %139 : vector<32x128xi1> to vector<32x128xi32>
    %141 = arith.sitofp %140 : vector<32x128xi32> to vector<32x128xf32>
    %cst_36 = arith.constant dense<0.000000e+00> : vector<7x32xf32>
    %142 = tpu.matmul %1, %141, %cst_36 {dimension_numbers = #tpu.dot_dimension_numbers<[1], [1], [0], [0], [0, 0, 1, 0], [], []>} : vector<7x128xf32>, vector<32x128xf32>, vector<7x32xf32> -> vector<7x32xf32>
    %143 = arith.subf %142, %30 : vector<7x32xf32>
    %c0_37 = arith.constant 0 : index
    %c0_38 = arith.constant 0 : index
    %c128 = arith.constant 128 : index
    %144 = vector.load %arg4[%c0_37, %c0_38, %c128] : memref<1x7x512xf32, #tpu.memory_space<vmem>>, vector<1x7x32xf32>
    %145 = vector.shape_cast %144 : vector<1x7x32xf32> to vector<7x32xf32>
    %146 = vector.shape_cast %143 : vector<7x32xf32> to vector<1x7x32xf32>
    tpu.vector_store %arg4[%c0_37, %c0_38, %c128], %146 {strides = array<i32>} : memref<1x7x512xf32, #tpu.memory_space<vmem>>, vector<1x7x32xf32>,
    %c128_i32_39 = arith.constant 128 : i32
    %147 = vector.shape_cast %28 : vector<1x128xi32> to vector<1x128xi32>
    %148 = vector.broadcast %147 : vector<1x128xi32> to vector<32x128xi32>
    %149 = vector.broadcast %c128_i32_39 : i32 to vector<32x128xi32>
    %150 = arith.select %136, %148, %149 : vector<32x128xi1>, vector<32x128xi32>
    %cst_40 = arith.constant dense<2147483647> : vector<32xi32>
    %151 = vector.multi_reduction <minsi>, %150, %cst_40 [1] : vector<32x128xi32> to vector<32xi32>
    %152 = vector.shape_cast %151 : vector<32xi32> to vector<32x1xi32>
    %c128_i32_41 = arith.constant 128 : i32
    %153 = vector.broadcast %c128_i32_41 : i32 to vector<32x1xi32>
    %154 = arith.cmpi slt, %152, %153 : vector<32x1xi32>
    %155 = arith.select %154, %152, %40 : vector<32x1xi1>, vector<32x1xi32>
    %156 = vector.broadcast %28 : vector<1x128xi32> to vector<32x128xi32>
    %157 = vector.broadcast %152 : vector<32x1xi32> to vector<32x128xi32>
    %158 = arith.cmpi ne, %156, %157 : vector<32x128xi32>
    %159 = arith.andi %136, %158 : vector<32x128xi1>
    %160 = vector.broadcast %28 : vector<1x128xi32> to vector<32x128xi32>
    %161 = vector.broadcast %155 : vector<32x1xi32> to vector<32x128xi32>
    %162 = arith.cmpi eq, %160, %161 : vector<32x128xi32>
    %163 = arith.extui %162 : vector<32x128xi1> to vector<32x128xi32>
    %164 = arith.sitofp %163 : vector<32x128xi32> to vector<32x128xf32>
    %cst_42 = arith.constant dense<0.000000e+00> : vector<7x32xf32>
    %165 = tpu.matmul %1, %164, %cst_42 {dimension_numbers = #tpu.dot_dimension_numbers<[1], [1], [0], [0], [0, 0, 1, 0], [], []>} : vector<7x128xf32>, vector<32x128xf32>, vector<7x32xf32> -> vector<7x32xf32>
    %166 = arith.subf %165, %30 : vector<7x32xf32>
    %c0_43 = arith.constant 0 : index
    %c0_44 = arith.constant 0 : index
    %c160 = arith.constant 160 : index
    %167 = vector.load %arg4[%c0_43, %c0_44, %c160] : memref<1x7x512xf32, #tpu.memory_space<vmem>>, vector<1x7x32xf32>
    %168 = vector.shape_cast %167 : vector<1x7x32xf32> to vector<7x32xf32>
    %169 = vector.shape_cast %166 : vector<7x32xf32> to vector<1x7x32xf32>
    tpu.vector_store %arg4[%c0_43, %c0_44, %c160], %169 {strides = array<i32>} : memref<1x7x512xf32, #tpu.memory_space<vmem>>, vector<1x7x32xf32>,
    %c128_i32_45 = arith.constant 128 : i32
    %170 = vector.shape_cast %28 : vector<1x128xi32> to vector<1x128xi32>
    %171 = vector.broadcast %170 : vector<1x128xi32> to vector<32x128xi32>
    %172 = vector.broadcast %c128_i32_45 : i32 to vector<32x128xi32>
    %173 = arith.select %159, %171, %172 : vector<32x128xi1>, vector<32x128xi32>
    %cst_46 = arith.constant dense<2147483647> : vector<32xi32>
    %174 = vector.multi_reduction <minsi>, %173, %cst_46 [1] : vector<32x128xi32> to vector<32xi32>
    %175 = vector.shape_cast %174 : vector<32xi32> to vector<32x1xi32>
    %c128_i32_47 = arith.constant 128 : i32
    %176 = vector.broadcast %c128_i32_47 : i32 to vector<32x1xi32>
    %177 = arith.cmpi slt, %175, %176 : vector<32x1xi32>
    %178 = arith.select %177, %175, %40 : vector<32x1xi1>, vector<32x1xi32>
    %179 = vector.broadcast %28 : vector<1x128xi32> to vector<32x128xi32>
    %180 = vector.broadcast %175 : vector<32x1xi32> to vector<32x128xi32>
    %181 = arith.cmpi ne, %179, %180 : vector<32x128xi32>
    %182 = arith.andi %159, %181 : vector<32x128xi1>
    %183 = vector.broadcast %28 : vector<1x128xi32> to vector<32x128xi32>
    %184 = vector.broadcast %178 : vector<32x1xi32> to vector<32x128xi32>
    %185 = arith.cmpi eq, %183, %184 : vector<32x128xi32>
    %186 = arith.extui %185 : vector<32x128xi1> to vector<32x128xi32>
    %187 = arith.sitofp %186 : vector<32x128xi32> to vector<32x128xf32>
    %cst_48 = arith.constant dense<0.000000e+00> : vector<7x32xf32>
    %188 = tpu.matmul %1, %187, %cst_48 {dimension_numbers = #tpu.dot_dimension_numbers<[1], [1], [0], [0], [0, 0, 1, 0], [], []>} : vector<7x128xf32>, vector<32x128xf32>, vector<7x32xf32> -> vector<7x32xf32>
    %189 = arith.subf %188, %30 : vector<7x32xf32>
    %c0_49 = arith.constant 0 : index
    %c0_50 = arith.constant 0 : index
    %c192 = arith.constant 192 : index
    %190 = vector.load %arg4[%c0_49, %c0_50, %c192] : memref<1x7x512xf32, #tpu.memory_space<vmem>>, vector<1x7x32xf32>
    %191 = vector.shape_cast %190 : vector<1x7x32xf32> to vector<7x32xf32>
    %192 = vector.shape_cast %189 : vector<7x32xf32> to vector<1x7x32xf32>
    tpu.vector_store %arg4[%c0_49, %c0_50, %c192], %192 {strides = array<i32>} : memref<1x7x512xf32, #tpu.memory_space<vmem>>, vector<1x7x32xf32>,
    %c128_i32_51 = arith.constant 128 : i32
    %193 = vector.shape_cast %28 : vector<1x128xi32> to vector<1x128xi32>
    %194 = vector.broadcast %193 : vector<1x128xi32> to vector<32x128xi32>
    %195 = vector.broadcast %c128_i32_51 : i32 to vector<32x128xi32>
    %196 = arith.select %182, %194, %195 : vector<32x128xi1>, vector<32x128xi32>
    %cst_52 = arith.constant dense<2147483647> : vector<32xi32>
    %197 = vector.multi_reduction <minsi>, %196, %cst_52 [1] : vector<32x128xi32> to vector<32xi32>
    %198 = vector.shape_cast %197 : vector<32xi32> to vector<32x1xi32>
    %c128_i32_53 = arith.constant 128 : i32
    %199 = vector.broadcast %c128_i32_53 : i32 to vector<32x1xi32>
    %200 = arith.cmpi slt, %198, %199 : vector<32x1xi32>
    %201 = arith.select %200, %198, %40 : vector<32x1xi1>, vector<32x1xi32>
    %202 = vector.broadcast %28 : vector<1x128xi32> to vector<32x128xi32>
    %203 = vector.broadcast %198 : vector<32x1xi32> to vector<32x128xi32>
    %204 = arith.cmpi ne, %202, %203 : vector<32x128xi32>
    %205 = arith.andi %182, %204 : vector<32x128xi1>
    %206 = vector.broadcast %28 : vector<1x128xi32> to vector<32x128xi32>
    %207 = vector.broadcast %201 : vector<32x1xi32> to vector<32x128xi32>
    %208 = arith.cmpi eq, %206, %207 : vector<32x128xi32>
    %209 = arith.extui %208 : vector<32x128xi1> to vector<32x128xi32>
    %210 = arith.sitofp %209 : vector<32x128xi32> to vector<32x128xf32>
    %cst_54 = arith.constant dense<0.000000e+00> : vector<7x32xf32>
    %211 = tpu.matmul %1, %210, %cst_54 {dimension_numbers = #tpu.dot_dimension_numbers<[1], [1], [0], [0], [0, 0, 1, 0], [], []>} : vector<7x128xf32>, vector<32x128xf32>, vector<7x32xf32> -> vector<7x32xf32>
    %212 = arith.subf %211, %30 : vector<7x32xf32>
    %c0_55 = arith.constant 0 : index
    %c0_56 = arith.constant 0 : index
    %c224 = arith.constant 224 : index
    %213 = vector.load %arg4[%c0_55, %c0_56, %c224] : memref<1x7x512xf32, #tpu.memory_space<vmem>>, vector<1x7x32xf32>
    %214 = vector.shape_cast %213 : vector<1x7x32xf32> to vector<7x32xf32>
    %215 = vector.shape_cast %212 : vector<7x32xf32> to vector<1x7x32xf32>
    tpu.vector_store %arg4[%c0_55, %c0_56, %c224], %215 {strides = array<i32>} : memref<1x7x512xf32, #tpu.memory_space<vmem>>, vector<1x7x32xf32>,
    %c128_i32_57 = arith.constant 128 : i32
    %216 = vector.shape_cast %28 : vector<1x128xi32> to vector<1x128xi32>
    %217 = vector.broadcast %216 : vector<1x128xi32> to vector<32x128xi32>
    %218 = vector.broadcast %c128_i32_57 : i32 to vector<32x128xi32>
    %219 = arith.select %205, %217, %218 : vector<32x128xi1>, vector<32x128xi32>
    %cst_58 = arith.constant dense<2147483647> : vector<32xi32>
    %220 = vector.multi_reduction <minsi>, %219, %cst_58 [1] : vector<32x128xi32> to vector<32xi32>
    %221 = vector.shape_cast %220 : vector<32xi32> to vector<32x1xi32>
    %c128_i32_59 = arith.constant 128 : i32
    %222 = vector.broadcast %c128_i32_59 : i32 to vector<32x1xi32>
    %223 = arith.cmpi slt, %221, %222 : vector<32x1xi32>
    %224 = arith.select %223, %221, %40 : vector<32x1xi1>, vector<32x1xi32>
    %225 = vector.broadcast %28 : vector<1x128xi32> to vector<32x128xi32>
    %226 = vector.broadcast %221 : vector<32x1xi32> to vector<32x128xi32>
    %227 = arith.cmpi ne, %225, %226 : vector<32x128xi32>
    %228 = arith.andi %205, %227 : vector<32x128xi1>
    %229 = vector.broadcast %28 : vector<1x128xi32> to vector<32x128xi32>
    %230 = vector.broadcast %224 : vector<32x1xi32> to vector<32x128xi32>
    %231 = arith.cmpi eq, %229, %230 : vector<32x128xi32>
    %232 = arith.extui %231 : vector<32x128xi1> to vector<32x128xi32>
    %233 = arith.sitofp %232 : vector<32x128xi32> to vector<32x128xf32>
    %cst_60 = arith.constant dense<0.000000e+00> : vector<7x32xf32>
    %234 = tpu.matmul %1, %233, %cst_60 {dimension_numbers = #tpu.dot_dimension_numbers<[1], [1], [0], [0], [0, 0, 1, 0], [], []>} : vector<7x128xf32>, vector<32x128xf32>, vector<7x32xf32> -> vector<7x32xf32>
    %235 = arith.subf %234, %30 : vector<7x32xf32>
    %c0_61 = arith.constant 0 : index
    %c0_62 = arith.constant 0 : index
    %c256 = arith.constant 256 : index
    %236 = vector.load %arg4[%c0_61, %c0_62, %c256] : memref<1x7x512xf32, #tpu.memory_space<vmem>>, vector<1x7x32xf32>
    %237 = vector.shape_cast %236 : vector<1x7x32xf32> to vector<7x32xf32>
    %238 = vector.shape_cast %235 : vector<7x32xf32> to vector<1x7x32xf32>
    tpu.vector_store %arg4[%c0_61, %c0_62, %c256], %238 {strides = array<i32>} : memref<1x7x512xf32, #tpu.memory_space<vmem>>, vector<1x7x32xf32>,
    %c128_i32_63 = arith.constant 128 : i32
    %239 = vector.shape_cast %28 : vector<1x128xi32> to vector<1x128xi32>
    %240 = vector.broadcast %239 : vector<1x128xi32> to vector<32x128xi32>
    %241 = vector.broadcast %c128_i32_63 : i32 to vector<32x128xi32>
    %242 = arith.select %228, %240, %241 : vector<32x128xi1>, vector<32x128xi32>
    %cst_64 = arith.constant dense<2147483647> : vector<32xi32>
    %243 = vector.multi_reduction <minsi>, %242, %cst_64 [1] : vector<32x128xi32> to vector<32xi32>
    %244 = vector.shape_cast %243 : vector<32xi32> to vector<32x1xi32>
    %c128_i32_65 = arith.constant 128 : i32
    %245 = vector.broadcast %c128_i32_65 : i32 to vector<32x1xi32>
    %246 = arith.cmpi slt, %244, %245 : vector<32x1xi32>
    %247 = arith.select %246, %244, %40 : vector<32x1xi1>, vector<32x1xi32>
    %248 = vector.broadcast %28 : vector<1x128xi32> to vector<32x128xi32>
    %249 = vector.broadcast %244 : vector<32x1xi32> to vector<32x128xi32>
    %250 = arith.cmpi ne, %248, %249 : vector<32x128xi32>
    %251 = arith.andi %228, %250 : vector<32x128xi1>
    %252 = vector.broadcast %28 : vector<1x128xi32> to vector<32x128xi32>
    %253 = vector.broadcast %247 : vector<32x1xi32> to vector<32x128xi32>
    %254 = arith.cmpi eq, %252, %253 : vector<32x128xi32>
    %255 = arith.extui %254 : vector<32x128xi1> to vector<32x128xi32>
    %256 = arith.sitofp %255 : vector<32x128xi32> to vector<32x128xf32>
    %cst_66 = arith.constant dense<0.000000e+00> : vector<7x32xf32>
    %257 = tpu.matmul %1, %256, %cst_66 {dimension_numbers = #tpu.dot_dimension_numbers<[1], [1], [0], [0], [0, 0, 1, 0], [], []>} : vector<7x128xf32>, vector<32x128xf32>, vector<7x32xf32> -> vector<7x32xf32>
    %258 = arith.subf %257, %30 : vector<7x32xf32>
    %c0_67 = arith.constant 0 : index
    %c0_68 = arith.constant 0 : index
    %c288 = arith.constant 288 : index
    %259 = vector.load %arg4[%c0_67, %c0_68, %c288] : memref<1x7x512xf32, #tpu.memory_space<vmem>>, vector<1x7x32xf32>
    %260 = vector.shape_cast %259 : vector<1x7x32xf32> to vector<7x32xf32>
    %261 = vector.shape_cast %258 : vector<7x32xf32> to vector<1x7x32xf32>
    tpu.vector_store %arg4[%c0_67, %c0_68, %c288], %261 {strides = array<i32>} : memref<1x7x512xf32, #tpu.memory_space<vmem>>, vector<1x7x32xf32>,
    %c128_i32_69 = arith.constant 128 : i32
    %262 = vector.shape_cast %28 : vector<1x128xi32> to vector<1x128xi32>
    %263 = vector.broadcast %262 : vector<1x128xi32> to vector<32x128xi32>
    %264 = vector.broadcast %c128_i32_69 : i32 to vector<32x128xi32>
    %265 = arith.select %251, %263, %264 : vector<32x128xi1>, vector<32x128xi32>
    %cst_70 = arith.constant dense<2147483647> : vector<32xi32>
    %266 = vector.multi_reduction <minsi>, %265, %cst_70 [1] : vector<32x128xi32> to vector<32xi32>
    %267 = vector.shape_cast %266 : vector<32xi32> to vector<32x1xi32>
    %c128_i32_71 = arith.constant 128 : i32
    %268 = vector.broadcast %c128_i32_71 : i32 to vector<32x1xi32>
    %269 = arith.cmpi slt, %267, %268 : vector<32x1xi32>
    %270 = arith.select %269, %267, %40 : vector<32x1xi1>, vector<32x1xi32>
    %271 = vector.broadcast %28 : vector<1x128xi32> to vector<32x128xi32>
    %272 = vector.broadcast %267 : vector<32x1xi32> to vector<32x128xi32>
    %273 = arith.cmpi ne, %271, %272 : vector<32x128xi32>
    %274 = arith.andi %251, %273 : vector<32x128xi1>
    %275 = vector.broadcast %28 : vector<1x128xi32> to vector<32x128xi32>
    %276 = vector.broadcast %270 : vector<32x1xi32> to vector<32x128xi32>
    %277 = arith.cmpi eq, %275, %276 : vector<32x128xi32>
    %278 = arith.extui %277 : vector<32x128xi1> to vector<32x128xi32>
    %279 = arith.sitofp %278 : vector<32x128xi32> to vector<32x128xf32>
    %cst_72 = arith.constant dense<0.000000e+00> : vector<7x32xf32>
    %280 = tpu.matmul %1, %279, %cst_72 {dimension_numbers = #tpu.dot_dimension_numbers<[1], [1], [0], [0], [0, 0, 1, 0], [], []>} : vector<7x128xf32>, vector<32x128xf32>, vector<7x32xf32> -> vector<7x32xf32>
    %281 = arith.subf %280, %30 : vector<7x32xf32>
    %c0_73 = arith.constant 0 : index
    %c0_74 = arith.constant 0 : index
    %c320 = arith.constant 320 : index
    %282 = vector.load %arg4[%c0_73, %c0_74, %c320] : memref<1x7x512xf32, #tpu.memory_space<vmem>>, vector<1x7x32xf32>
    %283 = vector.shape_cast %282 : vector<1x7x32xf32> to vector<7x32xf32>
    %284 = vector.shape_cast %281 : vector<7x32xf32> to vector<1x7x32xf32>
    tpu.vector_store %arg4[%c0_73, %c0_74, %c320], %284 {strides = array<i32>} : memref<1x7x512xf32, #tpu.memory_space<vmem>>, vector<1x7x32xf32>,
    %c128_i32_75 = arith.constant 128 : i32
    %285 = vector.shape_cast %28 : vector<1x128xi32> to vector<1x128xi32>
    %286 = vector.broadcast %285 : vector<1x128xi32> to vector<32x128xi32>
    %287 = vector.broadcast %c128_i32_75 : i32 to vector<32x128xi32>
    %288 = arith.select %274, %286, %287 : vector<32x128xi1>, vector<32x128xi32>
    %cst_76 = arith.constant dense<2147483647> : vector<32xi32>
    %289 = vector.multi_reduction <minsi>, %288, %cst_76 [1] : vector<32x128xi32> to vector<32xi32>
    %290 = vector.shape_cast %289 : vector<32xi32> to vector<32x1xi32>
    %c128_i32_77 = arith.constant 128 : i32
    %291 = vector.broadcast %c128_i32_77 : i32 to vector<32x1xi32>
    %292 = arith.cmpi slt, %290, %291 : vector<32x1xi32>
    %293 = arith.select %292, %290, %40 : vector<32x1xi1>, vector<32x1xi32>
    %294 = vector.broadcast %28 : vector<1x128xi32> to vector<32x128xi32>
    %295 = vector.broadcast %290 : vector<32x1xi32> to vector<32x128xi32>
    %296 = arith.cmpi ne, %294, %295 : vector<32x128xi32>
    %297 = arith.andi %274, %296 : vector<32x128xi1>
    %298 = vector.broadcast %28 : vector<1x128xi32> to vector<32x128xi32>
    %299 = vector.broadcast %293 : vector<32x1xi32> to vector<32x128xi32>
    %300 = arith.cmpi eq, %298, %299 : vector<32x128xi32>
    %301 = arith.extui %300 : vector<32x128xi1> to vector<32x128xi32>
    %302 = arith.sitofp %301 : vector<32x128xi32> to vector<32x128xf32>
    %cst_78 = arith.constant dense<0.000000e+00> : vector<7x32xf32>
    %303 = tpu.matmul %1, %302, %cst_78 {dimension_numbers = #tpu.dot_dimension_numbers<[1], [1], [0], [0], [0, 0, 1, 0], [], []>} : vector<7x128xf32>, vector<32x128xf32>, vector<7x32xf32> -> vector<7x32xf32>
    %304 = arith.subf %303, %30 : vector<7x32xf32>
    %c0_79 = arith.constant 0 : index
    %c0_80 = arith.constant 0 : index
    %c352 = arith.constant 352 : index
    %305 = vector.load %arg4[%c0_79, %c0_80, %c352] : memref<1x7x512xf32, #tpu.memory_space<vmem>>, vector<1x7x32xf32>
    %306 = vector.shape_cast %305 : vector<1x7x32xf32> to vector<7x32xf32>
    %307 = vector.shape_cast %304 : vector<7x32xf32> to vector<1x7x32xf32>
    tpu.vector_store %arg4[%c0_79, %c0_80, %c352], %307 {strides = array<i32>} : memref<1x7x512xf32, #tpu.memory_space<vmem>>, vector<1x7x32xf32>,
    %c128_i32_81 = arith.constant 128 : i32
    %308 = vector.shape_cast %28 : vector<1x128xi32> to vector<1x128xi32>
    %309 = vector.broadcast %308 : vector<1x128xi32> to vector<32x128xi32>
    %310 = vector.broadcast %c128_i32_81 : i32 to vector<32x128xi32>
    %311 = arith.select %297, %309, %310 : vector<32x128xi1>, vector<32x128xi32>
    %cst_82 = arith.constant dense<2147483647> : vector<32xi32>
    %312 = vector.multi_reduction <minsi>, %311, %cst_82 [1] : vector<32x128xi32> to vector<32xi32>
    %313 = vector.shape_cast %312 : vector<32xi32> to vector<32x1xi32>
    %c128_i32_83 = arith.constant 128 : i32
    %314 = vector.broadcast %c128_i32_83 : i32 to vector<32x1xi32>
    %315 = arith.cmpi slt, %313, %314 : vector<32x1xi32>
    %316 = arith.select %315, %313, %40 : vector<32x1xi1>, vector<32x1xi32>
    %317 = vector.broadcast %28 : vector<1x128xi32> to vector<32x128xi32>
    %318 = vector.broadcast %313 : vector<32x1xi32> to vector<32x128xi32>
    %319 = arith.cmpi ne, %317, %318 : vector<32x128xi32>
    %320 = arith.andi %297, %319 : vector<32x128xi1>
    %321 = vector.broadcast %28 : vector<1x128xi32> to vector<32x128xi32>
    %322 = vector.broadcast %316 : vector<32x1xi32> to vector<32x128xi32>
    %323 = arith.cmpi eq, %321, %322 : vector<32x128xi32>
    %324 = arith.extui %323 : vector<32x128xi1> to vector<32x128xi32>
    %325 = arith.sitofp %324 : vector<32x128xi32> to vector<32x128xf32>
    %cst_84 = arith.constant dense<0.000000e+00> : vector<7x32xf32>
    %326 = tpu.matmul %1, %325, %cst_84 {dimension_numbers = #tpu.dot_dimension_numbers<[1], [1], [0], [0], [0, 0, 1, 0], [], []>} : vector<7x128xf32>, vector<32x128xf32>, vector<7x32xf32> -> vector<7x32xf32>
    %327 = arith.subf %326, %30 : vector<7x32xf32>
    %c0_85 = arith.constant 0 : index
    %c0_86 = arith.constant 0 : index
    %c384 = arith.constant 384 : index
    %328 = vector.load %arg4[%c0_85, %c0_86, %c384] : memref<1x7x512xf32, #tpu.memory_space<vmem>>, vector<1x7x32xf32>
    %329 = vector.shape_cast %328 : vector<1x7x32xf32> to vector<7x32xf32>
    %330 = vector.shape_cast %327 : vector<7x32xf32> to vector<1x7x32xf32>
    tpu.vector_store %arg4[%c0_85, %c0_86, %c384], %330 {strides = array<i32>} : memref<1x7x512xf32, #tpu.memory_space<vmem>>, vector<1x7x32xf32>,
    %c128_i32_87 = arith.constant 128 : i32
    %331 = vector.shape_cast %28 : vector<1x128xi32> to vector<1x128xi32>
    %332 = vector.broadcast %331 : vector<1x128xi32> to vector<32x128xi32>
    %333 = vector.broadcast %c128_i32_87 : i32 to vector<32x128xi32>
    %334 = arith.select %320, %332, %333 : vector<32x128xi1>, vector<32x128xi32>
    %cst_88 = arith.constant dense<2147483647> : vector<32xi32>
    %335 = vector.multi_reduction <minsi>, %334, %cst_88 [1] : vector<32x128xi32> to vector<32xi32>
    %336 = vector.shape_cast %335 : vector<32xi32> to vector<32x1xi32>
    %c128_i32_89 = arith.constant 128 : i32
    %337 = vector.broadcast %c128_i32_89 : i32 to vector<32x1xi32>
    %338 = arith.cmpi slt, %336, %337 : vector<32x1xi32>
    %339 = arith.select %338, %336, %40 : vector<32x1xi1>, vector<32x1xi32>
    %340 = vector.broadcast %28 : vector<1x128xi32> to vector<32x128xi32>
    %341 = vector.broadcast %336 : vector<32x1xi32> to vector<32x128xi32>
    %342 = arith.cmpi ne, %340, %341 : vector<32x128xi32>
    %343 = arith.andi %320, %342 : vector<32x128xi1>
    %344 = vector.broadcast %28 : vector<1x128xi32> to vector<32x128xi32>
    %345 = vector.broadcast %339 : vector<32x1xi32> to vector<32x128xi32>
    %346 = arith.cmpi eq, %344, %345 : vector<32x128xi32>
    %347 = arith.extui %346 : vector<32x128xi1> to vector<32x128xi32>
    %348 = arith.sitofp %347 : vector<32x128xi32> to vector<32x128xf32>
    %cst_90 = arith.constant dense<0.000000e+00> : vector<7x32xf32>
    %349 = tpu.matmul %1, %348, %cst_90 {dimension_numbers = #tpu.dot_dimension_numbers<[1], [1], [0], [0], [0, 0, 1, 0], [], []>} : vector<7x128xf32>, vector<32x128xf32>, vector<7x32xf32> -> vector<7x32xf32>
    %350 = arith.subf %349, %30 : vector<7x32xf32>
    %c0_91 = arith.constant 0 : index
    %c0_92 = arith.constant 0 : index
    %c416 = arith.constant 416 : index
    %351 = vector.load %arg4[%c0_91, %c0_92, %c416] : memref<1x7x512xf32, #tpu.memory_space<vmem>>, vector<1x7x32xf32>
    %352 = vector.shape_cast %351 : vector<1x7x32xf32> to vector<7x32xf32>
    %353 = vector.shape_cast %350 : vector<7x32xf32> to vector<1x7x32xf32>
    tpu.vector_store %arg4[%c0_91, %c0_92, %c416], %353 {strides = array<i32>} : memref<1x7x512xf32, #tpu.memory_space<vmem>>, vector<1x7x32xf32>,
    %c128_i32_93 = arith.constant 128 : i32
    %354 = vector.shape_cast %28 : vector<1x128xi32> to vector<1x128xi32>
    %355 = vector.broadcast %354 : vector<1x128xi32> to vector<32x128xi32>
    %356 = vector.broadcast %c128_i32_93 : i32 to vector<32x128xi32>
    %357 = arith.select %343, %355, %356 : vector<32x128xi1>, vector<32x128xi32>
    %cst_94 = arith.constant dense<2147483647> : vector<32xi32>
    %358 = vector.multi_reduction <minsi>, %357, %cst_94 [1] : vector<32x128xi32> to vector<32xi32>
    %359 = vector.shape_cast %358 : vector<32xi32> to vector<32x1xi32>
    %c128_i32_95 = arith.constant 128 : i32
    %360 = vector.broadcast %c128_i32_95 : i32 to vector<32x1xi32>
    %361 = arith.cmpi slt, %359, %360 : vector<32x1xi32>
    %362 = arith.select %361, %359, %40 : vector<32x1xi1>, vector<32x1xi32>
    %363 = vector.broadcast %28 : vector<1x128xi32> to vector<32x128xi32>
    %364 = vector.broadcast %359 : vector<32x1xi32> to vector<32x128xi32>
    %365 = arith.cmpi ne, %363, %364 : vector<32x128xi32>
    %366 = arith.andi %343, %365 : vector<32x128xi1>
    %367 = vector.broadcast %28 : vector<1x128xi32> to vector<32x128xi32>
    %368 = vector.broadcast %362 : vector<32x1xi32> to vector<32x128xi32>
    %369 = arith.cmpi eq, %367, %368 : vector<32x128xi32>
    %370 = arith.extui %369 : vector<32x128xi1> to vector<32x128xi32>
    %371 = arith.sitofp %370 : vector<32x128xi32> to vector<32x128xf32>
    %cst_96 = arith.constant dense<0.000000e+00> : vector<7x32xf32>
    %372 = tpu.matmul %1, %371, %cst_96 {dimension_numbers = #tpu.dot_dimension_numbers<[1], [1], [0], [0], [0, 0, 1, 0], [], []>} : vector<7x128xf32>, vector<32x128xf32>, vector<7x32xf32> -> vector<7x32xf32>
    %373 = arith.subf %372, %30 : vector<7x32xf32>
    %c0_97 = arith.constant 0 : index
    %c0_98 = arith.constant 0 : index
    %c448 = arith.constant 448 : index
    %374 = vector.load %arg4[%c0_97, %c0_98, %c448] : memref<1x7x512xf32, #tpu.memory_space<vmem>>, vector<1x7x32xf32>
    %375 = vector.shape_cast %374 : vector<1x7x32xf32> to vector<7x32xf32>
    %376 = vector.shape_cast %373 : vector<7x32xf32> to vector<1x7x32xf32>
    tpu.vector_store %arg4[%c0_97, %c0_98, %c448], %376 {strides = array<i32>} : memref<1x7x512xf32, #tpu.memory_space<vmem>>, vector<1x7x32xf32>,
    %c128_i32_99 = arith.constant 128 : i32
    %377 = vector.shape_cast %28 : vector<1x128xi32> to vector<1x128xi32>
    %378 = vector.broadcast %377 : vector<1x128xi32> to vector<32x128xi32>
    %379 = vector.broadcast %c128_i32_99 : i32 to vector<32x128xi32>
    %380 = arith.select %366, %378, %379 : vector<32x128xi1>, vector<32x128xi32>
    %cst_100 = arith.constant dense<2147483647> : vector<32xi32>
    %381 = vector.multi_reduction <minsi>, %380, %cst_100 [1] : vector<32x128xi32> to vector<32xi32>
    %382 = vector.shape_cast %381 : vector<32xi32> to vector<32x1xi32>
    %c128_i32_101 = arith.constant 128 : i32
    %383 = vector.broadcast %c128_i32_101 : i32 to vector<32x1xi32>
    %384 = arith.cmpi slt, %382, %383 : vector<32x1xi32>
    %385 = arith.select %384, %382, %40 : vector<32x1xi1>, vector<32x1xi32>
    %386 = vector.broadcast %28 : vector<1x128xi32> to vector<32x128xi32>
    %387 = vector.broadcast %385 : vector<32x1xi32> to vector<32x128xi32>
    %388 = arith.cmpi eq, %386, %387 : vector<32x128xi32>
    %389 = arith.extui %388 : vector<32x128xi1> to vector<32x128xi32>
    %390 = arith.sitofp %389 : vector<32x128xi32> to vector<32x128xf32>
    %cst_102 = arith.constant dense<0.000000e+00> : vector<7x32xf32>
    %391 = tpu.matmul %1, %390, %cst_102 {dimension_numbers = #tpu.dot_dimension_numbers<[1], [1], [0], [0], [0, 0, 1, 0], [], []>} : vector<7x128xf32>, vector<32x128xf32>, vector<7x32xf32> -> vector<7x32xf32>
    %392 = arith.subf %391, %30 : vector<7x32xf32>
    %c0_103 = arith.constant 0 : index
    %c0_104 = arith.constant 0 : index
    %c480 = arith.constant 480 : index
    %393 = vector.load %arg4[%c0_103, %c0_104, %c480] : memref<1x7x512xf32, #tpu.memory_space<vmem>>, vector<1x7x32xf32>
    %394 = vector.shape_cast %393 : vector<1x7x32xf32> to vector<7x32xf32>
    %395 = vector.shape_cast %392 : vector<7x32xf32> to vector<1x7x32xf32>
    tpu.vector_store %arg4[%c0_103, %c0_104, %c480], %395 {strides = array<i32>} : memref<1x7x512xf32, #tpu.memory_space<vmem>>, vector<1x7x32xf32>,
    return
  }
  func.func @transform_0(%arg0: i32) -> (i32, i32, i32) {
    %c0_i32 = arith.constant 0 : i32
    %c0_i32_0 = arith.constant 0 : i32
    %c0_i32_1 = arith.constant 0 : i32
    return %arg0, %c0_i32, %c0_i32_0 : i32, i32, i32
  }
  func.func @transform_1(%arg0: i32) -> (i32, i32, i32) {
    %c0_i32 = arith.constant 0 : i32
    %c0_i32_0 = arith.constant 0 : i32
    %c0_i32_1 = arith.constant 0 : i32
    return %arg0, %c0_i32, %c0_i32_0 : i32, i32, i32
  }
  func.func @transform_2(%arg0: i32) -> (i32, i32, i32) {
    %c0_i32 = arith.constant 0 : i32
    %c0_i32_0 = arith.constant 0 : i32
    %c0_i32_1 = arith.constant 0 : i32
    return %arg0, %c0_i32, %c0_i32_0 : i32, i32, i32
  }
  func.func @transform_3(%arg0: i32) -> (i32, i32, i32) {
    %c0_i32 = arith.constant 0 : i32
    %c0_i32_0 = arith.constant 0 : i32
    %c0_i32_1 = arith.constant 0 : i32
    return %arg0, %c0_i32, %c0_i32_0 : i32, i32, i32
  }
}

</mosaic_0001>

<llo_original>
// kernel: local_grouper.2
$region0: #{local_grouper.2}
  #allocation0 [shape = 'u32[]', space=smem, size = 0x4, offset = 0x4, fixed_abs, tag = 'smem constant byte address 0x4 - core index']
  #allocation1 [shape = 'u32[144,128]{1,0:T(1,128)}', space=vmem, size = 0x12000, scoped, tag = 'internal scratch']
  #allocation2 [shape = 'f32[1,128]{1,0:T(1,128)}', space=vmem, size = 0x200, scoped, tag = 'scratch operand']
  %s0 = inlined_call_operand.vmem [shape: f32[2,3,128], index: 0, kind: input, shape index: {}]
  %s1 = inlined_call_operand.hbm [shape: s32[2,1,32], index: 1, kind: output, shape index: {0}]
  %s2 = inlined_call_operand.vmem [shape: f32[2,3,32], index: 2, kind: output, shape index: {1}]
  %3 = xla_tuple %s1, %s2
  %s4 = sld [smem:[#allocation0]]
  $region52: #{local_grouper.2} parent=0
    _
  %s6 = ssub.s32 1, %s4
  %s7 = scalar_select 0, %s6, %s4
  $region1: #{local_grouper.2} parent=0
    #allocation3 [shape = 'u8[1024]{0}', space=vmem, size = 0x400, scoped, tag = 'output window, operand 0']
    #allocation4 [shape = 's32[2]{0}', space=sflag, size = 0x8, scoped, tag = 'scoped memory for local_grouper.2']
    %8 = vsyncpa [#allocation4], 0
    %s9 = scalar_lea.sflag [#allocation4], 1
    %10 = vsyncpa %s9, 0
    loop: start=0, step=1, limit=4
    $region2: #{local_grouper.2} parent=1 // loop_pre_header
      _
    $region3: #{local_grouper.2} parent=1 // loop_header
      %s12 = sphi 0, %s16
      %p13 = scmp.ge.s32.totalorder %s12, 4
      %s22 = sphi 0, %s24
      %s25 = sphi 0, %s22
      %s26 = sphi 0, %s25
      %s42 = sphi 0, %s26
      %s48 = sphi 0, %s50
      %s51 = sphi 0, %s48
      %s52 = sphi 0, %s51
      %s68 = sphi 0, %s52
      %s74 = sphi 0, %s76
      %s77 = sphi 0, %s74
      %s78 = sphi 0, %s77
      %s94 = sphi 0, %s78
    $region4: #{local_grouper.2} parent=1 // loop_header_branch
      %15 = sbr.rel (%p13) target = $region8
    $region5: #{local_grouper.2} parent=1 // loop_body
      %s17 = ssub.s32 %s12, 1
      %s18 = ssub.s32 %s12, 2
      %s19 = sadd.s32 %s12, 1
      %s20 = ssub.s32 %s12, %s19
      %p21 = scmp.eq.s32.totalorder %s20, 0
      %s23 = sadd.s32 %s22, 1
      %s24 = scalar_select %p21, %s22, %s23
      %p27 = pneg %p21
      %p28 = scmp.eq.s32.totalorder %s12, 1
      %p29 = por %p27, %p28
      %p30 = scmp.ne.s32.totalorder %s22, %s25
      %p31 = scmp.eq.s32.totalorder %s12, 0
      %p32 = por %p30, %p31
      %p33 = scmp.ne.s32.totalorder %s22, %s25
      %p34 = scmp.eq.s32.totalorder %s17, 1
      %p35 = por %p33, %p34
      %p36 = scmp.ne.s32.totalorder %s25, %s26
      %p37 = scmp.eq.s32.totalorder %s17, 0
      %p38 = por %p36, %p37
      %p39 = scmp.ne.s32.totalorder %s25, %s26
      %p40 = scmp.eq.s32.totalorder %s18, 1
      %p41 = por %p39, %p40
      %p43 = scmp.ne.s32.totalorder %s26, %s42
      %p44 = scmp.eq.s32.totalorder %s18, 0
      %p45 = por %p43, %p44
      %s46 = ssub.s32 %s12, %s19
      %p47 = scmp.eq.s32.totalorder %s46, 0
      %s49 = sadd.s32 %s48, 1
      %s50 = scalar_select %p47, %s48, %s49
      %p53 = pneg %p47
      %p54 = scmp.eq.s32.totalorder %s12, 1
      %p55 = por %p53, %p54
      %p56 = scmp.ne.s32.totalorder %s48, %s51
      %p57 = scmp.eq.s32.totalorder %s12, 0
      %p58 = por %p56, %p57
      %p59 = scmp.ne.s32.totalorder %s48, %s51
      %p60 = scmp.eq.s32.totalorder %s17, 1
      %p61 = por %p59, %p60
      %p62 = scmp.ne.s32.totalorder %s51, %s52
      %p63 = scmp.eq.s32.totalorder %s17, 0
      %p64 = por %p62, %p63
      %p65 = scmp.ne.s32.totalorder %s51, %s52
      %p66 = scmp.eq.s32.totalorder %s18, 1
      %p67 = por %p65, %p66
      %p69 = scmp.ne.s32.totalorder %s52, %s68
      %p70 = scmp.eq.s32.totalorder %s18, 0
      %p71 = por %p69, %p70
      %s72 = ssub.s32 %s12, %s19
      %p73 = scmp.eq.s32.totalorder %s72, 0
      %s75 = sadd.s32 %s74, 1
      %s76 = scalar_select %p73, %s74, %s75
      %p79 = pneg %p73
      %p80 = scmp.eq.s32.totalorder %s12, 1
      %p81 = por %p79, %p80
      %p82 = scmp.ne.s32.totalorder %s74, %s77
      %p83 = scmp.eq.s32.totalorder %s12, 0
      %p84 = por %p82, %p83
      %p85 = scmp.ne.s32.totalorder %s74, %s77
      %p86 = scmp.eq.s32.totalorder %s17, 1
      %p87 = por %p85, %p86
      %p88 = scmp.ne.s32.totalorder %s77, %s78
      %p89 = scmp.eq.s32.totalorder %s17, 0
      %p90 = por %p88, %p89
      %p91 = scmp.ne.s32.totalorder %s77, %s78
      %p92 = scmp.eq.s32.totalorder %s18, 1
      %p93 = por %p91, %p92
      %p95 = scmp.ne.s32.totalorder %s78, %s94
      %p96 = scmp.eq.s32.totalorder %s18, 0
      %p97 = por %p95, %p96
      %p98 = scmp.le.s32.totalorder 1, %s12
      %p99 = scmp.lt.s32.totalorder %s12, 3
      %p100 = pnand %p98, %p99
      %p101 = pneg %p100
      // Predicated region
      $region9: #{local_grouper.2} parent=5 // pred_check
        _
      $region10: #{local_grouper.2} parent=5 // pred_check_branch
        %103 = sbr.rel (%p100) target = $region12
      $region11: #{local_grouper.2} parent=5 // pred_region
        %s104 = ssub.s32 %s12, 1
      $region12: #{local_grouper.2} parent=5 // pred_fallthru
        _
      %p105 = scmp.lt.s32.totalorder %s12, 2
      // Predicated region
      $region13: #{local_grouper.2} parent=5 // pred_check
        %p106 = pneg %p105
      $region14: #{local_grouper.2} parent=5 // pred_check_branch
        %108 = sbr.rel (%p106) target = $region16
      $region15: #{local_grouper.2} parent=5 // pred_region
        // Predicated region
        $region17: #{local_grouper.2} parent=15 // pred_check
          %p109 = pneg %p32
        $region18: #{local_grouper.2} parent=15 // pred_check_branch
          %111 = sbr.rel (%p109) target = $region20
        $region19: #{local_grouper.2} parent=15 // pred_region
          %p112 = scmp.lt.s32.totalorder %s12, 1
          %s113 = scalar_select %p112, %s12, 1
          %s114 = smul.addr %s113, 4
          %s115 = scalar_lea.vmem %s0, %s114
        $region20: #{local_grouper.2} parent=15 // pred_fallthru
          _
      $region16: #{local_grouper.2} parent=5 // pred_fallthru
        _
      %p116 = scmp.le.s32.totalorder 1, %s12
      %p117 = scmp.lt.s32.totalorder %s12, 3
      %p118 = pnand %p116, %p117
      %p119 = pneg %p118
      // Predicated region
      $region21: #{local_grouper.2} parent=5 // pred_check
        _
      $region22: #{local_grouper.2} parent=5 // pred_check_branch
        %121 = sbr.rel (%p118) target = $region24
      $region23: #{local_grouper.2} parent=5 // pred_region
        %s122 = ssub.s32 %s12, 1
        %p123 = scmp.lt.s32.totalorder %s17, 1
        %s124 = scalar_select %p123, %s17, 1
        %s125 = smul.addr %s124, 4
        %s126 = scalar_lea.vmem %s0, %s125
        %p127 = pneg %p38
        %p128 = pneg %p35
        %p129 = pneg %p64
        %p130 = pneg %p61
        %s131 = sand.u32 %s51, 1
        %s132 = scalar_lea.sflag [#allocation4], %s131
        %s133 = sand.u32 %s51, 1
        %s134 = scalar_lea.vmem [#allocation3], %s133
        %p135 = pneg %p90
        %p136 = pneg %p87
        %p137 = scmp.lt.s32.totalorder %s17, 1
        %s138 = scalar_select %p137, %s17, 1
        %s139 = smul.addr %s138, 4
        %s140 = scalar_lea.vmem %s2, %s139
        %p141 = scmp.lt.s32.totalorder %s17, 1
        %s142 = scalar_select %p141, %s17, 1
        %s143 = smul.addr %s142, 4
        %s144 = scalar_lea.vmem %s0, %s143
        %p145 = scmp.lt.s32.totalorder %s17, 1
        %s146 = scalar_select %p145, %s17, 1
        %s147 = smul.addr %s146, 4
        %s148 = scalar_lea.vmem %s2, %s147
        %v149 = vld [vmem:[%s144] sm:$0x7]
        %v150 = vlaneseq
        %v151 = vand.u32 %v150, 127
        %152 = vst [vmem:[#allocation2] sm:$0x1] 1e+10
        %vm153 = vcmp.eq.s32.totalorder %v151, 0
        %v154 = vsel %vm153, 1, 0
        %vm155 = vcmp.eq.s32.totalorder %v154, 1
        %157 = vset.pattern.permute.xlu0 0
        %158 = vperm.xlu0 %157, %v149
        %v159 = vpop.permute.xlu0 %158
        %v161 = vsel %vm155, %v159, 0.0
        loop: start=1, step=1, limit=32
        $region25: #{local_grouper.2} parent=23 // loop_pre_header
          _
        $region26: #{local_grouper.2} parent=23 // loop_header
          %s163 = sphi 1, %s167
          %p164 = scmp.ge.s32.totalorder %s163, 32
          %v168 = vphi %v149, %v235
          %v169 = vphi 0, %v238
          %v170 = vphi %v161, %v241
        $region27: #{local_grouper.2} parent=23 // loop_header_branch
          %166 = sbr.rel (%p164) target = $region31
        $region28: #{local_grouper.2} parent=23 // loop_body
          %172 = vset.pattern.permute.xlu0 0
          %173 = vperm.xlu0 %172, %v168
          %v174 = vpop.permute.xlu0 %173
          %v176 = vsub.f32 %v149, %v174
          %v177 = vmul.f32 %v176, %v176
          %v179 = vrot.slane %v177, 1
          %v181 = vadd.f32 %v177, %v179
          %v182 = vrot.slane %v177, 2
          %v184 = vadd.f32 %v181, %v182
          %v185 = vld [vmem:[#allocation2] sm:$0x1]
          %v186 = vmin.f32 %v185, %v184
          %187 = vst [vmem:[#allocation2] sm:$0x1] %v186
          %vm188 = vcmask 1040384
          %v189 = vsel %vm188, %v186, -inf
          %190 = vmax.xlane.f32.xlu0 %v189
          %v191 = vpop.xlane.xlu0 %190
          %v192 = vrot.slane %v191, 4
          %v193 = vmax.f32 %v191, %v192
          %v194 = vrot.slane %v193, 2
          %v195 = vmax.f32 %v193, %v194
          %v196 = vrot.slane %v195, 1
          %v197 = vmax.f32 %v195, %v196
          %s198 = vtos %v197
          %v199 = vstv %s198
          %vm200 = vcmp.eq.f32.partialorder %v186, %v199
          %v201 = vsel %vm200, %v151, 128
          %v202 = vsel %vm188, %v201, 2147483647
          %v203 = vand.u32 %v202, 65535
          %v204 = vshra.s32 %v202, 16
          %v205 = vcvt.s32.f32 %v203
          %v206 = vcvt.s32.f32 %v204
          %207 = vmin.xlane.f32.xlu0 %v206
          %v208 = vpop.xlane.xlu0 %207
          %vm209 = vcmp.eq.f32.partialorder %v206, %v208
          %v210 = vsel %vm209, %v205, inf
          %211 = vmin.xlane.f32.xlu0 %v210
          %v212 = vpop.xlane.xlu0 %211
          %v213 = vcvt.f32.s32 %v212
          %v214 = vcvt.f32.s32 %v208
          %v215 = vshll.u32 %v214, 16
          %v216 = vadd.s32 %v215, %v213
          %v217 = vrot.slane %v216, 4
          %vm218 = vcmp.lt.s32.totalorder %v216, %v217
          %v219 = vsel %vm218, %v216, %v217
          %v220 = vrot.slane %v219, 2
          %vm221 = vcmp.lt.s32.totalorder %v219, %v220
          %v222 = vsel %vm221, %v219, %v220
          %v223 = vrot.slane %v222, 1
          %vm224 = vcmp.lt.s32.totalorder %v222, %v223
          %v225 = vsel %vm224, %v222, %v223
          %s226 = vtos %v225
          %v227 = vstv %s226
          %vm228 = vcmp.eq.s32.totalorder %v151, %v227
          %v229 = vsel %vm228, 1, 0
          %v230 = vcvt.s32.f32 %v229
          %v231 = vmul.f32 %v149, %v230
          %vm232 = vcmask 1042432
          %v233 = vsel %vm232, %v231, 0.0
          %234 = vadd.xlane.f32.xlu0 %v233
          %v235 = vpop.xlane.xlu0 %234
          %v236 = vstv %s163
          %vm237 = vcmp.eq.s32.totalorder %v151, %v236
          %v238 = vsel %vm237, %v227, %v169
          %v239 = vsel %vm237, 1, 0
          %vm240 = vcmp.eq.s32.totalorder %v239, 1
          %v241 = vsel %vm240, %v235, %v170
        $region29: #{local_grouper.2} parent=23 // loop_footer
          %s167 = sadd.s32 1, %s163
        $region30: #{local_grouper.2} parent=23 // loop_footer_branch
          %162 = sbr.rel target = $region26
        $region31: #{local_grouper.2} parent=23 // loop_exit
          _
        %vm242 = vcmask 253952
        %243 = vst.msk [vmem:[%s134] sm:$0x1] %vm242, %v169
        %vm244 = vcmask 256000
        %245 = vst.msk [vmem:[%s148] sm:$0x7] %vm244, %v170
        %s246 = sand.u32 %s51, 1
        %s247 = scalar_lea.sflag [#allocation4], %s246
        %s248 = sand.u32 %s51, 1
        %s249 = scalar_lea.vmem [#allocation3], %s248
        %p250 = scmp.lt.s32.totalorder %s17, 1
        %s251 = scalar_select %p250, %s17, 1
        %s252 = smul.addr %s251, 4
        %s253 = scalar_lea.vmem %s2, %s252
        // Predicated region
        $region32: #{local_grouper.2} parent=23 // pred_check
          %p254 = pneg %p61
        $region33: #{local_grouper.2} parent=23 // pred_check_branch
          %256 = sbr.rel (%p254) target = $region35
        $region34: #{local_grouper.2} parent=23 // pred_region
          %s258 = ssub.s32 16, 16
          %259 = vsyncadd %s247, %s258
          %s260 = smul.addr %s17, 16
          %s261 = scalar_lea.hbm %s1, %s260
          %s263 = sshll.u32 %s249, 4
          %s264 = int_to_ptr.vmem [resolvable:$true] %s263
          %266 = dma.vmem_to_hbm [thread:$0]  %s264, 16, %s261, %s247
        $region35: #{local_grouper.2} parent=23 // pred_fallthru
          _
        // Predicated region
        $region36: #{local_grouper.2} parent=23 // pred_check
          %p267 = pneg %p87
        $region37: #{local_grouper.2} parent=23 // pred_check_branch
          %269 = sbr.rel (%p267) target = $region39
        $region38: #{local_grouper.2} parent=23 // pred_region
          _
        $region39: #{local_grouper.2} parent=23 // pred_fallthru
          _
      $region24: #{local_grouper.2} parent=5 // pred_fallthru
        _
      %p270 = scmp.le.s32.totalorder 2, %s12
      // Predicated region
      $region40: #{local_grouper.2} parent=5 // pred_check
        %p271 = pneg %p270
      $region41: #{local_grouper.2} parent=5 // pred_check_branch
        %273 = sbr.rel (%p271) target = $region43
      $region42: #{local_grouper.2} parent=5 // pred_region
        %s274 = ssub.s32 %s12, 2
        // Predicated region
        $region44: #{local_grouper.2} parent=42 // pred_check
          %p275 = pneg %p67
        $region45: #{local_grouper.2} parent=42 // pred_check_branch
          %277 = sbr.rel (%p275) target = $region47
        $region46: #{local_grouper.2} parent=42 // pred_region
          %s278 = sand.u32 %s52, 1
          %s279 = scalar_lea.sflag [#allocation4], %s278
          %s280 = sand.u32 %s52, 1
          %s281 = scalar_lea.vmem [#allocation3], %s280
          %282 = dma.done %s279, 16
        $region47: #{local_grouper.2} parent=42 // pred_fallthru
          _
        // Predicated region
        $region48: #{local_grouper.2} parent=42 // pred_check
          %p283 = pneg %p93
        $region49: #{local_grouper.2} parent=42 // pred_check_branch
          %285 = sbr.rel (%p283) target = $region51
        $region50: #{local_grouper.2} parent=42 // pred_region
          %p286 = scmp.lt.s32.totalorder %s18, 1
          %s287 = scalar_select %p286, %s18, 1
          %s288 = smul.addr %s287, 4
          %s289 = scalar_lea.vmem %s2, %s288
        $region51: #{local_grouper.2} parent=42 // pred_fallthru
          _
      $region43: #{local_grouper.2} parent=5 // pred_fallthru
        _
    $region6: #{local_grouper.2} parent=1 // loop_footer
      %s16 = sadd.s32 1, %s12
    $region7: #{local_grouper.2} parent=1 // loop_footer_branch
      %11 = sbr.rel target = $region3
    $region8: #{local_grouper.2} parent=1 // loop_exit
      _
    %290 = vsyncpa [#allocation4], 1
    %s291 = scalar_lea.sflag [#allocation4], 1
    %292 = vsyncpa %s291, 1

// kernel: local_grouper.3
$region0: #{local_grouper.3}
  #allocation0 [shape = 'u32[]', space=smem, size = 0x4, offset = 0x4, fixed_abs, tag = 'smem constant byte address 0x4 - core index']
  #allocation1 [shape = 'u32[144,128]{1,0:T(1,128)}', space=vmem, size = 0x12000, scoped, tag = 'internal scratch']
  %s0 = inlined_call_operand.vmem [shape: f32[2,7,128], index: 0, kind: input, shape index: {}]
  %s1 = inlined_call_operand.vmem [shape: f32[2,3,32], index: 1, kind: input, shape index: {}]
  %s2 = inlined_call_operand.vmem [shape: f32[2,32,3], index: 2, kind: input, shape index: {}]
  %s3 = inlined_call_operand.vmem [shape: f32[2,7,512], index: 3, kind: output, shape index: {}]
  %s4 = sld [smem:[#allocation0]]
  $region45: #{local_grouper.3} parent=0
    _
  %s6 = ssub.s32 1, %s4
  %s7 = scalar_select 0, %s6, %s4
  loop: start=0, step=1, limit=4
  $region2: #{local_grouper.3} parent=0 // loop_pre_header
    _
  $region3: #{local_grouper.3} parent=0 // loop_header
    %s9 = sphi 0, %s13
    %p10 = scmp.ge.s32.totalorder %s9, 4
    %s19 = sphi 0, %s21
    %s22 = sphi 0, %s19
    %s23 = sphi 0, %s22
    %s39 = sphi 0, %s23
    %s45 = sphi 0, %s47
    %s48 = sphi 0, %s45
    %s49 = sphi 0, %s48
    %s65 = sphi 0, %s49
    %s71 = sphi 0, %s73
    %s74 = sphi 0, %s71
    %s75 = sphi 0, %s74
    %s91 = sphi 0, %s75
    %s97 = sphi 0, %s99
    %s100 = sphi 0, %s97
    %s101 = sphi 0, %s100
    %s117 = sphi 0, %s101
  $region4: #{local_grouper.3} parent=0 // loop_header_branch
    %12 = sbr.rel (%p10) target = $region8
  $region5: #{local_grouper.3} parent=0 // loop_body
    %s14 = ssub.s32 %s9, 1
    %s15 = ssub.s32 %s9, 2
    %s16 = sadd.s32 %s9, 1
    %s17 = ssub.s32 %s9, %s16
    %p18 = scmp.eq.s32.totalorder %s17, 0
    %s20 = sadd.s32 %s19, 1
    %s21 = scalar_select %p18, %s19, %s20
    %p24 = pneg %p18
    %p25 = scmp.eq.s32.totalorder %s9, 1
    %p26 = por %p24, %p25
    %p27 = scmp.ne.s32.totalorder %s19, %s22
    %p28 = scmp.eq.s32.totalorder %s9, 0
    %p29 = por %p27, %p28
    %p30 = scmp.ne.s32.totalorder %s19, %s22
    %p31 = scmp.eq.s32.totalorder %s14, 1
    %p32 = por %p30, %p31
    %p33 = scmp.ne.s32.totalorder %s22, %s23
    %p34 = scmp.eq.s32.totalorder %s14, 0
    %p35 = por %p33, %p34
    %p36 = scmp.ne.s32.totalorder %s22, %s23
    %p37 = scmp.eq.s32.totalorder %s15, 1
    %p38 = por %p36, %p37
    %p40 = scmp.ne.s32.totalorder %s23, %s39
    %p41 = scmp.eq.s32.totalorder %s15, 0
    %p42 = por %p40, %p41
    %s43 = ssub.s32 %s9, %s16
    %p44 = scmp.eq.s32.totalorder %s43, 0
    %s46 = sadd.s32 %s45, 1
    %s47 = scalar_select %p44, %s45, %s46
    %p50 = pneg %p44
    %p51 = scmp.eq.s32.totalorder %s9, 1
    %p52 = por %p50, %p51
    %p53 = scmp.ne.s32.totalorder %s45, %s48
    %p54 = scmp.eq.s32.totalorder %s9, 0
    %p55 = por %p53, %p54
    %p56 = scmp.ne.s32.totalorder %s45, %s48
    %p57 = scmp.eq.s32.totalorder %s14, 1
    %p58 = por %p56, %p57
    %p59 = scmp.ne.s32.totalorder %s48, %s49
    %p60 = scmp.eq.s32.totalorder %s14, 0
    %p61 = por %p59, %p60
    %p62 = scmp.ne.s32.totalorder %s48, %s49
    %p63 = scmp.eq.s32.totalorder %s15, 1
    %p64 = por %p62, %p63
    %p66 = scmp.ne.s32.totalorder %s49, %s65
    %p67 = scmp.eq.s32.totalorder %s15, 0
    %p68 = por %p66, %p67
    %s69 = ssub.s32 %s9, %s16
    %p70 = scmp.eq.s32.totalorder %s69, 0
    %s72 = sadd.s32 %s71, 1
    %s73 = scalar_select %p70, %s71, %s72
    %p76 = pneg %p70
    %p77 = scmp.eq.s32.totalorder %s9, 1
    %p78 = por %p76, %p77
    %p79 = scmp.ne.s32.totalorder %s71, %s74
    %p80 = scmp.eq.s32.totalorder %s9, 0
    %p81 = por %p79, %p80
    %p82 = scmp.ne.s32.totalorder %s71, %s74
    %p83 = scmp.eq.s32.totalorder %s14, 1
    %p84 = por %p82, %p83
    %p85 = scmp.ne.s32.totalorder %s74, %s75
    %p86 = scmp.eq.s32.totalorder %s14, 0
    %p87 = por %p85, %p86
    %p88 = scmp.ne.s32.totalorder %s74, %s75
    %p89 = scmp.eq.s32.totalorder %s15, 1
    %p90 = por %p88, %p89
    %p92 = scmp.ne.s32.totalorder %s75, %s91
    %p93 = scmp.eq.s32.totalorder %s15, 0
    %p94 = por %p92, %p93
    %s95 = ssub.s32 %s9, %s16
    %p96 = scmp.eq.s32.totalorder %s95, 0
    %s98 = sadd.s32 %s97, 1
    %s99 = scalar_select %p96, %s97, %s98
    %p102 = pneg %p96
    %p103 = scmp.eq.s32.totalorder %s9, 1
    %p104 = por %p102, %p103
    %p105 = scmp.ne.s32.totalorder %s97, %s100
    %p106 = scmp.eq.s32.totalorder %s9, 0
    %p107 = por %p105, %p106
    %p108 = scmp.ne.s32.totalorder %s97, %s100
    %p109 = scmp.eq.s32.totalorder %s14, 1
    %p110 = por %p108, %p109
    %p111 = scmp.ne.s32.totalorder %s100, %s101
    %p112 = scmp.eq.s32.totalorder %s14, 0
    %p113 = por %p111, %p112
    %p114 = scmp.ne.s32.totalorder %s100, %s101
    %p115 = scmp.eq.s32.totalorder %s15, 1
    %p116 = por %p114, %p115
    %p118 = scmp.ne.s32.totalorder %s101, %s117
    %p119 = scmp.eq.s32.totalorder %s15, 0
    %p120 = por %p118, %p119
    %p121 = scmp.le.s32.totalorder 1, %s9
    %p122 = scmp.lt.s32.totalorder %s9, 3
    %p123 = pnand %p121, %p122
    %p124 = pneg %p123
    // Predicated region
    $region9: #{local_grouper.3} parent=5 // pred_check
      _
    $region10: #{local_grouper.3} parent=5 // pred_check_branch
      %126 = sbr.rel (%p123) target = $region12
    $region11: #{local_grouper.3} parent=5 // pred_region
      %s127 = ssub.s32 %s9, 1
    $region12: #{local_grouper.3} parent=5 // pred_fallthru
      _
    %p128 = scmp.lt.s32.totalorder %s9, 2
    // Predicated region
    $region13: #{local_grouper.3} parent=5 // pred_check
      %p129 = pneg %p128
    $region14: #{local_grouper.3} parent=5 // pred_check_branch
      %131 = sbr.rel (%p129) target = $region16
    $region15: #{local_grouper.3} parent=5 // pred_region
      // Predicated region
      $region17: #{local_grouper.3} parent=15 // pred_check
        %p132 = pneg %p29
      $region18: #{local_grouper.3} parent=15 // pred_check_branch
        %134 = sbr.rel (%p132) target = $region20
      $region19: #{local_grouper.3} parent=15 // pred_region
        %p135 = scmp.lt.s32.totalorder %s9, 1
        %s136 = scalar_select %p135, %s9, 1
        %s137 = smul.addr %s136, 8
        %s138 = scalar_lea.vmem %s0, %s137
      $region20: #{local_grouper.3} parent=15 // pred_fallthru
        _
      // Predicated region
      $region21: #{local_grouper.3} parent=15 // pred_check
        %p139 = pneg %p55
      $region22: #{local_grouper.3} parent=15 // pred_check_branch
        %141 = sbr.rel (%p139) target = $region24
      $region23: #{local_grouper.3} parent=15 // pred_region
        %p142 = scmp.lt.s32.totalorder %s9, 1
        %s143 = scalar_select %p142, %s9, 1
        %s144 = smul.addr %s143, 4
        %s145 = scalar_lea.vmem %s1, %s144
      $region24: #{local_grouper.3} parent=15 // pred_fallthru
        _
      // Predicated region
      $region25: #{local_grouper.3} parent=15 // pred_check
        %p146 = pneg %p81
      $region26: #{local_grouper.3} parent=15 // pred_check_branch
        %148 = sbr.rel (%p146) target = $region28
      $region27: #{local_grouper.3} parent=15 // pred_region
        %p149 = scmp.lt.s32.totalorder %s9, 1
        %s150 = scalar_select %p149, %s9, 1
        %s151 = smul.addr %s150, 4
        %s152 = smul.addr %s151, 8
        %s153 = scalar_lea.vmem %s2, %s152
      $region28: #{local_grouper.3} parent=15 // pred_fallthru
        _
    $region16: #{local_grouper.3} parent=5 // pred_fallthru
      _
    %p154 = scmp.le.s32.totalorder 1, %s9
    %p155 = scmp.lt.s32.totalorder %s9, 3
    %p156 = pnand %p154, %p155
    %p157 = pneg %p156
    // Predicated region
    $region29: #{local_grouper.3} parent=5 // pred_check
      _
    $region30: #{local_grouper.3} parent=5 // pred_check_branch
      %159 = sbr.rel (%p156) target = $region32
    $region31: #{local_grouper.3} parent=5 // pred_region
      %s160 = ssub.s32 %s9, 1
      %p161 = scmp.lt.s32.totalorder %s14, 1
      %s162 = scalar_select %p161, %s14, 1
      %s163 = smul.addr %s162, 8
      %s164 = scalar_lea.vmem %s0, %s163
      %p165 = pneg %p35
      %p166 = pneg %p32
      %p167 = scmp.lt.s32.totalorder %s14, 1
      %s168 = scalar_select %p167, %s14, 1
      %s169 = smul.addr %s168, 4
      %s170 = scalar_lea.vmem %s1, %s169
      %p171 = pneg %p61
      %p172 = pneg %p58
      %p173 = scmp.lt.s32.totalorder %s14, 1
      %s174 = scalar_select %p173, %s14, 1
      %s175 = smul.addr %s174, 4
      %s176 = smul.addr %s175, 8
      %s177 = scalar_lea.vmem %s2, %s176
      %p178 = pneg %p87
      %p179 = pneg %p84
      %p180 = pneg %p113
      %p181 = pneg %p110
      %p182 = scmp.lt.s32.totalorder %s14, 1
      %s183 = scalar_select %p182, %s14, 1
      %s184 = smul.addr %s183, 4
      %s185 = smul.addr %s184, 8
      %s186 = scalar_lea.vmem %s3, %s185
      %p187 = scmp.lt.s32.totalorder %s14, 1
      %s188 = scalar_select %p187, %s14, 1
      %s189 = smul.addr %s188, 8
      %s190 = scalar_lea.vmem %s0, %s189
      %p191 = scmp.lt.s32.totalorder %s14, 1
      %s192 = scalar_select %p191, %s14, 1
      %s193 = smul.addr %s192, 4
      %s194 = scalar_lea.vmem %s1, %s193
      %p195 = scmp.lt.s32.totalorder %s14, 1
      %s196 = scalar_select %p195, %s14, 1
      %s197 = smul.addr %s196, 4
      %s198 = smul.addr %s197, 8
      %s199 = scalar_lea.vmem %s2, %s198
      %p200 = scmp.lt.s32.totalorder %s14, 1
      %s201 = scalar_select %p200, %s14, 1
      %s202 = smul.addr %s201, 4
      %s203 = smul.addr %s202, 8
      %s204 = scalar_lea.vmem %s3, %s203
      %v205 = vld [vmem:[%s190] sm:$0x7f]
      %v206 = vld [vmem:[%s194] sm:$0x7]
      %v207 = vld [vmem:[%s199] sm:$0xff]
      %v208 = vld [vmem:[%s199 + $0x8] sm:$0xff]
      %v209 = vld [vmem:[%s199 + $0x10] sm:$0xff]
      %v210 = vld [vmem:[%s199 + $0x18] sm:$0xff]
      %v211 = vlaneseq
      %v212 = vshrl.u32 %v211, 7
      %v213 = vsub.s32 0, %v212
      %v214 = vrot.slane %v205, %v213
      %216 = vset.pattern.permute.xlu0 0
      %217 = vperm.xlu0 %216, %v207
      %v218 = vpop.permute.xlu0 %217
      %221 = vset.pattern.permute.xlu0 0
      %222 = vperm.xlu0 %221, %v208
      %v223 = vpop.permute.xlu0 %222
      %226 = vset.pattern.permute.xlu0 0
      %227 = vperm.xlu0 %226, %v209
      %v228 = vpop.permute.xlu0 %227
      %231 = vset.pattern.permute.xlu0 0
      %232 = vperm.xlu0 %231, %v210
      %v233 = vpop.permute.xlu0 %232
      %v235 = vsub.f32 %v214, %v218
      %v236 = vsub.f32 %v214, %v223
      %v237 = vsub.f32 %v214, %v228
      %v238 = vsub.f32 %v214, %v233
      %v239 = vlaneseq
      %v240 = vshrl.u32 %v239, 7
      %v241 = vsub.s32 1, %v240
      %v242 = vrot.slane %v205, %v241
      %243 = vset.pattern.permute.xlu0 1
      %244 = vperm.xlu0 %243, %v207
      %v245 = vpop.permute.xlu0 %244
      %247 = vset.pattern.permute.xlu0 1
      %248 = vperm.xlu0 %247, %v208
      %v249 = vpop.permute.xlu0 %248
      %251 = vset.pattern.permute.xlu0 1
      %252 = vperm.xlu0 %251, %v209
      %v253 = vpop.permute.xlu0 %252
      %255 = vset.pattern.permute.xlu0 1
      %256 = vperm.xlu0 %255, %v210
      %v257 = vpop.permute.xlu0 %256
      %v259 = vsub.f32 %v242, %v245
      %v260 = vsub.f32 %v242, %v249
      %v261 = vsub.f32 %v242, %v253
      %v262 = vsub.f32 %v242, %v257
      %v263 = vlaneseq
      %v264 = vshrl.u32 %v263, 7
      %v265 = vsub.s32 2, %v264
      %v266 = vrot.slane %v205, %v265
      %267 = vset.pattern.permute.xlu0 2
      %268 = vperm.xlu0 %267, %v207
      %v269 = vpop.permute.xlu0 %268
      %271 = vset.pattern.permute.xlu0 2
      %272 = vperm.xlu0 %271, %v208
      %v273 = vpop.permute.xlu0 %272
      %275 = vset.pattern.permute.xlu0 2
      %276 = vperm.xlu0 %275, %v209
      %v277 = vpop.permute.xlu0 %276
      %279 = vset.pattern.permute.xlu0 2
      %280 = vperm.xlu0 %279, %v210
      %v281 = vpop.permute.xlu0 %280
      %v283 = vsub.f32 %v266, %v269
      %v284 = vsub.f32 %v266, %v273
      %v285 = vsub.f32 %v266, %v277
      %v286 = vsub.f32 %v266, %v281
      %v287 = vmul.f32 %v235, %v235
      %v288 = vmul.f32 %v236, %v236
      %v289 = vmul.f32 %v237, %v237
      %v290 = vmul.f32 %v238, %v238
      %v291 = vmul.f32 %v259, %v259
      %v292 = vmul.f32 %v260, %v260
      %v293 = vmul.f32 %v261, %v261
      %v294 = vmul.f32 %v262, %v262
      %v295 = vadd.f32 %v287, %v291
      %v296 = vadd.f32 %v288, %v292
      %v297 = vadd.f32 %v289, %v293
      %v298 = vadd.f32 %v290, %v294
      %v299 = vmul.f32 %v283, %v283
      %v300 = vmul.f32 %v284, %v284
      %v301 = vmul.f32 %v285, %v285
      %v302 = vmul.f32 %v286, %v286
      %v303 = vadd.f32 %v295, %v299
      %v304 = vadd.f32 %v296, %v300
      %v305 = vadd.f32 %v297, %v301
      %v306 = vadd.f32 %v298, %v302
      %vm307 = vcmp.lt.f32.partialorder %v303, 0.09
      %vm308 = vcmp.lt.f32.partialorder %v304, 0.09
      %vm309 = vcmp.lt.f32.partialorder %v305, 0.09
      %vm310 = vcmp.lt.f32.partialorder %v306, 0.09
      %v311 = vlaneseq
      %v312 = vand.u32 %v311, 127
      %vm313 = vcmask 1042432
      %v314 = vsel %vm313, %v206, 0.0
      %v315 = vsel %vm307, %v312, 128
      %v316 = vsel %vm308, %v312, 128
      %v317 = vsel %vm309, %v312, 128
      %v318 = vsel %vm310, %v312, 128
      %v319 = vand.u32 %v315, 65535
      %v320 = vshra.s32 %v315, 16
      %v321 = vcvt.s32.f32 %v319
      %v322 = vcvt.s32.f32 %v320
      %323 = vmin.xlane.f32.xlu0 %v322
      %v324 = vpop.xlane.xlu0 %323
      %vm325 = vcmp.eq.f32.partialorder %v322, %v324
      %v326 = vsel %vm325, %v321, inf
      %327 = vmin.xlane.f32.xlu0 %v326
      %v328 = vpop.xlane.xlu0 %327
      %v329 = vcvt.f32.s32 %v328
      %v330 = vcvt.f32.s32 %v324
      %v331 = vshll.u32 %v330, 16
      %v332 = vadd.s32 %v331, %v329
      %v333 = vand.u32 %v316, 65535
      %v334 = vshra.s32 %v316, 16
      %v335 = vcvt.s32.f32 %v333
      %v336 = vcvt.s32.f32 %v334
      %337 = vmin.xlane.f32.xlu0 %v336
      %v338 = vpop.xlane.xlu0 %337
      %vm339 = vcmp.eq.f32.partialorder %v336, %v338
      %v340 = vsel %vm339, %v335, inf
      %341 = vmin.xlane.f32.xlu0 %v340
      %v342 = vpop.xlane.xlu0 %341
      %v343 = vcvt.f32.s32 %v342
      %v344 = vcvt.f32.s32 %v338
      %v345 = vshll.u32 %v344, 16
      %v346 = vadd.s32 %v345, %v343
      %v347 = vand.u32 %v317, 65535
      %v348 = vshra.s32 %v317, 16
      %v349 = vcvt.s32.f32 %v347
      %v350 = vcvt.s32.f32 %v348
      %351 = vmin.xlane.f32.xlu0 %v350
      %v352 = vpop.xlane.xlu0 %351
      %vm353 = vcmp.eq.f32.partialorder %v350, %v352
      %v354 = vsel %vm353, %v349, inf
      %355 = vmin.xlane.f32.xlu0 %v354
      %v356 = vpop.xlane.xlu0 %355
      %v357 = vcvt.f32.s32 %v356
      %v358 = vcvt.f32.s32 %v352
      %v359 = vshll.u32 %v358, 16
      %v360 = vadd.s32 %v359, %v357
      %v361 = vand.u32 %v318, 65535
      %v362 = vshra.s32 %v318, 16
      %v363 = vcvt.s32.f32 %v361
      %v364 = vcvt.s32.f32 %v362
      %365 = vmin.xlane.f32.xlu0 %v364
      %v366 = vpop.xlane.xlu0 %365
      %vm367 = vcmp.eq.f32.partialorder %v364, %v366
      %v368 = vsel %vm367, %v363, inf
      %369 = vmin.xlane.f32.xlu0 %v368
      %v370 = vpop.xlane.xlu0 %369
      %v371 = vcvt.f32.s32 %v370
      %v372 = vcvt.f32.s32 %v366
      %v373 = vshll.u32 %v372, 16
      %v374 = vadd.s32 %v373, %v371
      %vm375 = vcmp.lt.s32.totalorder %v332, 128
      %vm376 = vcmp.lt.s32.totalorder %v346, 128
      %vm377 = vcmp.lt.s32.totalorder %v360, 128
      %vm378 = vcmp.lt.s32.totalorder %v374, 128
      %v379 = vsel %vm375, %v332, 0
      %v380 = vsel %vm376, %v346, 0
      %v381 = vsel %vm377, %v360, 0
      %v382 = vsel %vm378, %v374, 0
      %vm383 = vcmp.ne.s32.totalorder %v312, %v332
      %vm384 = vcmp.ne.s32.totalorder %v312, %v346
      %vm385 = vcmp.ne.s32.totalorder %v312, %v360
      %vm386 = vcmp.ne.s32.totalorder %v312, %v374
      %vm387 = vmand %vm307, %vm383
      %vm388 = vmand %vm308, %vm384
      %vm389 = vmand %vm309, %vm385
      %vm390 = vmand %vm310, %vm386
      %vm391 = vcmp.eq.s32.totalorder %v312, %v379
      %vm392 = vcmp.eq.s32.totalorder %v312, %v380
      %vm393 = vcmp.eq.s32.totalorder %v312, %v381
      %vm394 = vcmp.eq.s32.totalorder %v312, %v382
      %v395 = vsel %vm391, 1, 0
      %v396 = vsel %vm392, 1, 0
      %v397 = vsel %vm393, 1, 0
      %v398 = vsel %vm394, 1, 0
      %v399 = vcvt.s32.f32 %v395
      %v400 = vcvt.s32.f32 %v396
      %v401 = vcvt.s32.f32 %v397
      %v402 = vcvt.s32.f32 %v398
      %403 = vmatprep.subr.mxu0 0.0
      %404 = vmatpush1.xpose.msra.mxu0 %v399
      %405 = vmatprep.subr.mxu0 0.0
      %406 = vmatpush1.xpose.msra.mxu0 %v400
      %407 = vmatprep.subr.mxu0 0.0
      %408 = vmatpush1.xpose.msra.mxu0 %v401
      %409 = vmatprep.subr.mxu0 0.0
      %410 = vmatpush1.xpose.msra.mxu0 %v402
      %411 = vmatprep.subr.mxu0 0.0
      %412 = vmatpush1.xpose.msra.mxu0 0.0
      %413 = vmatprep.subr.mxu0 0.0
      %414 = vmatpush1.xpose.msra.mxu0 0.0
      %415 = vmatprep.subr.mxu0 0.0
      %416 = vmatpush1.xpose.msra.mxu0 0.0
      %417 = vmatprep.subr.mxu0 0.0
      %418 = vmatpush1.xpose.msra.mxu0 0.0
      %419 = vmatprep.subr.mxu0 0.0
      %420 = vmatpush1.xpose.msra.mxu0 0.0
      %421 = vmatprep.subr.mxu0 0.0
      %422 = vmatpush1.xpose.msra.mxu0 0.0
      %423 = vmatprep.subr.mxu0 0.0
      %424 = vmatpush1.xpose.msra.mxu0 0.0
      %425 = vmatprep.subr.mxu0 0.0
      %426 = vmatpush1.xpose.msra.mxu0 0.0
      %427 = vmatprep.subr.mxu0 0.0
      %428 = vmatpush1.xpose.msra.mxu0 0.0
      %429 = vmatprep.subr.mxu0 0.0
      %430 = vmatpush1.xpose.msra.mxu0 0.0
      %431 = vmatprep.subr.mxu0 0.0
      %432 = vmatpush1.xpose.msra.mxu0 0.0
      %433 = vmatprep.subr.mxu0 0.0
      %434 = vmatpush1.xpose.msra.mxu0 0.0
      %435 = vmatprep.subr.mxu0 0.0
      %436 = vmatpush1.xpose.msra.mxu0 0.0
      %437 = vmatprep.subr.mxu0 0.0
      %438 = vmatpush1.xpose.msra.mxu0 0.0
      %439 = vmatprep.subr.mxu0 0.0
      %440 = vmatpush1.xpose.msra.mxu0 0.0
      %441 = vmatprep.subr.mxu0 0.0
      %442 = vmatpush1.xpose.msra.mxu0 0.0
      %443 = vmatprep.subr.mxu0 0.0
      %444 = vmatpush1.xpose.msra.mxu0 0.0
      %445 = vmatprep.subr.mxu0 0.0
      %446 = vmatpush1.xpose.msra.mxu0 0.0
      %447 = vmatprep.subr.mxu0 0.0
      %448 = vmatpush1.xpose.msra.mxu0 0.0
      %449 = vmatprep.subr.mxu0 0.0
      %450 = vmatpush1.xpose.msra.mxu0 0.0
      %451 = vmatprep.subr.mxu0 0.0
      %452 = vmatpush1.xpose.msra.mxu0 0.0
      %453 = vmatprep.subr.mxu0 0.0
      %454 = vmatpush1.xpose.msra.mxu0 0.0
      %455 = vmatprep.subr.mxu0 0.0
      %456 = vmatpush1.xpose.msra.mxu0 0.0
      %457 = vmatprep.subr.mxu0 0.0
      %458 = vmatpush1.xpose.msra.mxu0 0.0
      %459 = vmatprep.subr.mxu0 0.0
      %460 = vmatpush1.xpose.msra.mxu0 0.0
      %461 = vmatprep.subr.mxu0 0.0
      %462 = vmatpush1.xpose.msra.mxu0 0.0
      %463 = vmatprep.subr.mxu0 0.0
      %464 = vmatpush1.xpose.msra.mxu0 0.0
      %465 = vmatprep.subr.mxu0 0.0
      %466 = vmatpush1.xpose.msra.mxu0 0.0
      %467 = vmatprep.mubr.f32.mxu0 0.0
      %468 = vmatmul.mubr.f32.gmra.mrb[0].mxu0 %v205
      %v469 = vpop.f32.mrb[0].mxu0
      %v470 = vadd.f32 0.0, %v469
      %v471 = vpop.f32.mrb[0].mxu0
      %472 = vdwg.mxu0
      %v473 = vsub.f32 %v470, %v314
      %vm474 = vcmask 260096
      %475 = vst.msk [vmem:[%s204] sm:$0x7f] %vm474, %v473
      %v476 = vsel %vm387, %v312, 128
      %v477 = vsel %vm388, %v312, 128
      %v478 = vsel %vm389, %v312, 128
      %v479 = vsel %vm390, %v312, 128
      %v480 = vand.u32 %v476, 65535
      %v481 = vshra.s32 %v476, 16
      %v482 = vcvt.s32.f32 %v480
      %v483 = vcvt.s32.f32 %v481
      %484 = vmin.xlane.f32.xlu0 %v483
      %v485 = vpop.xlane.xlu0 %484
      %vm486 = vcmp.eq.f32.partialorder %v483, %v485
      %v487 = vsel %vm486, %v482, inf
      %488 = vmin.xlane.f32.xlu0 %v487
      %v489 = vpop.xlane.xlu0 %488
      %v490 = vcvt.f32.s32 %v489
      %v491 = vcvt.f32.s32 %v485
      %v492 = vshll.u32 %v491, 16
      %v493 = vadd.s32 %v492, %v490
      %v494 = vand.u32 %v477, 65535
      %v495 = vshra.s32 %v477, 16
      %v496 = vcvt.s32.f32 %v494
      %v497 = vcvt.s32.f32 %v495
      %498 = vmin.xlane.f32.xlu0 %v497
      %v499 = vpop.xlane.xlu0 %498
      %vm500 = vcmp.eq.f32.partialorder %v497, %v499
      %v501 = vsel %vm500, %v496, inf
      %502 = vmin.xlane.f32.xlu0 %v501
      %v503 = vpop.xlane.xlu0 %502
      %v504 = vcvt.f32.s32 %v503
      %v505 = vcvt.f32.s32 %v499
      %v506 = vshll.u32 %v505, 16
      %v507 = vadd.s32 %v506, %v504
      %v508 = vand.u32 %v478, 65535
      %v509 = vshra.s32 %v478, 16
      %v510 = vcvt.s32.f32 %v508
      %v511 = vcvt.s32.f32 %v509
      %512 = vmin.xlane.f32.xlu0 %v511
      %v513 = vpop.xlane.xlu0 %512
      %vm514 = vcmp.eq.f32.partialorder %v511, %v513
      %v515 = vsel %vm514, %v510, inf
      %516 = vmin.xlane.f32.xlu0 %v515
      %v517 = vpop.xlane.xlu0 %516
      %v518 = vcvt.f32.s32 %v517
      %v519 = vcvt.f32.s32 %v513
      %v520 = vshll.u32 %v519, 16
      %v521 = vadd.s32 %v520, %v518
      %v522 = vand.u32 %v479, 65535
      %v523 = vshra.s32 %v479, 16
      %v524 = vcvt.s32.f32 %v522
      %v525 = vcvt.s32.f32 %v523
      %526 = vmin.xlane.f32.xlu0 %v525
      %v527 = vpop.xlane.xlu0 %526
      %vm528 = vcmp.eq.f32.partialorder %v525, %v527
      %v529 = vsel %vm528, %v524, inf
      %530 = vmin.xlane.f32.xlu0 %v529
      %v531 = vpop.xlane.xlu0 %530
      %v532 = vcvt.f32.s32 %v531
      %v533 = vcvt.f32.s32 %v527
      %v534 = vshll.u32 %v533, 16
      %v535 = vadd.s32 %v534, %v532
      %vm536 = vcmp.lt.s32.totalorder %v493, 128
      %vm537 = vcmp.lt.s32.totalorder %v507, 128
      %vm538 = vcmp.lt.s32.totalorder %v521, 128
      %vm539 = vcmp.lt.s32.totalorder %v535, 128
      %v540 = vsel %vm536, %v493, %v379
      %v541 = vsel %vm537, %v507, %v380
      %v542 = vsel %vm538, %v521, %v381
      %v543 = vsel %vm539, %v535, %v382
      %vm544 = vcmp.ne.s32.totalorder %v312, %v493
      %vm545 = vcmp.ne.s32.totalorder %v312, %v507
      %vm546 = vcmp.ne.s32.totalorder %v312, %v521
      %vm547 = vcmp.ne.s32.totalorder %v312, %v535
      %vm548 = vmand %vm387, %vm544
      %vm549 = vmand %vm388, %vm545
      %vm550 = vmand %vm389, %vm546
      %vm551 = vmand %vm390, %vm547
      %vm552 = vcmp.eq.s32.totalorder %v312, %v540
      %vm553 = vcmp.eq.s32.totalorder %v312, %v541
      %vm554 = vcmp.eq.s32.totalorder %v312, %v542
      %vm555 = vcmp.eq.s32.totalorder %v312, %v543
      %v556 = vsel %vm552, 1, 0
      %v557 = vsel %vm553, 1, 0
      %v558 = vsel %vm554, 1, 0
      %v559 = vsel %vm555, 1, 0
      %v560 = vcvt.s32.f32 %v556
      %v561 = vcvt.s32.f32 %v557
      %v562 = vcvt.s32.f32 %v558
      %v563 = vcvt.s32.f32 %v559
      %564 = vmatprep.subr.mxu0 0.0
      %565 = vmatpush1.xpose.msra.mxu0 %v560
      %566 = vmatprep.subr.mxu0 0.0
      %567 = vmatpush1.xpose.msra.mxu0 %v561
      %568 = vmatprep.subr.mxu0 0.0
      %569 = vmatpush1.xpose.msra.mxu0 %v562
      %570 = vmatprep.subr.mxu0 0.0
      %571 = vmatpush1.xpose.msra.mxu0 %v563
      %572 = vmatprep.subr.mxu0 0.0
      %573 = vmatpush1.xpose.msra.mxu0 0.0
      %574 = vmatprep.subr.mxu0 0.0
      %575 = vmatpush1.xpose.msra.mxu0 0.0
      %576 = vmatprep.subr.mxu0 0.0
      %577 = vmatpush1.xpose.msra.mxu0 0.0
      %578 = vmatprep.subr.mxu0 0.0
      %579 = vmatpush1.xpose.msra.mxu0 0.0
      %580 = vmatprep.subr.mxu0 0.0
      %581 = vmatpush1.xpose.msra.mxu0 0.0
      %582 = vmatprep.subr.mxu0 0.0
      %583 = vmatpush1.xpose.msra.mxu0 0.0
      %584 = vmatprep.subr.mxu0 0.0
      %585 = vmatpush1.xpose.msra.mxu0 0.0
      %586 = vmatprep.subr.mxu0 0.0
      %587 = vmatpush1.xpose.msra.mxu0 0.0
      %588 = vmatprep.subr.mxu0 0.0
      %589 = vmatpush1.xpose.msra.mxu0 0.0
      %590 = vmatprep.subr.mxu0 0.0
      %591 = vmatpush1.xpose.msra.mxu0 0.0
      %592 = vmatprep.subr.mxu0 0.0
      %593 = vmatpush1.xpose.msra.mxu0 0.0
      %594 = vmatprep.subr.mxu0 0.0
      %595 = vmatpush1.xpose.msra.mxu0 0.0
      %596 = vmatprep.subr.mxu0 0.0
      %597 = vmatpush1.xpose.msra.mxu0 0.0
      %598 = vmatprep.subr.mxu0 0.0
      %599 = vmatpush1.xpose.msra.mxu0 0.0
      %600 = vmatprep.subr.mxu0 0.0
      %601 = vmatpush1.xpose.msra.mxu0 0.0
      %602 = vmatprep.subr.mxu0 0.0
      %603 = vmatpush1.xpose.msra.mxu0 0.0
      %604 = vmatprep.subr.mxu0 0.0
      %605 = vmatpush1.xpose.msra.mxu0 0.0
      %606 = vmatprep.subr.mxu0 0.0
      %607 = vmatpush1.xpose.msra.mxu0 0.0
      %608 = vmatprep.subr.mxu0 0.0
      %609 = vmatpush1.xpose.msra.mxu0 0.0
      %610 = vmatprep.subr.mxu0 0.0
      %611 = vmatpush1.xpose.msra.mxu0 0.0
      %612 = vmatprep.subr.mxu0 0.0
      %613 = vmatpush1.xpose.msra.mxu0 0.0
      %614 = vmatprep.subr.mxu0 0.0
      %615 = vmatpush1.xpose.msra.mxu0 0.0
      %616 = vmatprep.subr.mxu0 0.0
      %617 = vmatpush1.xpose.msra.mxu0 0.0
      %618 = vmatprep.subr.mxu0 0.0
      %619 = vmatpush1.xpose.msra.mxu0 0.0
      %620 = vmatprep.subr.mxu0 0.0
      %621 = vmatpush1.xpose.msra.mxu0 0.0
      %622 = vmatprep.subr.mxu0 0.0
      %623 = vmatpush1.xpose.msra.mxu0 0.0
      %624 = vmatprep.subr.mxu0 0.0
      %625 = vmatpush1.xpose.msra.mxu0 0.0
      %626 = vmatprep.subr.mxu0 0.0
      %627 = vmatpush1.xpose.msra.mxu0 0.0
      %628 = vmatprep.mubr.f32.mxu0 0.0
      %629 = vmatmul.mubr.f32.gmra.mrb[0].mxu0 %v205
      %v630 = vpop.f32.mrb[0].mxu0
      %v631 = vadd.f32 0.0, %v630
      %v632 = vpop.f32.mrb[0].mxu0
      %633 = vdwg.mxu0
      %v634 = vsub.f32 %v631, %v314
      %636 = vrot.lane.b32.xlu0 %v634, 32
      %v637 = vpop.permute.xlu0 %636
      %vm639 = vcmask 522496
      %640 = vst.msk [vmem:[%s204] sm:$0x7f] %vm639, %v637
      %v641 = vsel %vm548, %v312, 128
      %v642 = vsel %vm549, %v312, 128
      %v643 = vsel %vm550, %v312, 128
      %v644 = vsel %vm551, %v312, 128
      %v645 = vand.u32 %v641, 65535
      %v646 = vshra.s32 %v641, 16
      %v647 = vcvt.s32.f32 %v645
      %v648 = vcvt.s32.f32 %v646
      %649 = vmin.xlane.f32.xlu0 %v648
      %v650 = vpop.xlane.xlu0 %649
      %vm651 = vcmp.eq.f32.partialorder %v648, %v650
      %v652 = vsel %vm651, %v647, inf
      %653 = vmin.xlane.f32.xlu0 %v652
      %v654 = vpop.xlane.xlu0 %653
      %v655 = vcvt.f32.s32 %v654
      %v656 = vcvt.f32.s32 %v650
      %v657 = vshll.u32 %v656, 16
      %v658 = vadd.s32 %v657, %v655
      %v659 = vand.u32 %v642, 65535
      %v660 = vshra.s32 %v642, 16
      %v661 = vcvt.s32.f32 %v659
      %v662 = vcvt.s32.f32 %v660
      %663 = vmin.xlane.f32.xlu0 %v662
      %v664 = vpop.xlane.xlu0 %663
      %vm665 = vcmp.eq.f32.partialorder %v662, %v664
      %v666 = vsel %vm665, %v661, inf
      %667 = vmin.xlane.f32.xlu0 %v666
      %v668 = vpop.xlane.xlu0 %667
      %v669 = vcvt.f32.s32 %v668
      %v670 = vcvt.f32.s32 %v664
      %v671 = vshll.u32 %v670, 16
      %v672 = vadd.s32 %v671, %v669
      %v673 = vand.u32 %v643, 65535
      %v674 = vshra.s32 %v643, 16
      %v675 = vcvt.s32.f32 %v673
      %v676 = vcvt.s32.f32 %v674
      %677 = vmin.xlane.f32.xlu0 %v676
      %v678 = vpop.xlane.xlu0 %677
      %vm679 = vcmp.eq.f32.partialorder %v676, %v678
      %v680 = vsel %vm679, %v675, inf
      %681 = vmin.xlane.f32.xlu0 %v680
      %v682 = vpop.xlane.xlu0 %681
      %v683 = vcvt.f32.s32 %v682
      %v684 = vcvt.f32.s32 %v678
      %v685 = vshll.u32 %v684, 16
      %v686 = vadd.s32 %v685, %v683
      %v687 = vand.u32 %v644, 65535
      %v688 = vshra.s32 %v644, 16
      %v689 = vcvt.s32.f32 %v687
      %v690 = vcvt.s32.f32 %v688
      %691 = vmin.xlane.f32.xlu0 %v690
      %v692 = vpop.xlane.xlu0 %691
      %vm693 = vcmp.eq.f32.partialorder %v690, %v692
      %v694 = vsel %vm693, %v689, inf
      %695 = vmin.xlane.f32.xlu0 %v694
      %v696 = vpop.xlane.xlu0 %695
      %v697 = vcvt.f32.s32 %v696
      %v698 = vcvt.f32.s32 %v692
      %v699 = vshll.u32 %v698, 16
      %v700 = vadd.s32 %v699, %v697
      %vm701 = vcmp.lt.s32.totalorder %v658, 128
      %vm702 = vcmp.lt.s32.totalorder %v672, 128
      %vm703 = vcmp.lt.s32.totalorder %v686, 128
      %vm704 = vcmp.lt.s32.totalorder %v700, 128
      %v705 = vsel %vm701, %v658, %v379
      %v706 = vsel %vm702, %v672, %v380
      %v707 = vsel %vm703, %v686, %v381
      %v708 = vsel %vm704, %v700, %v382
      %vm709 = vcmp.ne.s32.totalorder %v312, %v658
      %vm710 = vcmp.ne.s32.totalorder %v312, %v672
      %vm711 = vcmp.ne.s32.totalorder %v312, %v686
      %vm712 = vcmp.ne.s32.totalorder %v312, %v700
      %vm713 = vmand %vm548, %vm709
      %vm714 = vmand %vm549, %vm710
      %vm715 = vmand %vm550, %vm711
      %vm716 = vmand %vm551, %vm712
      %vm717 = vcmp.eq.s32.totalorder %v312, %v705
      %vm718 = vcmp.eq.s32.totalorder %v312, %v706
      %vm719 = vcmp.eq.s32.totalorder %v312, %v707
      %vm720 = vcmp.eq.s32.totalorder %v312, %v708
      %v721 = vsel %vm717, 1, 0
      %v722 = vsel %vm718, 1, 0
      %v723 = vsel %vm719, 1, 0
      %v724 = vsel %vm720, 1, 0
      %v725 = vcvt.s32.f32 %v721
      %v726 = vcvt.s32.f32 %v722
      %v727 = vcvt.s32.f32 %v723
      %v728 = vcvt.s32.f32 %v724
      %729 = vmatprep.subr.mxu0 0.0
      %730 = vmatpush1.xpose.msra.mxu0 %v725
      %731 = vmatprep.subr.mxu0 0.0
      %732 = vmatpush1.xpose.msra.mxu0 %v726
      %733 = vmatprep.subr.mxu0 0.0
      %734 = vmatpush1.xpose.msra.mxu0 %v727
      %735 = vmatprep.subr.mxu0 0.0
      %736 = vmatpush1.xpose.msra.mxu0 %v728
      %737 = vmatprep.subr.mxu0 0.0
      %738 = vmatpush1.xpose.msra.mxu0 0.0
      %739 = vmatprep.subr.mxu0 0.0
      %740 = vmatpush1.xpose.msra.mxu0 0.0
      %741 = vmatprep.subr.mxu0 0.0
      %742 = vmatpush1.xpose.msra.mxu0 0.0
      %743 = vmatprep.subr.mxu0 0.0
      %744 = vmatpush1.xpose.msra.mxu0 0.0
      %745 = vmatprep.subr.mxu0 0.0
      %746 = vmatpush1.xpose.msra.mxu0 0.0
      %747 = vmatprep.subr.mxu0 0.0
      %748 = vmatpush1.xpose.msra.mxu0 0.0
      %749 = vmatprep.subr.mxu0 0.0
      %750 = vmatpush1.xpose.msra.mxu0 0.0
      %751 = vmatprep.subr.mxu0 0.0
      %752 = vmatpush1.xpose.msra.mxu0 0.0
      %753 = vmatprep.subr.mxu0 0.0
      %754 = vmatpush1.xpose.msra.mxu0 0.0
      %755 = vmatprep.subr.mxu0 0.0
      %756 = vmatpush1.xpose.msra.mxu0 0.0
      %757 = vmatprep.subr.mxu0 0.0
      %758 = vmatpush1.xpose.msra.mxu0 0.0
      %759 = vmatprep.subr.mxu0 0.0
      %760 = vmatpush1.xpose.msra.mxu0 0.0
      %761 = vmatprep.subr.mxu0 0.0
      %762 = vmatpush1.xpose.msra.mxu0 0.0
      %763 = vmatprep.subr.mxu0 0.0
      %764 = vmatpush1.xpose.msra.mxu0 0.0
      %765 = vmatprep.subr.mxu0 0.0
      %766 = vmatpush1.xpose.msra.mxu0 0.0
      %767 = vmatprep.subr.mxu0 0.0
      %768 = vmatpush1.xpose.msra.mxu0 0.0
      %769 = vmatprep.subr.mxu0 0.0
      %770 = vmatpush1.xpose.msra.mxu0 0.0
      %771 = vmatprep.subr.mxu0 0.0
      %772 = vmatpush1.xpose.msra.mxu0 0.0
      %773 = vmatprep.subr.mxu0 0.0
      %774 = vmatpush1.xpose.msra.mxu0 0.0
      %775 = vmatprep.subr.mxu0 0.0
      %776 = vmatpush1.xpose.msra.mxu0 0.0
      %777 = vmatprep.subr.mxu0 0.0
      %778 = vmatpush1.xpose.msra.mxu0 0.0
      %779 = vmatprep.subr.mxu0 0.0
      %780 = vmatpush1.xpose.msra.mxu0 0.0
      %781 = vmatprep.subr.mxu0 0.0
      %782 = vmatpush1.xpose.msra.mxu0 0.0
      %783 = vmatprep.subr.mxu0 0.0
      %784 = vmatpush1.xpose.msra.mxu0 0.0
      %785 = vmatprep.subr.mxu0 0.0
      %786 = vmatpush1.xpose.msra.mxu0 0.0
      %787 = vmatprep.subr.mxu0 0.0
      %788 = vmatpush1.xpose.msra.mxu0 0.0
      %789 = vmatprep.subr.mxu0 0.0
      %790 = vmatpush1.xpose.msra.mxu0 0.0
      %791 = vmatprep.subr.mxu0 0.0
      %792 = vmatpush1.xpose.msra.mxu0 0.0
      %793 = vmatprep.mubr.f32.mxu0 0.0
      %794 = vmatmul.mubr.f32.gmra.mrb[0].mxu0 %v205
      %v795 = vpop.f32.mrb[0].mxu0
      %v796 = vadd.f32 0.0, %v795
      %v797 = vpop.f32.mrb[0].mxu0
      %798 = vdwg.mxu0
      %v799 = vsub.f32 %v796, %v314
      %801 = vrot.lane.b32.xlu0 %v799, 64
      %v802 = vpop.permute.xlu0 %801
      %vm804 = vcmask 784896
      %805 = vst.msk [vmem:[%s204] sm:$0x7f] %vm804, %v802
      %v806 = vsel %vm713, %v312, 128
      %v807 = vsel %vm714, %v312, 128
      %v808 = vsel %vm715, %v312, 128
      %v809 = vsel %vm716, %v312, 128
      %v810 = vand.u32 %v806, 65535
      %v811 = vshra.s32 %v806, 16
      %v812 = vcvt.s32.f32 %v810
      %v813 = vcvt.s32.f32 %v811
      %814 = vmin.xlane.f32.xlu0 %v813
      %v815 = vpop.xlane.xlu0 %814
      %vm816 = vcmp.eq.f32.partialorder %v813, %v815
      %v817 = vsel %vm816, %v812, inf
      %818 = vmin.xlane.f32.xlu0 %v817
      %v819 = vpop.xlane.xlu0 %818
      %v820 = vcvt.f32.s32 %v819
      %v821 = vcvt.f32.s32 %v815
      %v822 = vshll.u32 %v821, 16
      %v823 = vadd.s32 %v822, %v820
      %v824 = vand.u32 %v807, 65535
      %v825 = vshra.s32 %v807, 16
      %v826 = vcvt.s32.f32 %v824
      %v827 = vcvt.s32.f32 %v825
      %828 = vmin.xlane.f32.xlu0 %v827
      %v829 = vpop.xlane.xlu0 %828
      %vm830 = vcmp.eq.f32.partialorder %v827, %v829
      %v831 = vsel %vm830, %v826, inf
      %832 = vmin.xlane.f32.xlu0 %v831
      %v833 = vpop.xlane.xlu0 %832
      %v834 = vcvt.f32.s32 %v833
      %v835 = vcvt.f32.s32 %v829
      %v836 = vshll.u32 %v835, 16
      %v837 = vadd.s32 %v836, %v834
      %v838 = vand.u32 %v808, 65535
      %v839 = vshra.s32 %v808, 16
      %v840 = vcvt.s32.f32 %v838
      %v841 = vcvt.s32.f32 %v839
      %842 = vmin.xlane.f32.xlu0 %v841
      %v843 = vpop.xlane.xlu0 %842
      %vm844 = vcmp.eq.f32.partialorder %v841, %v843
      %v845 = vsel %vm844, %v840, inf
      %846 = vmin.xlane.f32.xlu0 %v845
      %v847 = vpop.xlane.xlu0 %846
      %v848 = vcvt.f32.s32 %v847
      %v849 = vcvt.f32.s32 %v843
      %v850 = vshll.u32 %v849, 16
      %v851 = vadd.s32 %v850, %v848
      %v852 = vand.u32 %v809, 65535
      %v853 = vshra.s32 %v809, 16
      %v854 = vcvt.s32.f32 %v852
      %v855 = vcvt.s32.f32 %v853
      %856 = vmin.xlane.f32.xlu0 %v855
      %v857 = vpop.xlane.xlu0 %856
      %vm858 = vcmp.eq.f32.partialorder %v855, %v857
      %v859 = vsel %vm858, %v854, inf
      %860 = vmin.xlane.f32.xlu0 %v859
      %v861 = vpop.xlane.xlu0 %860
      %v862 = vcvt.f32.s32 %v861
      %v863 = vcvt.f32.s32 %v857
      %v864 = vshll.u32 %v863, 16
      %v865 = vadd.s32 %v864, %v862
      %vm866 = vcmp.lt.s32.totalorder %v823, 128
      %vm867 = vcmp.lt.s32.totalorder %v837, 128
      %vm868 = vcmp.lt.s32.totalorder %v851, 128
      %vm869 = vcmp.lt.s32.totalorder %v865, 128
      %v870 = vsel %vm866, %v823, %v379
      %v871 = vsel %vm867, %v837, %v380
      %v872 = vsel %vm868, %v851, %v381
      %v873 = vsel %vm869, %v865, %v382
      %vm874 = vcmp.ne.s32.totalorder %v312, %v823
      %vm875 = vcmp.ne.s32.totalorder %v312, %v837
      %vm876 = vcmp.ne.s32.totalorder %v312, %v851
      %vm877 = vcmp.ne.s32.totalorder %v312, %v865
      %vm878 = vmand %vm713, %vm874
      %vm879 = vmand %vm714, %vm875
      %vm880 = vmand %vm715, %vm876
      %vm881 = vmand %vm716, %vm877
      %vm882 = vcmp.eq.s32.totalorder %v312, %v870
      %vm883 = vcmp.eq.s32.totalorder %v312, %v871
      %vm884 = vcmp.eq.s32.totalorder %v312, %v872
      %vm885 = vcmp.eq.s32.totalorder %v312, %v873
      %v886 = vsel %vm882, 1, 0
      %v887 = vsel %vm883, 1, 0
      %v888 = vsel %vm884, 1, 0
      %v889 = vsel %vm885, 1, 0
      %v890 = vcvt.s32.f32 %v886
      %v891 = vcvt.s32.f32 %v887
      %v892 = vcvt.s32.f32 %v888
      %v893 = vcvt.s32.f32 %v889
      %894 = vmatprep.subr.mxu0 0.0
      %895 = vmatpush1.xpose.msra.mxu0 %v890
      %896 = vmatprep.subr.mxu0 0.0
      %897 = vmatpush1.xpose.msra.mxu0 %v891
      %898 = vmatprep.subr.mxu0 0.0
      %899 = vmatpush1.xpose.msra.mxu0 %v892
      %900 = vmatprep.subr.mxu0 0.0
      %901 = vmatpush1.xpose.msra.mxu0 %v893
      %902 = vmatprep.subr.mxu0 0.0
      %903 = vmatpush1.xpose.msra.mxu0 0.0
      %904 = vmatprep.subr.mxu0 0.0
      %905 = vmatpush1.xpose.msra.mxu0 0.0
      %906 = vmatprep.subr.mxu0 0.0
      %907 = vmatpush1.xpose.msra.mxu0 0.0
      %908 = vmatprep.subr.mxu0 0.0
      %909 = vmatpush1.xpose.msra.mxu0 0.0
      %910 = vmatprep.subr.mxu0 0.0
      %911 = vmatpush1.xpose.msra.mxu0 0.0
      %912 = vmatprep.subr.mxu0 0.0
      %913 = vmatpush1.xpose.msra.mxu0 0.0
      %914 = vmatprep.subr.mxu0 0.0
      %915 = vmatpush1.xpose.msra.mxu0 0.0
      %916 = vmatprep.subr.mxu0 0.0
      %917 = vmatpush1.xpose.msra.mxu0 0.0
      %918 = vmatprep.subr.mxu0 0.0
      %919 = vmatpush1.xpose.msra.mxu0 0.0
      %920 = vmatprep.subr.mxu0 0.0
      %921 = vmatpush1.xpose.msra.mxu0 0.0
      %922 = vmatprep.subr.mxu0 0.0
      %923 = vmatpush1.xpose.msra.mxu0 0.0
      %924 = vmatprep.subr.mxu0 0.0
      %925 = vmatpush1.xpose.msra.mxu0 0.0
      %926 = vmatprep.subr.mxu0 0.0
      %927 = vmatpush1.xpose.msra.mxu0 0.0
      %928 = vmatprep.subr.mxu0 0.0
      %929 = vmatpush1.xpose.msra.mxu0 0.0
      %930 = vmatprep.subr.mxu0 0.0
      %931 = vmatpush1.xpose.msra.mxu0 0.0
      %932 = vmatprep.subr.mxu0 0.0
      %933 = vmatpush1.xpose.msra.mxu0 0.0
      %934 = vmatprep.subr.mxu0 0.0
      %935 = vmatpush1.xpose.msra.mxu0 0.0
      %936 = vmatprep.subr.mxu0 0.0
      %937 = vmatpush1.xpose.msra.mxu0 0.0
      %938 = vmatprep.subr.mxu0 0.0
      %939 = vmatpush1.xpose.msra.mxu0 0.0
      %940 = vmatprep.subr.mxu0 0.0
      %941 = vmatpush1.xpose.msra.mxu0 0.0
      %942 = vmatprep.subr.mxu0 0.0
      %943 = vmatpush1.xpose.msra.mxu0 0.0
      %944 = vmatprep.subr.mxu0 0.0
      %945 = vmatpush1.xpose.msra.mxu0 0.0
      %946 = vmatprep.subr.mxu0 0.0
      %947 = vmatpush1.xpose.msra.mxu0 0.0
      %948 = vmatprep.subr.mxu0 0.0
      %949 = vmatpush1.xpose.msra.mxu0 0.0
      %950 = vmatprep.subr.mxu0 0.0
      %951 = vmatpush1.xpose.msra.mxu0 0.0
      %952 = vmatprep.subr.mxu0 0.0
      %953 = vmatpush1.xpose.msra.mxu0 0.0
      %954 = vmatprep.subr.mxu0 0.0
      %955 = vmatpush1.xpose.msra.mxu0 0.0
      %956 = vmatprep.subr.mxu0 0.0
      %957 = vmatpush1.xpose.msra.mxu0 0.0
      %958 = vmatprep.mubr.f32.mxu0 0.0
      %959 = vmatmul.mubr.f32.gmra.mrb[0].mxu0 %v205
      %v960 = vpop.f32.mrb[0].mxu0
      %v961 = vadd.f32 0.0, %v960
      %v962 = vpop.f32.mrb[0].mxu0
      %963 = vdwg.mxu0
      %v964 = vsub.f32 %v961, %v314
      %966 = vrot.lane.b32.xlu0 %v964, 96
      %v967 = vpop.permute.xlu0 %966
      %vm969 = vcmask 1047296
      %970 = vst.msk [vmem:[%s204] sm:$0x7f] %vm969, %v967
      %v971 = vsel %vm878, %v312, 128
      %v972 = vsel %vm879, %v312, 128
      %v973 = vsel %vm880, %v312, 128
      %v974 = vsel %vm881, %v312, 128
      %v975 = vand.u32 %v971, 65535
      %v976 = vshra.s32 %v971, 16
      %v977 = vcvt.s32.f32 %v975
      %v978 = vcvt.s32.f32 %v976
      %979 = vmin.xlane.f32.xlu0 %v978
      %v980 = vpop.xlane.xlu0 %979
      %vm981 = vcmp.eq.f32.partialorder %v978, %v980
      %v982 = vsel %vm981, %v977, inf
      %983 = vmin.xlane.f32.xlu0 %v982
      %v984 = vpop.xlane.xlu0 %983
      %v985 = vcvt.f32.s32 %v984
      %v986 = vcvt.f32.s32 %v980
      %v987 = vshll.u32 %v986, 16
      %v988 = vadd.s32 %v987, %v985
      %v989 = vand.u32 %v972, 65535
      %v990 = vshra.s32 %v972, 16
      %v991 = vcvt.s32.f32 %v989
      %v992 = vcvt.s32.f32 %v990
      %993 = vmin.xlane.f32.xlu0 %v992
      %v994 = vpop.xlane.xlu0 %993
      %vm995 = vcmp.eq.f32.partialorder %v992, %v994
      %v996 = vsel %vm995, %v991, inf
      %997 = vmin.xlane.f32.xlu0 %v996
      %v998 = vpop.xlane.xlu0 %997
      %v999 = vcvt.f32.s32 %v998
      %v1000 = vcvt.f32.s32 %v994
      %v1001 = vshll.u32 %v1000, 16
      %v1002 = vadd.s32 %v1001, %v999
      %v1003 = vand.u32 %v973, 65535
      %v1004 = vshra.s32 %v973, 16
      %v1005 = vcvt.s32.f32 %v1003
      %v1006 = vcvt.s32.f32 %v1004
      %1007 = vmin.xlane.f32.xlu0 %v1006
      %v1008 = vpop.xlane.xlu0 %1007
      %vm1009 = vcmp.eq.f32.partialorder %v1006, %v1008
      %v1010 = vsel %vm1009, %v1005, inf
      %1011 = vmin.xlane.f32.xlu0 %v1010
      %v1012 = vpop.xlane.xlu0 %1011
      %v1013 = vcvt.f32.s32 %v1012
      %v1014 = vcvt.f32.s32 %v1008
      %v1015 = vshll.u32 %v1014, 16
      %v1016 = vadd.s32 %v1015, %v1013
      %v1017 = vand.u32 %v974, 65535
      %v1018 = vshra.s32 %v974, 16
      %v1019 = vcvt.s32.f32 %v1017
      %v1020 = vcvt.s32.f32 %v1018
      %1021 = vmin.xlane.f32.xlu0 %v1020
      %v1022 = vpop.xlane.xlu0 %1021
      %vm1023 = vcmp.eq.f32.partialorder %v1020, %v1022
      %v1024 = vsel %vm1023, %v1019, inf
      %1025 = vmin.xlane.f32.xlu0 %v1024
      %v1026 = vpop.xlane.xlu0 %1025
      %v1027 = vcvt.f32.s32 %v1026
      %v1028 = vcvt.f32.s32 %v1022
      %v1029 = vshll.u32 %v1028, 16
      %v1030 = vadd.s32 %v1029, %v1027
      %vm1031 = vcmp.lt.s32.totalorder %v988, 128
      %vm1032 = vcmp.lt.s32.totalorder %v1002, 128
      %vm1033 = vcmp.lt.s32.totalorder %v1016, 128
      %vm1034 = vcmp.lt.s32.totalorder %v1030, 128
      %v1035 = vsel %vm1031, %v988, %v379
      %v1036 = vsel %vm1032, %v1002, %v380
      %v1037 = vsel %vm1033, %v1016, %v381
      %v1038 = vsel %vm1034, %v1030, %v382
      %vm1039 = vcmp.ne.s32.totalorder %v312, %v988
      %vm1040 = vcmp.ne.s32.totalorder %v312, %v1002
      %vm1041 = vcmp.ne.s32.totalorder %v312, %v1016
      %vm1042 = vcmp.ne.s32.totalorder %v312, %v1030
      %vm1043 = vmand %vm878, %vm1039
      %vm1044 = vmand %vm879, %vm1040
      %vm1045 = vmand %vm880, %vm1041
      %vm1046 = vmand %vm881, %vm1042
      %vm1047 = vcmp.eq.s32.totalorder %v312, %v1035
      %vm1048 = vcmp.eq.s32.totalorder %v312, %v1036
      %vm1049 = vcmp.eq.s32.totalorder %v312, %v1037
      %vm1050 = vcmp.eq.s32.totalorder %v312, %v1038
      %v1051 = vsel %vm1047, 1, 0
      %v1052 = vsel %vm1048, 1, 0
      %v1053 = vsel %vm1049, 1, 0
      %v1054 = vsel %vm1050, 1, 0
      %v1055 = vcvt.s32.f32 %v1051
      %v1056 = vcvt.s32.f32 %v1052
      %v1057 = vcvt.s32.f32 %v1053
      %v1058 = vcvt.s32.f32 %v1054
      %1059 = vmatprep.subr.mxu0 0.0
      %1060 = vmatpush1.xpose.msra.mxu0 %v1055
      %1061 = vmatprep.subr.mxu0 0.0
      %1062 = vmatpush1.xpose.msra.mxu0 %v1056
      %1063 = vmatprep.subr.mxu0 0.0
      %1064 = vmatpush1.xpose.msra.mxu0 %v1057
      %1065 = vmatprep.subr.mxu0 0.0
      %1066 = vmatpush1.xpose.msra.mxu0 %v1058
      %1067 = vmatprep.subr.mxu0 0.0
      %1068 = vmatpush1.xpose.msra.mxu0 0.0
      %1069 = vmatprep.subr.mxu0 0.0
      %1070 = vmatpush1.xpose.msra.mxu0 0.0
      %1071 = vmatprep.subr.mxu0 0.0
      %1072 = vmatpush1.xpose.msra.mxu0 0.0
      %1073 = vmatprep.subr.mxu0 0.0
      %1074 = vmatpush1.xpose.msra.mxu0 0.0
      %1075 = vmatprep.subr.mxu0 0.0
      %1076 = vmatpush1.xpose.msra.mxu0 0.0
      %1077 = vmatprep.subr.mxu0 0.0
      %1078 = vmatpush1.xpose.msra.mxu0 0.0
      %1079 = vmatprep.subr.mxu0 0.0
      %1080 = vmatpush1.xpose.msra.mxu0 0.0
      %1081 = vmatprep.subr.mxu0 0.0
      %1082 = vmatpush1.xpose.msra.mxu0 0.0
      %1083 = vmatprep.subr.mxu0 0.0
      %1084 = vmatpush1.xpose.msra.mxu0 0.0
      %1085 = vmatprep.subr.mxu0 0.0
      %1086 = vmatpush1.xpose.msra.mxu0 0.0
      %1087 = vmatprep.subr.mxu0 0.0
      %1088 = vmatpush1.xpose.msra.mxu0 0.0
      %1089 = vmatprep.subr.mxu0 0.0
      %1090 = vmatpush1.xpose.msra.mxu0 0.0
      %1091 = vmatprep.subr.mxu0 0.0
      %1092 = vmatpush1.xpose.msra.mxu0 0.0
      %1093 = vmatprep.subr.mxu0 0.0
      %1094 = vmatpush1.xpose.msra.mxu0 0.0
      %1095 = vmatprep.subr.mxu0 0.0
      %1096 = vmatpush1.xpose.msra.mxu0 0.0
      %1097 = vmatprep.subr.mxu0 0.0
      %1098 = vmatpush1.xpose.msra.mxu0 0.0
      %1099 = vmatprep.subr.mxu0 0.0
      %1100 = vmatpush1.xpose.msra.mxu0 0.0
      %1101 = vmatprep.subr.mxu0 0.0
      %1102 = vmatpush1.xpose.msra.mxu0 0.0
      %1103 = vmatprep.subr.mxu0 0.0
      %1104 = vmatpush1.xpose.msra.mxu0 0.0
      %1105 = vmatprep.subr.mxu0 0.0
      %1106 = vmatpush1.xpose.msra.mxu0 0.0
      %1107 = vmatprep.subr.mxu0 0.0
      %1108 = vmatpush1.xpose.msra.mxu0 0.0
      %1109 = vmatprep.subr.mxu0 0.0
      %1110 = vmatpush1.xpose.msra.mxu0 0.0
      %1111 = vmatprep.subr.mxu0 0.0
      %1112 = vmatpush1.xpose.msra.mxu0 0.0
      %1113 = vmatprep.subr.mxu0 0.0
      %1114 = vmatpush1.xpose.msra.mxu0 0.0
      %1115 = vmatprep.subr.mxu0 0.0
      %1116 = vmatpush1.xpose.msra.mxu0 0.0
      %1117 = vmatprep.subr.mxu0 0.0
      %1118 = vmatpush1.xpose.msra.mxu0 0.0
      %1119 = vmatprep.subr.mxu0 0.0
      %1120 = vmatpush1.xpose.msra.mxu0 0.0
      %1121 = vmatprep.subr.mxu0 0.0
      %1122 = vmatpush1.xpose.msra.mxu0 0.0
      %1123 = vmatprep.mubr.f32.mxu0 0.0
      %1124 = vmatmul.mubr.f32.gmra.mrb[0].mxu0 %v205
      %v1125 = vpop.f32.mrb[0].mxu0
      %v1126 = vadd.f32 0.0, %v1125
      %v1127 = vpop.f32.mrb[0].mxu0
      %1128 = vdwg.mxu0
      %v1129 = vsub.f32 %v1126, %v314
      %1130 = vst.msk [vmem:[%s204 + $0x8] sm:$0x7f] %vm474, %v1129
      %v1131 = vsel %vm1043, %v312, 128
      %v1132 = vsel %vm1044, %v312, 128
      %v1133 = vsel %vm1045, %v312, 128
      %v1134 = vsel %vm1046, %v312, 128
      %v1135 = vand.u32 %v1131, 65535
      %v1136 = vshra.s32 %v1131, 16
      %v1137 = vcvt.s32.f32 %v1135
      %v1138 = vcvt.s32.f32 %v1136
      %1139 = vmin.xlane.f32.xlu0 %v1138
      %v1140 = vpop.xlane.xlu0 %1139
      %vm1141 = vcmp.eq.f32.partialorder %v1138, %v1140
      %v1142 = vsel %vm1141, %v1137, inf
      %1143 = vmin.xlane.f32.xlu0 %v1142
      %v1144 = vpop.xlane.xlu0 %1143
      %v1145 = vcvt.f32.s32 %v1144
      %v1146 = vcvt.f32.s32 %v1140
      %v1147 = vshll.u32 %v1146, 16
      %v1148 = vadd.s32 %v1147, %v1145
      %v1149 = vand.u32 %v1132, 65535
      %v1150 = vshra.s32 %v1132, 16
      %v1151 = vcvt.s32.f32 %v1149
      %v1152 = vcvt.s32.f32 %v1150
      %1153 = vmin.xlane.f32.xlu0 %v1152
      %v1154 = vpop.xlane.xlu0 %1153
      %vm1155 = vcmp.eq.f32.partialorder %v1152, %v1154
      %v1156 = vsel %vm1155, %v1151, inf
      %1157 = vmin.xlane.f32.xlu0 %v1156
      %v1158 = vpop.xlane.xlu0 %1157
      %v1159 = vcvt.f32.s32 %v1158
      %v1160 = vcvt.f32.s32 %v1154
      %v1161 = vshll.u32 %v1160, 16
      %v1162 = vadd.s32 %v1161, %v1159
      %v1163 = vand.u32 %v1133, 65535
      %v1164 = vshra.s32 %v1133, 16
      %v1165 = vcvt.s32.f32 %v1163
      %v1166 = vcvt.s32.f32 %v1164
      %1167 = vmin.xlane.f32.xlu0 %v1166
      %v1168 = vpop.xlane.xlu0 %1167
      %vm1169 = vcmp.eq.f32.partialorder %v1166, %v1168
      %v1170 = vsel %vm1169, %v1165, inf
      %1171 = vmin.xlane.f32.xlu0 %v1170
      %v1172 = vpop.xlane.xlu0 %1171
      %v1173 = vcvt.f32.s32 %v1172
      %v1174 = vcvt.f32.s32 %v1168
      %v1175 = vshll.u32 %v1174, 16
      %v1176 = vadd.s32 %v1175, %v1173
      %v1177 = vand.u32 %v1134, 65535
      %v1178 = vshra.s32 %v1134, 16
      %v1179 = vcvt.s32.f32 %v1177
      %v1180 = vcvt.s32.f32 %v1178
      %1181 = vmin.xlane.f32.xlu0 %v1180
      %v1182 = vpop.xlane.xlu0 %1181
      %vm1183 = vcmp.eq.f32.partialorder %v1180, %v1182
      %v1184 = vsel %vm1183, %v1179, inf
      %1185 = vmin.xlane.f32.xlu0 %v1184
      %v1186 = vpop.xlane.xlu0 %1185
      %v1187 = vcvt.f32.s32 %v1186
      %v1188 = vcvt.f32.s32 %v1182
      %v1189 = vshll.u32 %v1188, 16
      %v1190 = vadd.s32 %v1189, %v1187
      %vm1191 = vcmp.lt.s32.totalorder %v1148, 128
      %vm1192 = vcmp.lt.s32.totalorder %v1162, 128
      %vm1193 = vcmp.lt.s32.totalorder %v1176, 128
      %vm1194 = vcmp.lt.s32.totalorder %v1190, 128
      %v1195 = vsel %vm1191, %v1148, %v379
      %v1196 = vsel %vm1192, %v1162, %v380
      %v1197 = vsel %vm1193, %v1176, %v381
      %v1198 = vsel %vm1194, %v1190, %v382
      %vm1199 = vcmp.ne.s32.totalorder %v312, %v1148
      %vm1200 = vcmp.ne.s32.totalorder %v312, %v1162
      %vm1201 = vcmp.ne.s32.totalorder %v312, %v1176
      %vm1202 = vcmp.ne.s32.totalorder %v312, %v1190
      %vm1203 = vmand %vm1043, %vm1199
      %vm1204 = vmand %vm1044, %vm1200
      %vm1205 = vmand %vm1045, %vm1201
      %vm1206 = vmand %vm1046, %vm1202
      %vm1207 = vcmp.eq.s32.totalorder %v312, %v1195
      %vm1208 = vcmp.eq.s32.totalorder %v312, %v1196
      %vm1209 = vcmp.eq.s32.totalorder %v312, %v1197
      %vm1210 = vcmp.eq.s32.totalorder %v312, %v1198
      %v1211 = vsel %vm1207, 1, 0
      %v1212 = vsel %vm1208, 1, 0
      %v1213 = vsel %vm1209, 1, 0
      %v1214 = vsel %vm1210, 1, 0
      %v1215 = vcvt.s32.f32 %v1211
      %v1216 = vcvt.s32.f32 %v1212
      %v1217 = vcvt.s32.f32 %v1213
      %v1218 = vcvt.s32.f32 %v1214
      %1219 = vmatprep.subr.mxu0 0.0
      %1220 = vmatpush1.xpose.msra.mxu0 %v1215
      %1221 = vmatprep.subr.mxu0 0.0
      %1222 = vmatpush1.xpose.msra.mxu0 %v1216
      %1223 = vmatprep.subr.mxu0 0.0
      %1224 = vmatpush1.xpose.msra.mxu0 %v1217
      %1225 = vmatprep.subr.mxu0 0.0
      %1226 = vmatpush1.xpose.msra.mxu0 %v1218
      %1227 = vmatprep.subr.mxu0 0.0
      %1228 = vmatpush1.xpose.msra.mxu0 0.0
      %1229 = vmatprep.subr.mxu0 0.0
      %1230 = vmatpush1.xpose.msra.mxu0 0.0
      %1231 = vmatprep.subr.mxu0 0.0
      %1232 = vmatpush1.xpose.msra.mxu0 0.0
      %1233 = vmatprep.subr.mxu0 0.0
      %1234 = vmatpush1.xpose.msra.mxu0 0.0
      %1235 = vmatprep.subr.mxu0 0.0
      %1236 = vmatpush1.xpose.msra.mxu0 0.0
      %1237 = vmatprep.subr.mxu0 0.0
      %1238 = vmatpush1.xpose.msra.mxu0 0.0
      %1239 = vmatprep.subr.mxu0 0.0
      %1240 = vmatpush1.xpose.msra.mxu0 0.0
      %1241 = vmatprep.subr.mxu0 0.0
      %1242 = vmatpush1.xpose.msra.mxu0 0.0
      %1243 = vmatprep.subr.mxu0 0.0
      %1244 = vmatpush1.xpose.msra.mxu0 0.0
      %1245 = vmatprep.subr.mxu0 0.0
      %1246 = vmatpush1.xpose.msra.mxu0 0.0
      %1247 = vmatprep.subr.mxu0 0.0
      %1248 = vmatpush1.xpose.msra.mxu0 0.0
      %1249 = vmatprep.subr.mxu0 0.0
      %1250 = vmatpush1.xpose.msra.mxu0 0.0
      %1251 = vmatprep.subr.mxu0 0.0
      %1252 = vmatpush1.xpose.msra.mxu0 0.0
      %1253 = vmatprep.subr.mxu0 0.0
      %1254 = vmatpush1.xpose.msra.mxu0 0.0
      %1255 = vmatprep.subr.mxu0 0.0
      %1256 = vmatpush1.xpose.msra.mxu0 0.0
      %1257 = vmatprep.subr.mxu0 0.0
      %1258 = vmatpush1.xpose.msra.mxu0 0.0
      %1259 = vmatprep.subr.mxu0 0.0
      %1260 = vmatpush1.xpose.msra.mxu0 0.0
      %1261 = vmatprep.subr.mxu0 0.0
      %1262 = vmatpush1.xpose.msra.mxu0 0.0
      %1263 = vmatprep.subr.mxu0 0.0
      %1264 = vmatpush1.xpose.msra.mxu0 0.0
      %1265 = vmatprep.subr.mxu0 0.0
      %1266 = vmatpush1.xpose.msra.mxu0 0.0
      %1267 = vmatprep.subr.mxu0 0.0
      %1268 = vmatpush1.xpose.msra.mxu0 0.0
      %1269 = vmatprep.subr.mxu0 0.0
      %1270 = vmatpush1.xpose.msra.mxu0 0.0
      %1271 = vmatprep.subr.mxu0 0.0
      %1272 = vmatpush1.xpose.msra.mxu0 0.0
      %1273 = vmatprep.subr.mxu0 0.0
      %1274 = vmatpush1.xpose.msra.mxu0 0.0
      %1275 = vmatprep.subr.mxu0 0.0
      %1276 = vmatpush1.xpose.msra.mxu0 0.0
      %1277 = vmatprep.subr.mxu0 0.0
      %1278 = vmatpush1.xpose.msra.mxu0 0.0
      %1279 = vmatprep.subr.mxu0 0.0
      %1280 = vmatpush1.xpose.msra.mxu0 0.0
      %1281 = vmatprep.subr.mxu0 0.0
      %1282 = vmatpush1.xpose.msra.mxu0 0.0
      %1283 = vmatprep.mubr.f32.mxu0 0.0
      %1284 = vmatmul.mubr.f32.gmra.mrb[0].mxu0 %v205
      %v1285 = vpop.f32.mrb[0].mxu0
      %v1286 = vadd.f32 0.0, %v1285
      %v1287 = vpop.f32.mrb[0].mxu0
      %1288 = vdwg.mxu0
      %v1289 = vsub.f32 %v1286, %v314
      %1291 = vrot.lane.b32.xlu0 %v1289, 32
      %v1292 = vpop.permute.xlu0 %1291
      %1294 = vst.msk [vmem:[%s204 + $0x8] sm:$0x7f] %vm639, %v1292
      %v1295 = vsel %vm1203, %v312, 128
      %v1296 = vsel %vm1204, %v312, 128
      %v1297 = vsel %vm1205, %v312, 128
      %v1298 = vsel %vm1206, %v312, 128
      %v1299 = vand.u32 %v1295, 65535
      %v1300 = vshra.s32 %v1295, 16
      %v1301 = vcvt.s32.f32 %v1299
      %v1302 = vcvt.s32.f32 %v1300
      %1303 = vmin.xlane.f32.xlu0 %v1302
      %v1304 = vpop.xlane.xlu0 %1303
      %vm1305 = vcmp.eq.f32.partialorder %v1302, %v1304
      %v1306 = vsel %vm1305, %v1301, inf
      %1307 = vmin.xlane.f32.xlu0 %v1306
      %v1308 = vpop.xlane.xlu0 %1307
      %v1309 = vcvt.f32.s32 %v1308
      %v1310 = vcvt.f32.s32 %v1304
      %v1311 = vshll.u32 %v1310, 16
      %v1312 = vadd.s32 %v1311, %v1309
      %v1313 = vand.u32 %v1296, 65535
      %v1314 = vshra.s32 %v1296, 16
      %v1315 = vcvt.s32.f32 %v1313
      %v1316 = vcvt.s32.f32 %v1314
      %1317 = vmin.xlane.f32.xlu0 %v1316
      %v1318 = vpop.xlane.xlu0 %1317
      %vm1319 = vcmp.eq.f32.partialorder %v1316, %v1318
      %v1320 = vsel %vm1319, %v1315, inf
      %1321 = vmin.xlane.f32.xlu0 %v1320
      %v1322 = vpop.xlane.xlu0 %1321
      %v1323 = vcvt.f32.s32 %v1322
      %v1324 = vcvt.f32.s32 %v1318
      %v1325 = vshll.u32 %v1324, 16
      %v1326 = vadd.s32 %v1325, %v1323
      %v1327 = vand.u32 %v1297, 65535
      %v1328 = vshra.s32 %v1297, 16
      %v1329 = vcvt.s32.f32 %v1327
      %v1330 = vcvt.s32.f32 %v1328
      %1331 = vmin.xlane.f32.xlu0 %v1330
      %v1332 = vpop.xlane.xlu0 %1331
      %vm1333 = vcmp.eq.f32.partialorder %v1330, %v1332
      %v1334 = vsel %vm1333, %v1329, inf
      %1335 = vmin.xlane.f32.xlu0 %v1334
      %v1336 = vpop.xlane.xlu0 %1335
      %v1337 = vcvt.f32.s32 %v1336
      %v1338 = vcvt.f32.s32 %v1332
      %v1339 = vshll.u32 %v1338, 16
      %v1340 = vadd.s32 %v1339, %v1337
      %v1341 = vand.u32 %v1298, 65535
      %v1342 = vshra.s32 %v1298, 16
      %v1343 = vcvt.s32.f32 %v1341
      %v1344 = vcvt.s32.f32 %v1342
      %1345 = vmin.xlane.f32.xlu0 %v1344
      %v1346 = vpop.xlane.xlu0 %1345
      %vm1347 = vcmp.eq.f32.partialorder %v1344, %v1346
      %v1348 = vsel %vm1347, %v1343, inf
      %1349 = vmin.xlane.f32.xlu0 %v1348
      %v1350 = vpop.xlane.xlu0 %1349
      %v1351 = vcvt.f32.s32 %v1350
      %v1352 = vcvt.f32.s32 %v1346
      %v1353 = vshll.u32 %v1352, 16
      %v1354 = vadd.s32 %v1353, %v1351
      %vm1355 = vcmp.lt.s32.totalorder %v1312, 128
      %vm1356 = vcmp.lt.s32.totalorder %v1326, 128
      %vm1357 = vcmp.lt.s32.totalorder %v1340, 128
      %vm1358 = vcmp.lt.s32.totalorder %v1354, 128
      %v1359 = vsel %vm1355, %v1312, %v379
      %v1360 = vsel %vm1356, %v1326, %v380
      %v1361 = vsel %vm1357, %v1340, %v381
      %v1362 = vsel %vm1358, %v1354, %v382
      %vm1363 = vcmp.ne.s32.totalorder %v312, %v1312
      %vm1364 = vcmp.ne.s32.totalorder %v312, %v1326
      %vm1365 = vcmp.ne.s32.totalorder %v312, %v1340
      %vm1366 = vcmp.ne.s32.totalorder %v312, %v1354
      %vm1367 = vmand %vm1203, %vm1363
      %vm1368 = vmand %vm1204, %vm1364
      %vm1369 = vmand %vm1205, %vm1365
      %vm1370 = vmand %vm1206, %vm1366
      %vm1371 = vcmp.eq.s32.totalorder %v312, %v1359
      %vm1372 = vcmp.eq.s32.totalorder %v312, %v1360
      %vm1373 = vcmp.eq.s32.totalorder %v312, %v1361
      %vm1374 = vcmp.eq.s32.totalorder %v312, %v1362
      %v1375 = vsel %vm1371, 1, 0
      %v1376 = vsel %vm1372, 1, 0
      %v1377 = vsel %vm1373, 1, 0
      %v1378 = vsel %vm1374, 1, 0
      %v1379 = vcvt.s32.f32 %v1375
      %v1380 = vcvt.s32.f32 %v1376
      %v1381 = vcvt.s32.f32 %v1377
      %v1382 = vcvt.s32.f32 %v1378
      %1383 = vmatprep.subr.mxu0 0.0
      %1384 = vmatpush1.xpose.msra.mxu0 %v1379
      %1385 = vmatprep.subr.mxu0 0.0
      %1386 = vmatpush1.xpose.msra.mxu0 %v1380
      %1387 = vmatprep.subr.mxu0 0.0
      %1388 = vmatpush1.xpose.msra.mxu0 %v1381
      %1389 = vmatprep.subr.mxu0 0.0
      %1390 = vmatpush1.xpose.msra.mxu0 %v1382
      %1391 = vmatprep.subr.mxu0 0.0
      %1392 = vmatpush1.xpose.msra.mxu0 0.0
      %1393 = vmatprep.subr.mxu0 0.0
      %1394 = vmatpush1.xpose.msra.mxu0 0.0
      %1395 = vmatprep.subr.mxu0 0.0
      %1396 = vmatpush1.xpose.msra.mxu0 0.0
      %1397 = vmatprep.subr.mxu0 0.0
      %1398 = vmatpush1.xpose.msra.mxu0 0.0
      %1399 = vmatprep.subr.mxu0 0.0
      %1400 = vmatpush1.xpose.msra.mxu0 0.0
      %1401 = vmatprep.subr.mxu0 0.0
      %1402 = vmatpush1.xpose.msra.mxu0 0.0
      %1403 = vmatprep.subr.mxu0 0.0
      %1404 = vmatpush1.xpose.msra.mxu0 0.0
      %1405 = vmatprep.subr.mxu0 0.0
      %1406 = vmatpush1.xpose.msra.mxu0 0.0
      %1407 = vmatprep.subr.mxu0 0.0
      %1408 = vmatpush1.xpose.msra.mxu0 0.0
      %1409 = vmatprep.subr.mxu0 0.0
      %1410 = vmatpush1.xpose.msra.mxu0 0.0
      %1411 = vmatprep.subr.mxu0 0.0
      %1412 = vmatpush1.xpose.msra.mxu0 0.0
      %1413 = vmatprep.subr.mxu0 0.0
      %1414 = vmatpush1.xpose.msra.mxu0 0.0
      %1415 = vmatprep.subr.mxu0 0.0
      %1416 = vmatpush1.xpose.msra.mxu0 0.0
      %1417 = vmatprep.subr.mxu0 0.0
      %1418 = vmatpush1.xpose.msra.mxu0 0.0
      %1419 = vmatprep.subr.mxu0 0.0
      %1420 = vmatpush1.xpose.msra.mxu0 0.0
      %1421 = vmatprep.subr.mxu0 0.0
      %1422 = vmatpush1.xpose.msra.mxu0 0.0
      %1423 = vmatprep.subr.mxu0 0.0
      %1424 = vmatpush1.xpose.msra.mxu0 0.0
      %1425 = vmatprep.subr.mxu0 0.0
      %1426 = vmatpush1.xpose.msra.mxu0 0.0
      %1427 = vmatprep.subr.mxu0 0.0
      %1428 = vmatpush1.xpose.msra.mxu0 0.0
      %1429 = vmatprep.subr.mxu0 0.0
      %1430 = vmatpush1.xpose.msra.mxu0 0.0
      %1431 = vmatprep.subr.mxu0 0.0
      %1432 = vmatpush1.xpose.msra.mxu0 0.0
      %1433 = vmatprep.subr.mxu0 0.0
      %1434 = vmatpush1.xpose.msra.mxu0 0.0
      %1435 = vmatprep.subr.mxu0 0.0
      %1436 = vmatpush1.xpose.msra.mxu0 0.0
      %1437 = vmatprep.subr.mxu0 0.0
      %1438 = vmatpush1.xpose.msra.mxu0 0.0
      %1439 = vmatprep.subr.mxu0 0.0
      %1440 = vmatpush1.xpose.msra.mxu0 0.0
      %1441 = vmatprep.subr.mxu0 0.0
      %1442 = vmatpush1.xpose.msra.mxu0 0.0
      %1443 = vmatprep.subr.mxu0 0.0
      %1444 = vmatpush1.xpose.msra.mxu0 0.0
      %1445 = vmatprep.subr.mxu0 0.0
      %1446 = vmatpush1.xpose.msra.mxu0 0.0
      %1447 = vmatprep.mubr.f32.mxu0 0.0
      %1448 = vmatmul.mubr.f32.gmra.mrb[0].mxu0 %v205
      %v1449 = vpop.f32.mrb[0].mxu0
      %v1450 = vadd.f32 0.0, %v1449
      %v1451 = vpop.f32.mrb[0].mxu0
      %1452 = vdwg.mxu0
      %v1453 = vsub.f32 %v1450, %v314
      %1455 = vrot.lane.b32.xlu0 %v1453, 64
      %v1456 = vpop.permute.xlu0 %1455
      %1458 = vst.msk [vmem:[%s204 + $0x8] sm:$0x7f] %vm804, %v1456
      %v1459 = vsel %vm1367, %v312, 128
      %v1460 = vsel %vm1368, %v312, 128
      %v1461 = vsel %vm1369, %v312, 128
      %v1462 = vsel %vm1370, %v312, 128
      %v1463 = vand.u32 %v1459, 65535
      %v1464 = vshra.s32 %v1459, 16
      %v1465 = vcvt.s32.f32 %v1463
      %v1466 = vcvt.s32.f32 %v1464
      %1467 = vmin.xlane.f32.xlu0 %v1466
      %v1468 = vpop.xlane.xlu0 %1467
      %vm1469 = vcmp.eq.f32.partialorder %v1466, %v1468
      %v1470 = vsel %vm1469, %v1465, inf
      %1471 = vmin.xlane.f32.xlu0 %v1470
      %v1472 = vpop.xlane.xlu0 %1471
      %v1473 = vcvt.f32.s32 %v1472
      %v1474 = vcvt.f32.s32 %v1468
      %v1475 = vshll.u32 %v1474, 16
      %v1476 = vadd.s32 %v1475, %v1473
      %v1477 = vand.u32 %v1460, 65535
      %v1478 = vshra.s32 %v1460, 16
      %v1479 = vcvt.s32.f32 %v1477
      %v1480 = vcvt.s32.f32 %v1478
      %1481 = vmin.xlane.f32.xlu0 %v1480
      %v1482 = vpop.xlane.xlu0 %1481
      %vm1483 = vcmp.eq.f32.partialorder %v1480, %v1482
      %v1484 = vsel %vm1483, %v1479, inf
      %1485 = vmin.xlane.f32.xlu0 %v1484
      %v1486 = vpop.xlane.xlu0 %1485
      %v1487 = vcvt.f32.s32 %v1486
      %v1488 = vcvt.f32.s32 %v1482
      %v1489 = vshll.u32 %v1488, 16
      %v1490 = vadd.s32 %v1489, %v1487
      %v1491 = vand.u32 %v1461, 65535
      %v1492 = vshra.s32 %v1461, 16
      %v1493 = vcvt.s32.f32 %v1491
      %v1494 = vcvt.s32.f32 %v1492
      %1495 = vmin.xlane.f32.xlu0 %v1494
      %v1496 = vpop.xlane.xlu0 %1495
      %vm1497 = vcmp.eq.f32.partialorder %v1494, %v1496
      %v1498 = vsel %vm1497, %v1493, inf
      %1499 = vmin.xlane.f32.xlu0 %v1498
      %v1500 = vpop.xlane.xlu0 %1499
      %v1501 = vcvt.f32.s32 %v1500
      %v1502 = vcvt.f32.s32 %v1496
      %v1503 = vshll.u32 %v1502, 16
      %v1504 = vadd.s32 %v1503, %v1501
      %v1505 = vand.u32 %v1462, 65535
      %v1506 = vshra.s32 %v1462, 16
      %v1507 = vcvt.s32.f32 %v1505
      %v1508 = vcvt.s32.f32 %v1506
      %1509 = vmin.xlane.f32.xlu0 %v1508
      %v1510 = vpop.xlane.xlu0 %1509
      %vm1511 = vcmp.eq.f32.partialorder %v1508, %v1510
      %v1512 = vsel %vm1511, %v1507, inf
      %1513 = vmin.xlane.f32.xlu0 %v1512
      %v1514 = vpop.xlane.xlu0 %1513
      %v1515 = vcvt.f32.s32 %v1514
      %v1516 = vcvt.f32.s32 %v1510
      %v1517 = vshll.u32 %v1516, 16
      %v1518 = vadd.s32 %v1517, %v1515
      %vm1519 = vcmp.lt.s32.totalorder %v1476, 128
      %vm1520 = vcmp.lt.s32.totalorder %v1490, 128
      %vm1521 = vcmp.lt.s32.totalorder %v1504, 128
      %vm1522 = vcmp.lt.s32.totalorder %v1518, 128
      %v1523 = vsel %vm1519, %v1476, %v379
      %v1524 = vsel %vm1520, %v1490, %v380
      %v1525 = vsel %vm1521, %v1504, %v381
      %v1526 = vsel %vm1522, %v1518, %v382
      %vm1527 = vcmp.ne.s32.totalorder %v312, %v1476
      %vm1528 = vcmp.ne.s32.totalorder %v312, %v1490
      %vm1529 = vcmp.ne.s32.totalorder %v312, %v1504
      %vm1530 = vcmp.ne.s32.totalorder %v312, %v1518
      %vm1531 = vmand %vm1367, %vm1527
      %vm1532 = vmand %vm1368, %vm1528
      %vm1533 = vmand %vm1369, %vm1529
      %vm1534 = vmand %vm1370, %vm1530
      %vm1535 = vcmp.eq.s32.totalorder %v312, %v1523
      %vm1536 = vcmp.eq.s32.totalorder %v312, %v1524
      %vm1537 = vcmp.eq.s32.totalorder %v312, %v1525
      %vm1538 = vcmp.eq.s32.totalorder %v312, %v1526
      %v1539 = vsel %vm1535, 1, 0
      %v1540 = vsel %vm1536, 1, 0
      %v1541 = vsel %vm1537, 1, 0
      %v1542 = vsel %vm1538, 1, 0
      %v1543 = vcvt.s32.f32 %v1539
      %v1544 = vcvt.s32.f32 %v1540
      %v1545 = vcvt.s32.f32 %v1541
      %v1546 = vcvt.s32.f32 %v1542
      %1547 = vmatprep.subr.mxu0 0.0
      %1548 = vmatpush1.xpose.msra.mxu0 %v1543
      %1549 = vmatprep.subr.mxu0 0.0
      %1550 = vmatpush1.xpose.msra.mxu0 %v1544
      %1551 = vmatprep.subr.mxu0 0.0
      %1552 = vmatpush1.xpose.msra.mxu0 %v1545
      %1553 = vmatprep.subr.mxu0 0.0
      %1554 = vmatpush1.xpose.msra.mxu0 %v1546
      %1555 = vmatprep.subr.mxu0 0.0
      %1556 = vmatpush1.xpose.msra.mxu0 0.0
      %1557 = vmatprep.subr.mxu0 0.0
      %1558 = vmatpush1.xpose.msra.mxu0 0.0
      %1559 = vmatprep.subr.mxu0 0.0
      %1560 = vmatpush1.xpose.msra.mxu0 0.0
      %1561 = vmatprep.subr.mxu0 0.0
      %1562 = vmatpush1.xpose.msra.mxu0 0.0
      %1563 = vmatprep.subr.mxu0 0.0
      %1564 = vmatpush1.xpose.msra.mxu0 0.0
      %1565 = vmatprep.subr.mxu0 0.0
      %1566 = vmatpush1.xpose.msra.mxu0 0.0
      %1567 = vmatprep.subr.mxu0 0.0
      %1568 = vmatpush1.xpose.msra.mxu0 0.0
      %1569 = vmatprep.subr.mxu0 0.0
      %1570 = vmatpush1.xpose.msra.mxu0 0.0
      %1571 = vmatprep.subr.mxu0 0.0
      %1572 = vmatpush1.xpose.msra.mxu0 0.0
      %1573 = vmatprep.subr.mxu0 0.0
      %1574 = vmatpush1.xpose.msra.mxu0 0.0
      %1575 = vmatprep.subr.mxu0 0.0
      %1576 = vmatpush1.xpose.msra.mxu0 0.0
      %1577 = vmatprep.subr.mxu0 0.0
      %1578 = vmatpush1.xpose.msra.mxu0 0.0
      %1579 = vmatprep.subr.mxu0 0.0
      %1580 = vmatpush1.xpose.msra.mxu0 0.0
      %1581 = vmatprep.subr.mxu0 0.0
      %1582 = vmatpush1.xpose.msra.mxu0 0.0
      %1583 = vmatprep.subr.mxu0 0.0
      %1584 = vmatpush1.xpose.msra.mxu0 0.0
      %1585 = vmatprep.subr.mxu0 0.0
      %1586 = vmatpush1.xpose.msra.mxu0 0.0
      %1587 = vmatprep.subr.mxu0 0.0
      %1588 = vmatpush1.xpose.msra.mxu0 0.0
      %1589 = vmatprep.subr.mxu0 0.0
      %1590 = vmatpush1.xpose.msra.mxu0 0.0
      %1591 = vmatprep.subr.mxu0 0.0
      %1592 = vmatpush1.xpose.msra.mxu0 0.0
      %1593 = vmatprep.subr.mxu0 0.0
      %1594 = vmatpush1.xpose.msra.mxu0 0.0
      %1595 = vmatprep.subr.mxu0 0.0
      %1596 = vmatpush1.xpose.msra.mxu0 0.0
      %1597 = vmatprep.subr.mxu0 0.0
      %1598 = vmatpush1.xpose.msra.mxu0 0.0
      %1599 = vmatprep.subr.mxu0 0.0
      %1600 = vmatpush1.xpose.msra.mxu0 0.0
      %1601 = vmatprep.subr.mxu0 0.0
      %1602 = vmatpush1.xpose.msra.mxu0 0.0
      %1603 = vmatprep.subr.mxu0 0.0
      %1604 = vmatpush1.xpose.msra.mxu0 0.0
      %1605 = vmatprep.subr.mxu0 0.0
      %1606 = vmatpush1.xpose.msra.mxu0 0.0
      %1607 = vmatprep.subr.mxu0 0.0
      %1608 = vmatpush1.xpose.msra.mxu0 0.0
      %1609 = vmatprep.subr.mxu0 0.0
      %1610 = vmatpush1.xpose.msra.mxu0 0.0
      %1611 = vmatprep.mubr.f32.mxu0 0.0
      %1612 = vmatmul.mubr.f32.gmra.mrb[0].mxu0 %v205
      %v1613 = vpop.f32.mrb[0].mxu0
      %v1614 = vadd.f32 0.0, %v1613
      %v1615 = vpop.f32.mrb[0].mxu0
      %1616 = vdwg.mxu0
      %v1617 = vsub.f32 %v1614, %v314
      %1619 = vrot.lane.b32.xlu0 %v1617, 96
      %v1620 = vpop.permute.xlu0 %1619
      %1622 = vst.msk [vmem:[%s204 + $0x8] sm:$0x7f] %vm969, %v1620
      %v1623 = vsel %vm1531, %v312, 128
      %v1624 = vsel %vm1532, %v312, 128
      %v1625 = vsel %vm1533, %v312, 128
      %v1626 = vsel %vm1534, %v312, 128
      %v1627 = vand.u32 %v1623, 65535
      %v1628 = vshra.s32 %v1623, 16
      %v1629 = vcvt.s32.f32 %v1627
      %v1630 = vcvt.s32.f32 %v1628
      %1631 = vmin.xlane.f32.xlu0 %v1630
      %v1632 = vpop.xlane.xlu0 %1631
      %vm1633 = vcmp.eq.f32.partialorder %v1630, %v1632
      %v1634 = vsel %vm1633, %v1629, inf
      %1635 = vmin.xlane.f32.xlu0 %v1634
      %v1636 = vpop.xlane.xlu0 %1635
      %v1637 = vcvt.f32.s32 %v1636
      %v1638 = vcvt.f32.s32 %v1632
      %v1639 = vshll.u32 %v1638, 16
      %v1640 = vadd.s32 %v1639, %v1637
      %v1641 = vand.u32 %v1624, 65535
      %v1642 = vshra.s32 %v1624, 16
      %v1643 = vcvt.s32.f32 %v1641
      %v1644 = vcvt.s32.f32 %v1642
      %1645 = vmin.xlane.f32.xlu0 %v1644
      %v1646 = vpop.xlane.xlu0 %1645
      %vm1647 = vcmp.eq.f32.partialorder %v1644, %v1646
      %v1648 = vsel %vm1647, %v1643, inf
      %1649 = vmin.xlane.f32.xlu0 %v1648
      %v1650 = vpop.xlane.xlu0 %1649
      %v1651 = vcvt.f32.s32 %v1650
      %v1652 = vcvt.f32.s32 %v1646
      %v1653 = vshll.u32 %v1652, 16
      %v1654 = vadd.s32 %v1653, %v1651
      %v1655 = vand.u32 %v1625, 65535
      %v1656 = vshra.s32 %v1625, 16
      %v1657 = vcvt.s32.f32 %v1655
      %v1658 = vcvt.s32.f32 %v1656
      %1659 = vmin.xlane.f32.xlu0 %v1658
      %v1660 = vpop.xlane.xlu0 %1659
      %vm1661 = vcmp.eq.f32.partialorder %v1658, %v1660
      %v1662 = vsel %vm1661, %v1657, inf
      %1663 = vmin.xlane.f32.xlu0 %v1662
      %v1664 = vpop.xlane.xlu0 %1663
      %v1665 = vcvt.f32.s32 %v1664
      %v1666 = vcvt.f32.s32 %v1660
      %v1667 = vshll.u32 %v1666, 16
      %v1668 = vadd.s32 %v1667, %v1665
      %v1669 = vand.u32 %v1626, 65535
      %v1670 = vshra.s32 %v1626, 16
      %v1671 = vcvt.s32.f32 %v1669
      %v1672 = vcvt.s32.f32 %v1670
      %1673 = vmin.xlane.f32.xlu0 %v1672
      %v1674 = vpop.xlane.xlu0 %1673
      %vm1675 = vcmp.eq.f32.partialorder %v1672, %v1674
      %v1676 = vsel %vm1675, %v1671, inf
      %1677 = vmin.xlane.f32.xlu0 %v1676
      %v1678 = vpop.xlane.xlu0 %1677
      %v1679 = vcvt.f32.s32 %v1678
      %v1680 = vcvt.f32.s32 %v1674
      %v1681 = vshll.u32 %v1680, 16
      %v1682 = vadd.s32 %v1681, %v1679
      %vm1683 = vcmp.lt.s32.totalorder %v1640, 128
      %vm1684 = vcmp.lt.s32.totalorder %v1654, 128
      %vm1685 = vcmp.lt.s32.totalorder %v1668, 128
      %vm1686 = vcmp.lt.s32.totalorder %v1682, 128
      %v1687 = vsel %vm1683, %v1640, %v379
      %v1688 = vsel %vm1684, %v1654, %v380
      %v1689 = vsel %vm1685, %v1668, %v381
      %v1690 = vsel %vm1686, %v1682, %v382
      %vm1691 = vcmp.ne.s32.totalorder %v312, %v1640
      %vm1692 = vcmp.ne.s32.totalorder %v312, %v1654
      %vm1693 = vcmp.ne.s32.totalorder %v312, %v1668
      %vm1694 = vcmp.ne.s32.totalorder %v312, %v1682
      %vm1695 = vmand %vm1531, %vm1691
      %vm1696 = vmand %vm1532, %vm1692
      %vm1697 = vmand %vm1533, %vm1693
      %vm1698 = vmand %vm1534, %vm1694
      %vm1699 = vcmp.eq.s32.totalorder %v312, %v1687
      %vm1700 = vcmp.eq.s32.totalorder %v312, %v1688
      %vm1701 = vcmp.eq.s32.totalorder %v312, %v1689
      %vm1702 = vcmp.eq.s32.totalorder %v312, %v1690
      %v1703 = vsel %vm1699, 1, 0
      %v1704 = vsel %vm1700, 1, 0
      %v1705 = vsel %vm1701, 1, 0
      %v1706 = vsel %vm1702, 1, 0
      %v1707 = vcvt.s32.f32 %v1703
      %v1708 = vcvt.s32.f32 %v1704
      %v1709 = vcvt.s32.f32 %v1705
      %v1710 = vcvt.s32.f32 %v1706
      %1711 = vmatprep.subr.mxu0 0.0
      %1712 = vmatpush1.xpose.msra.mxu0 %v1707
      %1713 = vmatprep.subr.mxu0 0.0
      %1714 = vmatpush1.xpose.msra.mxu0 %v1708
      %1715 = vmatprep.subr.mxu0 0.0
      %1716 = vmatpush1.xpose.msra.mxu0 %v1709
      %1717 = vmatprep.subr.mxu0 0.0
      %1718 = vmatpush1.xpose.msra.mxu0 %v1710
      %1719 = vmatprep.subr.mxu0 0.0
      %1720 = vmatpush1.xpose.msra.mxu0 0.0
      %1721 = vmatprep.subr.mxu0 0.0
      %1722 = vmatpush1.xpose.msra.mxu0 0.0
      %1723 = vmatprep.subr.mxu0 0.0
      %1724 = vmatpush1.xpose.msra.mxu0 0.0
      %1725 = vmatprep.subr.mxu0 0.0
      %1726 = vmatpush1.xpose.msra.mxu0 0.0
      %1727 = vmatprep.subr.mxu0 0.0
      %1728 = vmatpush1.xpose.msra.mxu0 0.0
      %1729 = vmatprep.subr.mxu0 0.0
      %1730 = vmatpush1.xpose.msra.mxu0 0.0
      %1731 = vmatprep.subr.mxu0 0.0
      %1732 = vmatpush1.xpose.msra.mxu0 0.0
      %1733 = vmatprep.subr.mxu0 0.0
      %1734 = vmatpush1.xpose.msra.mxu0 0.0
      %1735 = vmatprep.subr.mxu0 0.0
      %1736 = vmatpush1.xpose.msra.mxu0 0.0
      %1737 = vmatprep.subr.mxu0 0.0
      %1738 = vmatpush1.xpose.msra.mxu0 0.0
      %1739 = vmatprep.subr.mxu0 0.0
      %1740 = vmatpush1.xpose.msra.mxu0 0.0
      %1741 = vmatprep.subr.mxu0 0.0
      %1742 = vmatpush1.xpose.msra.mxu0 0.0
      %1743 = vmatprep.subr.mxu0 0.0
      %1744 = vmatpush1.xpose.msra.mxu0 0.0
      %1745 = vmatprep.subr.mxu0 0.0
      %1746 = vmatpush1.xpose.msra.mxu0 0.0
      %1747 = vmatprep.subr.mxu0 0.0
      %1748 = vmatpush1.xpose.msra.mxu0 0.0
      %1749 = vmatprep.subr.mxu0 0.0
      %1750 = vmatpush1.xpose.msra.mxu0 0.0
      %1751 = vmatprep.subr.mxu0 0.0
      %1752 = vmatpush1.xpose.msra.mxu0 0.0
      %1753 = vmatprep.subr.mxu0 0.0
      %1754 = vmatpush1.xpose.msra.mxu0 0.0
      %1755 = vmatprep.subr.mxu0 0.0
      %1756 = vmatpush1.xpose.msra.mxu0 0.0
      %1757 = vmatprep.subr.mxu0 0.0
      %1758 = vmatpush1.xpose.msra.mxu0 0.0
      %1759 = vmatprep.subr.mxu0 0.0
      %1760 = vmatpush1.xpose.msra.mxu0 0.0
      %1761 = vmatprep.subr.mxu0 0.0
      %1762 = vmatpush1.xpose.msra.mxu0 0.0
      %1763 = vmatprep.subr.mxu0 0.0
      %1764 = vmatpush1.xpose.msra.mxu0 0.0
      %1765 = vmatprep.subr.mxu0 0.0
      %1766 = vmatpush1.xpose.msra.mxu0 0.0
      %1767 = vmatprep.subr.mxu0 0.0
      %1768 = vmatpush1.xpose.msra.mxu0 0.0
      %1769 = vmatprep.subr.mxu0 0.0
      %1770 = vmatpush1.xpose.msra.mxu0 0.0
      %1771 = vmatprep.subr.mxu0 0.0
      %1772 = vmatpush1.xpose.msra.mxu0 0.0
      %1773 = vmatprep.subr.mxu0 0.0
      %1774 = vmatpush1.xpose.msra.mxu0 0.0
      %1775 = vmatprep.mubr.f32.mxu0 0.0
      %1776 = vmatmul.mubr.f32.gmra.mrb[0].mxu0 %v205
      %v1777 = vpop.f32.mrb[0].mxu0
      %v1778 = vadd.f32 0.0, %v1777
      %v1779 = vpop.f32.mrb[0].mxu0
      %1780 = vdwg.mxu0
      %v1781 = vsub.f32 %v1778, %v314
      %1782 = vst.msk [vmem:[%s204 + $0x10] sm:$0x7f] %vm474, %v1781
      %v1783 = vsel %vm1695, %v312, 128
      %v1784 = vsel %vm1696, %v312, 128
      %v1785 = vsel %vm1697, %v312, 128
      %v1786 = vsel %vm1698, %v312, 128
      %v1787 = vand.u32 %v1783, 65535
      %v1788 = vshra.s32 %v1783, 16
      %v1789 = vcvt.s32.f32 %v1787
      %v1790 = vcvt.s32.f32 %v1788
      %1791 = vmin.xlane.f32.xlu0 %v1790
      %v1792 = vpop.xlane.xlu0 %1791
      %vm1793 = vcmp.eq.f32.partialorder %v1790, %v1792
      %v1794 = vsel %vm1793, %v1789, inf
      %1795 = vmin.xlane.f32.xlu0 %v1794
      %v1796 = vpop.xlane.xlu0 %1795
      %v1797 = vcvt.f32.s32 %v1796
      %v1798 = vcvt.f32.s32 %v1792
      %v1799 = vshll.u32 %v1798, 16
      %v1800 = vadd.s32 %v1799, %v1797
      %v1801 = vand.u32 %v1784, 65535
      %v1802 = vshra.s32 %v1784, 16
      %v1803 = vcvt.s32.f32 %v1801
      %v1804 = vcvt.s32.f32 %v1802
      %1805 = vmin.xlane.f32.xlu0 %v1804
      %v1806 = vpop.xlane.xlu0 %1805
      %vm1807 = vcmp.eq.f32.partialorder %v1804, %v1806
      %v1808 = vsel %vm1807, %v1803, inf
      %1809 = vmin.xlane.f32.xlu0 %v1808
      %v1810 = vpop.xlane.xlu0 %1809
      %v1811 = vcvt.f32.s32 %v1810
      %v1812 = vcvt.f32.s32 %v1806
      %v1813 = vshll.u32 %v1812, 16
      %v1814 = vadd.s32 %v1813, %v1811
      %v1815 = vand.u32 %v1785, 65535
      %v1816 = vshra.s32 %v1785, 16
      %v1817 = vcvt.s32.f32 %v1815
      %v1818 = vcvt.s32.f32 %v1816
      %1819 = vmin.xlane.f32.xlu0 %v1818
      %v1820 = vpop.xlane.xlu0 %1819
      %vm1821 = vcmp.eq.f32.partialorder %v1818, %v1820
      %v1822 = vsel %vm1821, %v1817, inf
      %1823 = vmin.xlane.f32.xlu0 %v1822
      %v1824 = vpop.xlane.xlu0 %1823
      %v1825 = vcvt.f32.s32 %v1824
      %v1826 = vcvt.f32.s32 %v1820
      %v1827 = vshll.u32 %v1826, 16
      %v1828 = vadd.s32 %v1827, %v1825
      %v1829 = vand.u32 %v1786, 65535
      %v1830 = vshra.s32 %v1786, 16
      %v1831 = vcvt.s32.f32 %v1829
      %v1832 = vcvt.s32.f32 %v1830
      %1833 = vmin.xlane.f32.xlu0 %v1832
      %v1834 = vpop.xlane.xlu0 %1833
      %vm1835 = vcmp.eq.f32.partialorder %v1832, %v1834
      %v1836 = vsel %vm1835, %v1831, inf
      %1837 = vmin.xlane.f32.xlu0 %v1836
      %v1838 = vpop.xlane.xlu0 %1837
      %v1839 = vcvt.f32.s32 %v1838
      %v1840 = vcvt.f32.s32 %v1834
      %v1841 = vshll.u32 %v1840, 16
      %v1842 = vadd.s32 %v1841, %v1839
      %vm1843 = vcmp.lt.s32.totalorder %v1800, 128
      %vm1844 = vcmp.lt.s32.totalorder %v1814, 128
      %vm1845 = vcmp.lt.s32.totalorder %v1828, 128
      %vm1846 = vcmp.lt.s32.totalorder %v1842, 128
      %v1847 = vsel %vm1843, %v1800, %v379
      %v1848 = vsel %vm1844, %v1814, %v380
      %v1849 = vsel %vm1845, %v1828, %v381
      %v1850 = vsel %vm1846, %v1842, %v382
      %vm1851 = vcmp.ne.s32.totalorder %v312, %v1800
      %vm1852 = vcmp.ne.s32.totalorder %v312, %v1814
      %vm1853 = vcmp.ne.s32.totalorder %v312, %v1828
      %vm1854 = vcmp.ne.s32.totalorder %v312, %v1842
      %vm1855 = vmand %vm1695, %vm1851
      %vm1856 = vmand %vm1696, %vm1852
      %vm1857 = vmand %vm1697, %vm1853
      %vm1858 = vmand %vm1698, %vm1854
      %vm1859 = vcmp.eq.s32.totalorder %v312, %v1847
      %vm1860 = vcmp.eq.s32.totalorder %v312, %v1848
      %vm1861 = vcmp.eq.s32.totalorder %v312, %v1849
      %vm1862 = vcmp.eq.s32.totalorder %v312, %v1850
      %v1863 = vsel %vm1859, 1, 0
      %v1864 = vsel %vm1860, 1, 0
      %v1865 = vsel %vm1861, 1, 0
      %v1866 = vsel %vm1862, 1, 0
      %v1867 = vcvt.s32.f32 %v1863
      %v1868 = vcvt.s32.f32 %v1864
      %v1869 = vcvt.s32.f32 %v1865
      %v1870 = vcvt.s32.f32 %v1866
      %1871 = vmatprep.subr.mxu0 0.0
      %1872 = vmatpush1.xpose.msra.mxu0 %v1867
      %1873 = vmatprep.subr.mxu0 0.0
      %1874 = vmatpush1.xpose.msra.mxu0 %v1868
      %1875 = vmatprep.subr.mxu0 0.0
      %1876 = vmatpush1.xpose.msra.mxu0 %v1869
      %1877 = vmatprep.subr.mxu0 0.0
      %1878 = vmatpush1.xpose.msra.mxu0 %v1870
      %1879 = vmatprep.subr.mxu0 0.0
      %1880 = vmatpush1.xpose.msra.mxu0 0.0
      %1881 = vmatprep.subr.mxu0 0.0
      %1882 = vmatpush1.xpose.msra.mxu0 0.0
      %1883 = vmatprep.subr.mxu0 0.0
      %1884 = vmatpush1.xpose.msra.mxu0 0.0
      %1885 = vmatprep.subr.mxu0 0.0
      %1886 = vmatpush1.xpose.msra.mxu0 0.0
      %1887 = vmatprep.subr.mxu0 0.0
      %1888 = vmatpush1.xpose.msra.mxu0 0.0
      %1889 = vmatprep.subr.mxu0 0.0
      %1890 = vmatpush1.xpose.msra.mxu0 0.0
      %1891 = vmatprep.subr.mxu0 0.0
      %1892 = vmatpush1.xpose.msra.mxu0 0.0
      %1893 = vmatprep.subr.mxu0 0.0
      %1894 = vmatpush1.xpose.msra.mxu0 0.0
      %1895 = vmatprep.subr.mxu0 0.0
      %1896 = vmatpush1.xpose.msra.mxu0 0.0
      %1897 = vmatprep.subr.mxu0 0.0
      %1898 = vmatpush1.xpose.msra.mxu0 0.0
      %1899 = vmatprep.subr.mxu0 0.0
      %1900 = vmatpush1.xpose.msra.mxu0 0.0
      %1901 = vmatprep.subr.mxu0 0.0
      %1902 = vmatpush1.xpose.msra.mxu0 0.0
      %1903 = vmatprep.subr.mxu0 0.0
      %1904 = vmatpush1.xpose.msra.mxu0 0.0
      %1905 = vmatprep.subr.mxu0 0.0
      %1906 = vmatpush1.xpose.msra.mxu0 0.0
      %1907 = vmatprep.subr.mxu0 0.0
      %1908 = vmatpush1.xpose.msra.mxu0 0.0
      %1909 = vmatprep.subr.mxu0 0.0
      %1910 = vmatpush1.xpose.msra.mxu0 0.0
      %1911 = vmatprep.subr.mxu0 0.0
      %1912 = vmatpush1.xpose.msra.mxu0 0.0
      %1913 = vmatprep.subr.mxu0 0.0
      %1914 = vmatpush1.xpose.msra.mxu0 0.0
      %1915 = vmatprep.subr.mxu0 0.0
      %1916 = vmatpush1.xpose.msra.mxu0 0.0
      %1917 = vmatprep.subr.mxu0 0.0
      %1918 = vmatpush1.xpose.msra.mxu0 0.0
      %1919 = vmatprep.subr.mxu0 0.0
      %1920 = vmatpush1.xpose.msra.mxu0 0.0
      %1921 = vmatprep.subr.mxu0 0.0
      %1922 = vmatpush1.xpose.msra.mxu0 0.0
      %1923 = vmatprep.subr.mxu0 0.0
      %1924 = vmatpush1.xpose.msra.mxu0 0.0
      %1925 = vmatprep.subr.mxu0 0.0
      %1926 = vmatpush1.xpose.msra.mxu0 0.0
      %1927 = vmatprep.subr.mxu0 0.0
      %1928 = vmatpush1.xpose.msra.mxu0 0.0
      %1929 = vmatprep.subr.mxu0 0.0
      %1930 = vmatpush1.xpose.msra.mxu0 0.0
      %1931 = vmatprep.subr.mxu0 0.0
      %1932 = vmatpush1.xpose.msra.mxu0 0.0
      %1933 = vmatprep.subr.mxu0 0.0
      %1934 = vmatpush1.xpose.msra.mxu0 0.0
      %1935 = vmatprep.mubr.f32.mxu0 0.0
      %1936 = vmatmul.mubr.f32.gmra.mrb[0].mxu0 %v205
      %v1937 = vpop.f32.mrb[0].mxu0
      %v1938 = vadd.f32 0.0, %v1937
      %v1939 = vpop.f32.mrb[0].mxu0
      %1940 = vdwg.mxu0
      %v1941 = vsub.f32 %v1938, %v314
      %1943 = vrot.lane.b32.xlu0 %v1941, 32
      %v1944 = vpop.permute.xlu0 %1943
      %1946 = vst.msk [vmem:[%s204 + $0x10] sm:$0x7f] %vm639, %v1944
      %v1947 = vsel %vm1855, %v312, 128
      %v1948 = vsel %vm1856, %v312, 128
      %v1949 = vsel %vm1857, %v312, 128
      %v1950 = vsel %vm1858, %v312, 128
      %v1951 = vand.u32 %v1947, 65535
      %v1952 = vshra.s32 %v1947, 16
      %v1953 = vcvt.s32.f32 %v1951
      %v1954 = vcvt.s32.f32 %v1952
      %1955 = vmin.xlane.f32.xlu0 %v1954
      %v1956 = vpop.xlane.xlu0 %1955
      %vm1957 = vcmp.eq.f32.partialorder %v1954, %v1956
      %v1958 = vsel %vm1957, %v1953, inf
      %1959 = vmin.xlane.f32.xlu0 %v1958
      %v1960 = vpop.xlane.xlu0 %1959
      %v1961 = vcvt.f32.s32 %v1960
      %v1962 = vcvt.f32.s32 %v1956
      %v1963 = vshll.u32 %v1962, 16
      %v1964 = vadd.s32 %v1963, %v1961
      %v1965 = vand.u32 %v1948, 65535
      %v1966 = vshra.s32 %v1948, 16
      %v1967 = vcvt.s32.f32 %v1965
      %v1968 = vcvt.s32.f32 %v1966
      %1969 = vmin.xlane.f32.xlu0 %v1968
      %v1970 = vpop.xlane.xlu0 %1969
      %vm1971 = vcmp.eq.f32.partialorder %v1968, %v1970
      %v1972 = vsel %vm1971, %v1967, inf
      %1973 = vmin.xlane.f32.xlu0 %v1972
      %v1974 = vpop.xlane.xlu0 %1973
      %v1975 = vcvt.f32.s32 %v1974
      %v1976 = vcvt.f32.s32 %v1970
      %v1977 = vshll.u32 %v1976, 16
      %v1978 = vadd.s32 %v1977, %v1975
      %v1979 = vand.u32 %v1949, 65535
      %v1980 = vshra.s32 %v1949, 16
      %v1981 = vcvt.s32.f32 %v1979
      %v1982 = vcvt.s32.f32 %v1980
      %1983 = vmin.xlane.f32.xlu0 %v1982
      %v1984 = vpop.xlane.xlu0 %1983
      %vm1985 = vcmp.eq.f32.partialorder %v1982, %v1984
      %v1986 = vsel %vm1985, %v1981, inf
      %1987 = vmin.xlane.f32.xlu0 %v1986
      %v1988 = vpop.xlane.xlu0 %1987
      %v1989 = vcvt.f32.s32 %v1988
      %v1990 = vcvt.f32.s32 %v1984
      %v1991 = vshll.u32 %v1990, 16
      %v1992 = vadd.s32 %v1991, %v1989
      %v1993 = vand.u32 %v1950, 65535
      %v1994 = vshra.s32 %v1950, 16
      %v1995 = vcvt.s32.f32 %v1993
      %v1996 = vcvt.s32.f32 %v1994
      %1997 = vmin.xlane.f32.xlu0 %v1996
      %v1998 = vpop.xlane.xlu0 %1997
      %vm1999 = vcmp.eq.f32.partialorder %v1996, %v1998
      %v2000 = vsel %vm1999, %v1995, inf
      %2001 = vmin.xlane.f32.xlu0 %v2000
      %v2002 = vpop.xlane.xlu0 %2001
      %v2003 = vcvt.f32.s32 %v2002
      %v2004 = vcvt.f32.s32 %v1998
      %v2005 = vshll.u32 %v2004, 16
      %v2006 = vadd.s32 %v2005, %v2003
      %vm2007 = vcmp.lt.s32.totalorder %v1964, 128
      %vm2008 = vcmp.lt.s32.totalorder %v1978, 128
      %vm2009 = vcmp.lt.s32.totalorder %v1992, 128
      %vm2010 = vcmp.lt.s32.totalorder %v2006, 128
      %v2011 = vsel %vm2007, %v1964, %v379
      %v2012 = vsel %vm2008, %v1978, %v380
      %v2013 = vsel %vm2009, %v1992, %v381
      %v2014 = vsel %vm2010, %v2006, %v382
      %vm2015 = vcmp.ne.s32.totalorder %v312, %v1964
      %vm2016 = vcmp.ne.s32.totalorder %v312, %v1978
      %vm2017 = vcmp.ne.s32.totalorder %v312, %v1992
      %vm2018 = vcmp.ne.s32.totalorder %v312, %v2006
      %vm2019 = vmand %vm1855, %vm2015
      %vm2020 = vmand %vm1856, %vm2016
      %vm2021 = vmand %vm1857, %vm2017
      %vm2022 = vmand %vm1858, %vm2018
      %vm2023 = vcmp.eq.s32.totalorder %v312, %v2011
      %vm2024 = vcmp.eq.s32.totalorder %v312, %v2012
      %vm2025 = vcmp.eq.s32.totalorder %v312, %v2013
      %vm2026 = vcmp.eq.s32.totalorder %v312, %v2014
      %v2027 = vsel %vm2023, 1, 0
      %v2028 = vsel %vm2024, 1, 0
      %v2029 = vsel %vm2025, 1, 0
      %v2030 = vsel %vm2026, 1, 0
      %v2031 = vcvt.s32.f32 %v2027
      %v2032 = vcvt.s32.f32 %v2028
      %v2033 = vcvt.s32.f32 %v2029
      %v2034 = vcvt.s32.f32 %v2030
      %2035 = vmatprep.subr.mxu0 0.0
      %2036 = vmatpush1.xpose.msra.mxu0 %v2031
      %2037 = vmatprep.subr.mxu0 0.0
      %2038 = vmatpush1.xpose.msra.mxu0 %v2032
      %2039 = vmatprep.subr.mxu0 0.0
      %2040 = vmatpush1.xpose.msra.mxu0 %v2033
      %2041 = vmatprep.subr.mxu0 0.0
      %2042 = vmatpush1.xpose.msra.mxu0 %v2034
      %2043 = vmatprep.subr.mxu0 0.0
      %2044 = vmatpush1.xpose.msra.mxu0 0.0
      %2045 = vmatprep.subr.mxu0 0.0
      %2046 = vmatpush1.xpose.msra.mxu0 0.0
      %2047 = vmatprep.subr.mxu0 0.0
      %2048 = vmatpush1.xpose.msra.mxu0 0.0
      %2049 = vmatprep.subr.mxu0 0.0
      %2050 = vmatpush1.xpose.msra.mxu0 0.0
      %2051 = vmatprep.subr.mxu0 0.0
      %2052 = vmatpush1.xpose.msra.mxu0 0.0
      %2053 = vmatprep.subr.mxu0 0.0
      %2054 = vmatpush1.xpose.msra.mxu0 0.0
      %2055 = vmatprep.subr.mxu0 0.0
      %2056 = vmatpush1.xpose.msra.mxu0 0.0
      %2057 = vmatprep.subr.mxu0 0.0
      %2058 = vmatpush1.xpose.msra.mxu0 0.0
      %2059 = vmatprep.subr.mxu0 0.0
      %2060 = vmatpush1.xpose.msra.mxu0 0.0
      %2061 = vmatprep.subr.mxu0 0.0
      %2062 = vmatpush1.xpose.msra.mxu0 0.0
      %2063 = vmatprep.subr.mxu0 0.0
      %2064 = vmatpush1.xpose.msra.mxu0 0.0
      %2065 = vmatprep.subr.mxu0 0.0
      %2066 = vmatpush1.xpose.msra.mxu0 0.0
      %2067 = vmatprep.subr.mxu0 0.0
      %2068 = vmatpush1.xpose.msra.mxu0 0.0
      %2069 = vmatprep.subr.mxu0 0.0
      %2070 = vmatpush1.xpose.msra.mxu0 0.0
      %2071 = vmatprep.subr.mxu0 0.0
      %2072 = vmatpush1.xpose.msra.mxu0 0.0
      %2073 = vmatprep.subr.mxu0 0.0
      %2074 = vmatpush1.xpose.msra.mxu0 0.0
      %2075 = vmatprep.subr.mxu0 0.0
      %2076 = vmatpush1.xpose.msra.mxu0 0.0
      %2077 = vmatprep.subr.mxu0 0.0
      %2078 = vmatpush1.xpose.msra.mxu0 0.0
      %2079 = vmatprep.subr.mxu0 0.0
      %2080 = vmatpush1.xpose.msra.mxu0 0.0
      %2081 = vmatprep.subr.mxu0 0.0
      %2082 = vmatpush1.xpose.msra.mxu0 0.0
      %2083 = vmatprep.subr.mxu0 0.0
      %2084 = vmatpush1.xpose.msra.mxu0 0.0
      %2085 = vmatprep.subr.mxu0 0.0
      %2086 = vmatpush1.xpose.msra.mxu0 0.0
      %2087 = vmatprep.subr.mxu0 0.0
      %2088 = vmatpush1.xpose.msra.mxu0 0.0
      %2089 = vmatprep.subr.mxu0 0.0
      %2090 = vmatpush1.xpose.msra.mxu0 0.0
      %2091 = vmatprep.subr.mxu0 0.0
      %2092 = vmatpush1.xpose.msra.mxu0 0.0
      %2093 = vmatprep.subr.mxu0 0.0
      %2094 = vmatpush1.xpose.msra.mxu0 0.0
      %2095 = vmatprep.subr.mxu0 0.0
      %2096 = vmatpush1.xpose.msra.mxu0 0.0
      %2097 = vmatprep.subr.mxu0 0.0
      %2098 = vmatpush1.xpose.msra.mxu0 0.0
      %2099 = vmatprep.mubr.f32.mxu0 0.0
      %2100 = vmatmul.mubr.f32.gmra.mrb[0].mxu0 %v205
      %v2101 = vpop.f32.mrb[0].mxu0
      %v2102 = vadd.f32 0.0, %v2101
      %v2103 = vpop.f32.mrb[0].mxu0
      %2104 = vdwg.mxu0
      %v2105 = vsub.f32 %v2102, %v314
      %2107 = vrot.lane.b32.xlu0 %v2105, 64
      %v2108 = vpop.permute.xlu0 %2107
      %2110 = vst.msk [vmem:[%s204 + $0x10] sm:$0x7f] %vm804, %v2108
      %v2111 = vsel %vm2019, %v312, 128
      %v2112 = vsel %vm2020, %v312, 128
      %v2113 = vsel %vm2021, %v312, 128
      %v2114 = vsel %vm2022, %v312, 128
      %v2115 = vand.u32 %v2111, 65535
      %v2116 = vshra.s32 %v2111, 16
      %v2117 = vcvt.s32.f32 %v2115
      %v2118 = vcvt.s32.f32 %v2116
      %2119 = vmin.xlane.f32.xlu0 %v2118
      %v2120 = vpop.xlane.xlu0 %2119
      %vm2121 = vcmp.eq.f32.partialorder %v2118, %v2120
      %v2122 = vsel %vm2121, %v2117, inf
      %2123 = vmin.xlane.f32.xlu0 %v2122
      %v2124 = vpop.xlane.xlu0 %2123
      %v2125 = vcvt.f32.s32 %v2124
      %v2126 = vcvt.f32.s32 %v2120
      %v2127 = vshll.u32 %v2126, 16
      %v2128 = vadd.s32 %v2127, %v2125
      %v2129 = vand.u32 %v2112, 65535
      %v2130 = vshra.s32 %v2112, 16
      %v2131 = vcvt.s32.f32 %v2129
      %v2132 = vcvt.s32.f32 %v2130
      %2133 = vmin.xlane.f32.xlu0 %v2132
      %v2134 = vpop.xlane.xlu0 %2133
      %vm2135 = vcmp.eq.f32.partialorder %v2132, %v2134
      %v2136 = vsel %vm2135, %v2131, inf
      %2137 = vmin.xlane.f32.xlu0 %v2136
      %v2138 = vpop.xlane.xlu0 %2137
      %v2139 = vcvt.f32.s32 %v2138
      %v2140 = vcvt.f32.s32 %v2134
      %v2141 = vshll.u32 %v2140, 16
      %v2142 = vadd.s32 %v2141, %v2139
      %v2143 = vand.u32 %v2113, 65535
      %v2144 = vshra.s32 %v2113, 16
      %v2145 = vcvt.s32.f32 %v2143
      %v2146 = vcvt.s32.f32 %v2144
      %2147 = vmin.xlane.f32.xlu0 %v2146
      %v2148 = vpop.xlane.xlu0 %2147
      %vm2149 = vcmp.eq.f32.partialorder %v2146, %v2148
      %v2150 = vsel %vm2149, %v2145, inf
      %2151 = vmin.xlane.f32.xlu0 %v2150
      %v2152 = vpop.xlane.xlu0 %2151
      %v2153 = vcvt.f32.s32 %v2152
      %v2154 = vcvt.f32.s32 %v2148
      %v2155 = vshll.u32 %v2154, 16
      %v2156 = vadd.s32 %v2155, %v2153
      %v2157 = vand.u32 %v2114, 65535
      %v2158 = vshra.s32 %v2114, 16
      %v2159 = vcvt.s32.f32 %v2157
      %v2160 = vcvt.s32.f32 %v2158
      %2161 = vmin.xlane.f32.xlu0 %v2160
      %v2162 = vpop.xlane.xlu0 %2161
      %vm2163 = vcmp.eq.f32.partialorder %v2160, %v2162
      %v2164 = vsel %vm2163, %v2159, inf
      %2165 = vmin.xlane.f32.xlu0 %v2164
      %v2166 = vpop.xlane.xlu0 %2165
      %v2167 = vcvt.f32.s32 %v2166
      %v2168 = vcvt.f32.s32 %v2162
      %v2169 = vshll.u32 %v2168, 16
      %v2170 = vadd.s32 %v2169, %v2167
      %vm2171 = vcmp.lt.s32.totalorder %v2128, 128
      %vm2172 = vcmp.lt.s32.totalorder %v2142, 128
      %vm2173 = vcmp.lt.s32.totalorder %v2156, 128
      %vm2174 = vcmp.lt.s32.totalorder %v2170, 128
      %v2175 = vsel %vm2171, %v2128, %v379
      %v2176 = vsel %vm2172, %v2142, %v380
      %v2177 = vsel %vm2173, %v2156, %v381
      %v2178 = vsel %vm2174, %v2170, %v382
      %vm2179 = vcmp.ne.s32.totalorder %v312, %v2128
      %vm2180 = vcmp.ne.s32.totalorder %v312, %v2142
      %vm2181 = vcmp.ne.s32.totalorder %v312, %v2156
      %vm2182 = vcmp.ne.s32.totalorder %v312, %v2170
      %vm2183 = vmand %vm2019, %vm2179
      %vm2184 = vmand %vm2020, %vm2180
      %vm2185 = vmand %vm2021, %vm2181
      %vm2186 = vmand %vm2022, %vm2182
      %vm2187 = vcmp.eq.s32.totalorder %v312, %v2175
      %vm2188 = vcmp.eq.s32.totalorder %v312, %v2176
      %vm2189 = vcmp.eq.s32.totalorder %v312, %v2177
      %vm2190 = vcmp.eq.s32.totalorder %v312, %v2178
      %v2191 = vsel %vm2187, 1, 0
      %v2192 = vsel %vm2188, 1, 0
      %v2193 = vsel %vm2189, 1, 0
      %v2194 = vsel %vm2190, 1, 0
      %v2195 = vcvt.s32.f32 %v2191
      %v2196 = vcvt.s32.f32 %v2192
      %v2197 = vcvt.s32.f32 %v2193
      %v2198 = vcvt.s32.f32 %v2194
      %2199 = vmatprep.subr.mxu0 0.0
      %2200 = vmatpush1.xpose.msra.mxu0 %v2195
      %2201 = vmatprep.subr.mxu0 0.0
      %2202 = vmatpush1.xpose.msra.mxu0 %v2196
      %2203 = vmatprep.subr.mxu0 0.0
      %2204 = vmatpush1.xpose.msra.mxu0 %v2197
      %2205 = vmatprep.subr.mxu0 0.0
      %2206 = vmatpush1.xpose.msra.mxu0 %v2198
      %2207 = vmatprep.subr.mxu0 0.0
      %2208 = vmatpush1.xpose.msra.mxu0 0.0
      %2209 = vmatprep.subr.mxu0 0.0
      %2210 = vmatpush1.xpose.msra.mxu0 0.0
      %2211 = vmatprep.subr.mxu0 0.0
      %2212 = vmatpush1.xpose.msra.mxu0 0.0
      %2213 = vmatprep.subr.mxu0 0.0
      %2214 = vmatpush1.xpose.msra.mxu0 0.0
      %2215 = vmatprep.subr.mxu0 0.0
      %2216 = vmatpush1.xpose.msra.mxu0 0.0
      %2217 = vmatprep.subr.mxu0 0.0
      %2218 = vmatpush1.xpose.msra.mxu0 0.0
      %2219 = vmatprep.subr.mxu0 0.0
      %2220 = vmatpush1.xpose.msra.mxu0 0.0
      %2221 = vmatprep.subr.mxu0 0.0
      %2222 = vmatpush1.xpose.msra.mxu0 0.0
      %2223 = vmatprep.subr.mxu0 0.0
      %2224 = vmatpush1.xpose.msra.mxu0 0.0
      %2225 = vmatprep.subr.mxu0 0.0
      %2226 = vmatpush1.xpose.msra.mxu0 0.0
      %2227 = vmatprep.subr.mxu0 0.0
      %2228 = vmatpush1.xpose.msra.mxu0 0.0
      %2229 = vmatprep.subr.mxu0 0.0
      %2230 = vmatpush1.xpose.msra.mxu0 0.0
      %2231 = vmatprep.subr.mxu0 0.0
      %2232 = vmatpush1.xpose.msra.mxu0 0.0
      %2233 = vmatprep.subr.mxu0 0.0
      %2234 = vmatpush1.xpose.msra.mxu0 0.0
      %2235 = vmatprep.subr.mxu0 0.0
      %2236 = vmatpush1.xpose.msra.mxu0 0.0
      %2237 = vmatprep.subr.mxu0 0.0
      %2238 = vmatpush1.xpose.msra.mxu0 0.0
      %2239 = vmatprep.subr.mxu0 0.0
      %2240 = vmatpush1.xpose.msra.mxu0 0.0
      %2241 = vmatprep.subr.mxu0 0.0
      %2242 = vmatpush1.xpose.msra.mxu0 0.0
      %2243 = vmatprep.subr.mxu0 0.0
      %2244 = vmatpush1.xpose.msra.mxu0 0.0
      %2245 = vmatprep.subr.mxu0 0.0
      %2246 = vmatpush1.xpose.msra.mxu0 0.0
      %2247 = vmatprep.subr.mxu0 0.0
      %2248 = vmatpush1.xpose.msra.mxu0 0.0
      %2249 = vmatprep.subr.mxu0 0.0
      %2250 = vmatpush1.xpose.msra.mxu0 0.0
      %2251 = vmatprep.subr.mxu0 0.0
      %2252 = vmatpush1.xpose.msra.mxu0 0.0
      %2253 = vmatprep.subr.mxu0 0.0
      %2254 = vmatpush1.xpose.msra.mxu0 0.0
      %2255 = vmatprep.subr.mxu0 0.0
      %2256 = vmatpush1.xpose.msra.mxu0 0.0
      %2257 = vmatprep.subr.mxu0 0.0
      %2258 = vmatpush1.xpose.msra.mxu0 0.0
      %2259 = vmatprep.subr.mxu0 0.0
      %2260 = vmatpush1.xpose.msra.mxu0 0.0
      %2261 = vmatprep.subr.mxu0 0.0
      %2262 = vmatpush1.xpose.msra.mxu0 0.0
      %2263 = vmatprep.mubr.f32.mxu0 0.0
      %2264 = vmatmul.mubr.f32.gmra.mrb[0].mxu0 %v205
      %v2265 = vpop.f32.mrb[0].mxu0
      %v2266 = vadd.f32 0.0, %v2265
      %v2267 = vpop.f32.mrb[0].mxu0
      %2268 = vdwg.mxu0
      %v2269 = vsub.f32 %v2266, %v314
      %2271 = vrot.lane.b32.xlu0 %v2269, 96
      %v2272 = vpop.permute.xlu0 %2271
      %2274 = vst.msk [vmem:[%s204 + $0x10] sm:$0x7f] %vm969, %v2272
      %v2275 = vsel %vm2183, %v312, 128
      %v2276 = vsel %vm2184, %v312, 128
      %v2277 = vsel %vm2185, %v312, 128
      %v2278 = vsel %vm2186, %v312, 128
      %v2279 = vand.u32 %v2275, 65535
      %v2280 = vshra.s32 %v2275, 16
      %v2281 = vcvt.s32.f32 %v2279
      %v2282 = vcvt.s32.f32 %v2280
      %2283 = vmin.xlane.f32.xlu0 %v2282
      %v2284 = vpop.xlane.xlu0 %2283
      %vm2285 = vcmp.eq.f32.partialorder %v2282, %v2284
      %v2286 = vsel %vm2285, %v2281, inf
      %2287 = vmin.xlane.f32.xlu0 %v2286
      %v2288 = vpop.xlane.xlu0 %2287
      %v2289 = vcvt.f32.s32 %v2288
      %v2290 = vcvt.f32.s32 %v2284
      %v2291 = vshll.u32 %v2290, 16
      %v2292 = vadd.s32 %v2291, %v2289
      %v2293 = vand.u32 %v2276, 65535
      %v2294 = vshra.s32 %v2276, 16
      %v2295 = vcvt.s32.f32 %v2293
      %v2296 = vcvt.s32.f32 %v2294
      %2297 = vmin.xlane.f32.xlu0 %v2296
      %v2298 = vpop.xlane.xlu0 %2297
      %vm2299 = vcmp.eq.f32.partialorder %v2296, %v2298
      %v2300 = vsel %vm2299, %v2295, inf
      %2301 = vmin.xlane.f32.xlu0 %v2300
      %v2302 = vpop.xlane.xlu0 %2301
      %v2303 = vcvt.f32.s32 %v2302
      %v2304 = vcvt.f32.s32 %v2298
      %v2305 = vshll.u32 %v2304, 16
      %v2306 = vadd.s32 %v2305, %v2303
      %v2307 = vand.u32 %v2277, 65535
      %v2308 = vshra.s32 %v2277, 16
      %v2309 = vcvt.s32.f32 %v2307
      %v2310 = vcvt.s32.f32 %v2308
      %2311 = vmin.xlane.f32.xlu0 %v2310
      %v2312 = vpop.xlane.xlu0 %2311
      %vm2313 = vcmp.eq.f32.partialorder %v2310, %v2312
      %v2314 = vsel %vm2313, %v2309, inf
      %2315 = vmin.xlane.f32.xlu0 %v2314
      %v2316 = vpop.xlane.xlu0 %2315
      %v2317 = vcvt.f32.s32 %v2316
      %v2318 = vcvt.f32.s32 %v2312
      %v2319 = vshll.u32 %v2318, 16
      %v2320 = vadd.s32 %v2319, %v2317
      %v2321 = vand.u32 %v2278, 65535
      %v2322 = vshra.s32 %v2278, 16
      %v2323 = vcvt.s32.f32 %v2321
      %v2324 = vcvt.s32.f32 %v2322
      %2325 = vmin.xlane.f32.xlu0 %v2324
      %v2326 = vpop.xlane.xlu0 %2325
      %vm2327 = vcmp.eq.f32.partialorder %v2324, %v2326
      %v2328 = vsel %vm2327, %v2323, inf
      %2329 = vmin.xlane.f32.xlu0 %v2328
      %v2330 = vpop.xlane.xlu0 %2329
      %v2331 = vcvt.f32.s32 %v2330
      %v2332 = vcvt.f32.s32 %v2326
      %v2333 = vshll.u32 %v2332, 16
      %v2334 = vadd.s32 %v2333, %v2331
      %vm2335 = vcmp.lt.s32.totalorder %v2292, 128
      %vm2336 = vcmp.lt.s32.totalorder %v2306, 128
      %vm2337 = vcmp.lt.s32.totalorder %v2320, 128
      %vm2338 = vcmp.lt.s32.totalorder %v2334, 128
      %v2339 = vsel %vm2335, %v2292, %v379
      %v2340 = vsel %vm2336, %v2306, %v380
      %v2341 = vsel %vm2337, %v2320, %v381
      %v2342 = vsel %vm2338, %v2334, %v382
      %vm2343 = vcmp.ne.s32.totalorder %v312, %v2292
      %vm2344 = vcmp.ne.s32.totalorder %v312, %v2306
      %vm2345 = vcmp.ne.s32.totalorder %v312, %v2320
      %vm2346 = vcmp.ne.s32.totalorder %v312, %v2334
      %vm2347 = vmand %vm2183, %vm2343
      %vm2348 = vmand %vm2184, %vm2344
      %vm2349 = vmand %vm2185, %vm2345
      %vm2350 = vmand %vm2186, %vm2346
      %vm2351 = vcmp.eq.s32.totalorder %v312, %v2339
      %vm2352 = vcmp.eq.s32.totalorder %v312, %v2340
      %vm2353 = vcmp.eq.s32.totalorder %v312, %v2341
      %vm2354 = vcmp.eq.s32.totalorder %v312, %v2342
      %v2355 = vsel %vm2351, 1, 0
      %v2356 = vsel %vm2352, 1, 0
      %v2357 = vsel %vm2353, 1, 0
      %v2358 = vsel %vm2354, 1, 0
      %v2359 = vcvt.s32.f32 %v2355
      %v2360 = vcvt.s32.f32 %v2356
      %v2361 = vcvt.s32.f32 %v2357
      %v2362 = vcvt.s32.f32 %v2358
      %2363 = vmatprep.subr.mxu0 0.0
      %2364 = vmatpush1.xpose.msra.mxu0 %v2359
      %2365 = vmatprep.subr.mxu0 0.0
      %2366 = vmatpush1.xpose.msra.mxu0 %v2360
      %2367 = vmatprep.subr.mxu0 0.0
      %2368 = vmatpush1.xpose.msra.mxu0 %v2361
      %2369 = vmatprep.subr.mxu0 0.0
      %2370 = vmatpush1.xpose.msra.mxu0 %v2362
      %2371 = vmatprep.subr.mxu0 0.0
      %2372 = vmatpush1.xpose.msra.mxu0 0.0
      %2373 = vmatprep.subr.mxu0 0.0
      %2374 = vmatpush1.xpose.msra.mxu0 0.0
      %2375 = vmatprep.subr.mxu0 0.0
      %2376 = vmatpush1.xpose.msra.mxu0 0.0
      %2377 = vmatprep.subr.mxu0 0.0
      %2378 = vmatpush1.xpose.msra.mxu0 0.0
      %2379 = vmatprep.subr.mxu0 0.0
      %2380 = vmatpush1.xpose.msra.mxu0 0.0
      %2381 = vmatprep.subr.mxu0 0.0
      %2382 = vmatpush1.xpose.msra.mxu0 0.0
      %2383 = vmatprep.subr.mxu0 0.0
      %2384 = vmatpush1.xpose.msra.mxu0 0.0
      %2385 = vmatprep.subr.mxu0 0.0
      %2386 = vmatpush1.xpose.msra.mxu0 0.0
      %2387 = vmatprep.subr.mxu0 0.0
      %2388 = vmatpush1.xpose.msra.mxu0 0.0
      %2389 = vmatprep.subr.mxu0 0.0
      %2390 = vmatpush1.xpose.msra.mxu0 0.0
      %2391 = vmatprep.subr.mxu0 0.0
      %2392 = vmatpush1.xpose.msra.mxu0 0.0
      %2393 = vmatprep.subr.mxu0 0.0
      %2394 = vmatpush1.xpose.msra.mxu0 0.0
      %2395 = vmatprep.subr.mxu0 0.0
      %2396 = vmatpush1.xpose.msra.mxu0 0.0
      %2397 = vmatprep.subr.mxu0 0.0
      %2398 = vmatpush1.xpose.msra.mxu0 0.0
      %2399 = vmatprep.subr.mxu0 0.0
      %2400 = vmatpush1.xpose.msra.mxu0 0.0
      %2401 = vmatprep.subr.mxu0 0.0
      %2402 = vmatpush1.xpose.msra.mxu0 0.0
      %2403 = vmatprep.subr.mxu0 0.0
      %2404 = vmatpush1.xpose.msra.mxu0 0.0
      %2405 = vmatprep.subr.mxu0 0.0
      %2406 = vmatpush1.xpose.msra.mxu0 0.0
      %2407 = vmatprep.subr.mxu0 0.0
      %2408 = vmatpush1.xpose.msra.mxu0 0.0
      %2409 = vmatprep.subr.mxu0 0.0
      %2410 = vmatpush1.xpose.msra.mxu0 0.0
      %2411 = vmatprep.subr.mxu0 0.0
      %2412 = vmatpush1.xpose.msra.mxu0 0.0
      %2413 = vmatprep.subr.mxu0 0.0
      %2414 = vmatpush1.xpose.msra.mxu0 0.0
      %2415 = vmatprep.subr.mxu0 0.0
      %2416 = vmatpush1.xpose.msra.mxu0 0.0
      %2417 = vmatprep.subr.mxu0 0.0
      %2418 = vmatpush1.xpose.msra.mxu0 0.0
      %2419 = vmatprep.subr.mxu0 0.0
      %2420 = vmatpush1.xpose.msra.mxu0 0.0
      %2421 = vmatprep.subr.mxu0 0.0
      %2422 = vmatpush1.xpose.msra.mxu0 0.0
      %2423 = vmatprep.subr.mxu0 0.0
      %2424 = vmatpush1.xpose.msra.mxu0 0.0
      %2425 = vmatprep.subr.mxu0 0.0
      %2426 = vmatpush1.xpose.msra.mxu0 0.0
      %2427 = vmatprep.mubr.f32.mxu0 0.0
      %2428 = vmatmul.mubr.f32.gmra.mrb[0].mxu0 %v205
      %v2429 = vpop.f32.mrb[0].mxu0
      %v2430 = vadd.f32 0.0, %v2429
      %v2431 = vpop.f32.mrb[0].mxu0
      %2432 = vdwg.mxu0
      %v2433 = vsub.f32 %v2430, %v314
      %2434 = vst.msk [vmem:[%s204 + $0x18] sm:$0x7f] %vm474, %v2433
      %v2435 = vsel %vm2347, %v312, 128
      %v2436 = vsel %vm2348, %v312, 128
      %v2437 = vsel %vm2349, %v312, 128
      %v2438 = vsel %vm2350, %v312, 128
      %v2439 = vand.u32 %v2435, 65535
      %v2440 = vshra.s32 %v2435, 16
      %v2441 = vcvt.s32.f32 %v2439
      %v2442 = vcvt.s32.f32 %v2440
      %2443 = vmin.xlane.f32.xlu0 %v2442
      %v2444 = vpop.xlane.xlu0 %2443
      %vm2445 = vcmp.eq.f32.partialorder %v2442, %v2444
      %v2446 = vsel %vm2445, %v2441, inf
      %2447 = vmin.xlane.f32.xlu0 %v2446
      %v2448 = vpop.xlane.xlu0 %2447
      %v2449 = vcvt.f32.s32 %v2448
      %v2450 = vcvt.f32.s32 %v2444
      %v2451 = vshll.u32 %v2450, 16
      %v2452 = vadd.s32 %v2451, %v2449
      %v2453 = vand.u32 %v2436, 65535
      %v2454 = vshra.s32 %v2436, 16
      %v2455 = vcvt.s32.f32 %v2453
      %v2456 = vcvt.s32.f32 %v2454
      %2457 = vmin.xlane.f32.xlu0 %v2456
      %v2458 = vpop.xlane.xlu0 %2457
      %vm2459 = vcmp.eq.f32.partialorder %v2456, %v2458
      %v2460 = vsel %vm2459, %v2455, inf
      %2461 = vmin.xlane.f32.xlu0 %v2460
      %v2462 = vpop.xlane.xlu0 %2461
      %v2463 = vcvt.f32.s32 %v2462
      %v2464 = vcvt.f32.s32 %v2458
      %v2465 = vshll.u32 %v2464, 16
      %v2466 = vadd.s32 %v2465, %v2463
      %v2467 = vand.u32 %v2437, 65535
      %v2468 = vshra.s32 %v2437, 16
      %v2469 = vcvt.s32.f32 %v2467
      %v2470 = vcvt.s32.f32 %v2468
      %2471 = vmin.xlane.f32.xlu0 %v2470
      %v2472 = vpop.xlane.xlu0 %2471
      %vm2473 = vcmp.eq.f32.partialorder %v2470, %v2472
      %v2474 = vsel %vm2473, %v2469, inf
      %2475 = vmin.xlane.f32.xlu0 %v2474
      %v2476 = vpop.xlane.xlu0 %2475
      %v2477 = vcvt.f32.s32 %v2476
      %v2478 = vcvt.f32.s32 %v2472
      %v2479 = vshll.u32 %v2478, 16
      %v2480 = vadd.s32 %v2479, %v2477
      %v2481 = vand.u32 %v2438, 65535
      %v2482 = vshra.s32 %v2438, 16
      %v2483 = vcvt.s32.f32 %v2481
      %v2484 = vcvt.s32.f32 %v2482
      %2485 = vmin.xlane.f32.xlu0 %v2484
      %v2486 = vpop.xlane.xlu0 %2485
      %vm2487 = vcmp.eq.f32.partialorder %v2484, %v2486
      %v2488 = vsel %vm2487, %v2483, inf
      %2489 = vmin.xlane.f32.xlu0 %v2488
      %v2490 = vpop.xlane.xlu0 %2489
      %v2491 = vcvt.f32.s32 %v2490
      %v2492 = vcvt.f32.s32 %v2486
      %v2493 = vshll.u32 %v2492, 16
      %v2494 = vadd.s32 %v2493, %v2491
      %vm2495 = vcmp.lt.s32.totalorder %v2452, 128
      %vm2496 = vcmp.lt.s32.totalorder %v2466, 128
      %vm2497 = vcmp.lt.s32.totalorder %v2480, 128
      %vm2498 = vcmp.lt.s32.totalorder %v2494, 128
      %v2499 = vsel %vm2495, %v2452, %v379
      %v2500 = vsel %vm2496, %v2466, %v380
      %v2501 = vsel %vm2497, %v2480, %v381
      %v2502 = vsel %vm2498, %v2494, %v382
      %vm2503 = vcmp.ne.s32.totalorder %v312, %v2452
      %vm2504 = vcmp.ne.s32.totalorder %v312, %v2466
      %vm2505 = vcmp.ne.s32.totalorder %v312, %v2480
      %vm2506 = vcmp.ne.s32.totalorder %v312, %v2494
      %vm2507 = vmand %vm2347, %vm2503
      %vm2508 = vmand %vm2348, %vm2504
      %vm2509 = vmand %vm2349, %vm2505
      %vm2510 = vmand %vm2350, %vm2506
      %vm2511 = vcmp.eq.s32.totalorder %v312, %v2499
      %vm2512 = vcmp.eq.s32.totalorder %v312, %v2500
      %vm2513 = vcmp.eq.s32.totalorder %v312, %v2501
      %vm2514 = vcmp.eq.s32.totalorder %v312, %v2502
      %v2515 = vsel %vm2511, 1, 0
      %v2516 = vsel %vm2512, 1, 0
      %v2517 = vsel %vm2513, 1, 0
      %v2518 = vsel %vm2514, 1, 0
      %v2519 = vcvt.s32.f32 %v2515
      %v2520 = vcvt.s32.f32 %v2516
      %v2521 = vcvt.s32.f32 %v2517
      %v2522 = vcvt.s32.f32 %v2518
      %2523 = vmatprep.subr.mxu0 0.0
      %2524 = vmatpush1.xpose.msra.mxu0 %v2519
      %2525 = vmatprep.subr.mxu0 0.0
      %2526 = vmatpush1.xpose.msra.mxu0 %v2520
      %2527 = vmatprep.subr.mxu0 0.0
      %2528 = vmatpush1.xpose.msra.mxu0 %v2521
      %2529 = vmatprep.subr.mxu0 0.0
      %2530 = vmatpush1.xpose.msra.mxu0 %v2522
      %2531 = vmatprep.subr.mxu0 0.0
      %2532 = vmatpush1.xpose.msra.mxu0 0.0
      %2533 = vmatprep.subr.mxu0 0.0
      %2534 = vmatpush1.xpose.msra.mxu0 0.0
      %2535 = vmatprep.subr.mxu0 0.0
      %2536 = vmatpush1.xpose.msra.mxu0 0.0
      %2537 = vmatprep.subr.mxu0 0.0
      %2538 = vmatpush1.xpose.msra.mxu0 0.0
      %2539 = vmatprep.subr.mxu0 0.0
      %2540 = vmatpush1.xpose.msra.mxu0 0.0
      %2541 = vmatprep.subr.mxu0 0.0
      %2542 = vmatpush1.xpose.msra.mxu0 0.0
      %2543 = vmatprep.subr.mxu0 0.0
      %2544 = vmatpush1.xpose.msra.mxu0 0.0
      %2545 = vmatprep.subr.mxu0 0.0
      %2546 = vmatpush1.xpose.msra.mxu0 0.0
      %2547 = vmatprep.subr.mxu0 0.0
      %2548 = vmatpush1.xpose.msra.mxu0 0.0
      %2549 = vmatprep.subr.mxu0 0.0
      %2550 = vmatpush1.xpose.msra.mxu0 0.0
      %2551 = vmatprep.subr.mxu0 0.0
      %2552 = vmatpush1.xpose.msra.mxu0 0.0
      %2553 = vmatprep.subr.mxu0 0.0
      %2554 = vmatpush1.xpose.msra.mxu0 0.0
      %2555 = vmatprep.subr.mxu0 0.0
      %2556 = vmatpush1.xpose.msra.mxu0 0.0
      %2557 = vmatprep.subr.mxu0 0.0
      %2558 = vmatpush1.xpose.msra.mxu0 0.0
      %2559 = vmatprep.subr.mxu0 0.0
      %2560 = vmatpush1.xpose.msra.mxu0 0.0
      %2561 = vmatprep.subr.mxu0 0.0
      %2562 = vmatpush1.xpose.msra.mxu0 0.0
      %2563 = vmatprep.subr.mxu0 0.0
      %2564 = vmatpush1.xpose.msra.mxu0 0.0
      %2565 = vmatprep.subr.mxu0 0.0
      %2566 = vmatpush1.xpose.msra.mxu0 0.0
      %2567 = vmatprep.subr.mxu0 0.0
      %2568 = vmatpush1.xpose.msra.mxu0 0.0
      %2569 = vmatprep.subr.mxu0 0.0
      %2570 = vmatpush1.xpose.msra.mxu0 0.0
      %2571 = vmatprep.subr.mxu0 0.0
      %2572 = vmatpush1.xpose.msra.mxu0 0.0
      %2573 = vmatprep.subr.mxu0 0.0
      %2574 = vmatpush1.xpose.msra.mxu0 0.0
      %2575 = vmatprep.subr.mxu0 0.0
      %2576 = vmatpush1.xpose.msra.mxu0 0.0
      %2577 = vmatprep.subr.mxu0 0.0
      %2578 = vmatpush1.xpose.msra.mxu0 0.0
      %2579 = vmatprep.subr.mxu0 0.0
      %2580 = vmatpush1.xpose.msra.mxu0 0.0
      %2581 = vmatprep.subr.mxu0 0.0
      %2582 = vmatpush1.xpose.msra.mxu0 0.0
      %2583 = vmatprep.subr.mxu0 0.0
      %2584 = vmatpush1.xpose.msra.mxu0 0.0
      %2585 = vmatprep.subr.mxu0 0.0
      %2586 = vmatpush1.xpose.msra.mxu0 0.0
      %2587 = vmatprep.mubr.f32.mxu0 0.0
      %2588 = vmatmul.mubr.f32.gmra.mrb[0].mxu0 %v205
      %v2589 = vpop.f32.mrb[0].mxu0
      %v2590 = vadd.f32 0.0, %v2589
      %v2591 = vpop.f32.mrb[0].mxu0
      %2592 = vdwg.mxu0
      %v2593 = vsub.f32 %v2590, %v314
      %2595 = vrot.lane.b32.xlu0 %v2593, 32
      %v2596 = vpop.permute.xlu0 %2595
      %2598 = vst.msk [vmem:[%s204 + $0x18] sm:$0x7f] %vm639, %v2596
      %v2599 = vsel %vm2507, %v312, 128
      %v2600 = vsel %vm2508, %v312, 128
      %v2601 = vsel %vm2509, %v312, 128
      %v2602 = vsel %vm2510, %v312, 128
      %v2603 = vand.u32 %v2599, 65535
      %v2604 = vshra.s32 %v2599, 16
      %v2605 = vcvt.s32.f32 %v2603
      %v2606 = vcvt.s32.f32 %v2604
      %2607 = vmin.xlane.f32.xlu0 %v2606
      %v2608 = vpop.xlane.xlu0 %2607
      %vm2609 = vcmp.eq.f32.partialorder %v2606, %v2608
      %v2610 = vsel %vm2609, %v2605, inf
      %2611 = vmin.xlane.f32.xlu0 %v2610
      %v2612 = vpop.xlane.xlu0 %2611
      %v2613 = vcvt.f32.s32 %v2612
      %v2614 = vcvt.f32.s32 %v2608
      %v2615 = vshll.u32 %v2614, 16
      %v2616 = vadd.s32 %v2615, %v2613
      %v2617 = vand.u32 %v2600, 65535
      %v2618 = vshra.s32 %v2600, 16
      %v2619 = vcvt.s32.f32 %v2617
      %v2620 = vcvt.s32.f32 %v2618
      %2621 = vmin.xlane.f32.xlu0 %v2620
      %v2622 = vpop.xlane.xlu0 %2621
      %vm2623 = vcmp.eq.f32.partialorder %v2620, %v2622
      %v2624 = vsel %vm2623, %v2619, inf
      %2625 = vmin.xlane.f32.xlu0 %v2624
      %v2626 = vpop.xlane.xlu0 %2625
      %v2627 = vcvt.f32.s32 %v2626
      %v2628 = vcvt.f32.s32 %v2622
      %v2629 = vshll.u32 %v2628, 16
      %v2630 = vadd.s32 %v2629, %v2627
      %v2631 = vand.u32 %v2601, 65535
      %v2632 = vshra.s32 %v2601, 16
      %v2633 = vcvt.s32.f32 %v2631
      %v2634 = vcvt.s32.f32 %v2632
      %2635 = vmin.xlane.f32.xlu0 %v2634
      %v2636 = vpop.xlane.xlu0 %2635
      %vm2637 = vcmp.eq.f32.partialorder %v2634, %v2636
      %v2638 = vsel %vm2637, %v2633, inf
      %2639 = vmin.xlane.f32.xlu0 %v2638
      %v2640 = vpop.xlane.xlu0 %2639
      %v2641 = vcvt.f32.s32 %v2640
      %v2642 = vcvt.f32.s32 %v2636
      %v2643 = vshll.u32 %v2642, 16
      %v2644 = vadd.s32 %v2643, %v2641
      %v2645 = vand.u32 %v2602, 65535
      %v2646 = vshra.s32 %v2602, 16
      %v2647 = vcvt.s32.f32 %v2645
      %v2648 = vcvt.s32.f32 %v2646
      %2649 = vmin.xlane.f32.xlu0 %v2648
      %v2650 = vpop.xlane.xlu0 %2649
      %vm2651 = vcmp.eq.f32.partialorder %v2648, %v2650
      %v2652 = vsel %vm2651, %v2647, inf
      %2653 = vmin.xlane.f32.xlu0 %v2652
      %v2654 = vpop.xlane.xlu0 %2653
      %v2655 = vcvt.f32.s32 %v2654
      %v2656 = vcvt.f32.s32 %v2650
      %v2657 = vshll.u32 %v2656, 16
      %v2658 = vadd.s32 %v2657, %v2655
      %vm2659 = vcmp.lt.s32.totalorder %v2616, 128
      %vm2660 = vcmp.lt.s32.totalorder %v2630, 128
      %vm2661 = vcmp.lt.s32.totalorder %v2644, 128
      %vm2662 = vcmp.lt.s32.totalorder %v2658, 128
      %v2663 = vsel %vm2659, %v2616, %v379
      %v2664 = vsel %vm2660, %v2630, %v380
      %v2665 = vsel %vm2661, %v2644, %v381
      %v2666 = vsel %vm2662, %v2658, %v382
      %vm2667 = vcmp.ne.s32.totalorder %v312, %v2616
      %vm2668 = vcmp.ne.s32.totalorder %v312, %v2630
      %vm2669 = vcmp.ne.s32.totalorder %v312, %v2644
      %vm2670 = vcmp.ne.s32.totalorder %v312, %v2658
      %vm2671 = vmand %vm2507, %vm2667
      %vm2672 = vmand %vm2508, %vm2668
      %vm2673 = vmand %vm2509, %vm2669
      %vm2674 = vmand %vm2510, %vm2670
      %vm2675 = vcmp.eq.s32.totalorder %v312, %v2663
      %vm2676 = vcmp.eq.s32.totalorder %v312, %v2664
      %vm2677 = vcmp.eq.s32.totalorder %v312, %v2665
      %vm2678 = vcmp.eq.s32.totalorder %v312, %v2666
      %v2679 = vsel %vm2675, 1, 0
      %v2680 = vsel %vm2676, 1, 0
      %v2681 = vsel %vm2677, 1, 0
      %v2682 = vsel %vm2678, 1, 0
      %v2683 = vcvt.s32.f32 %v2679
      %v2684 = vcvt.s32.f32 %v2680
      %v2685 = vcvt.s32.f32 %v2681
      %v2686 = vcvt.s32.f32 %v2682
      %2687 = vmatprep.subr.mxu0 0.0
      %2688 = vmatpush1.xpose.msra.mxu0 %v2683
      %2689 = vmatprep.subr.mxu0 0.0
      %2690 = vmatpush1.xpose.msra.mxu0 %v2684
      %2691 = vmatprep.subr.mxu0 0.0
      %2692 = vmatpush1.xpose.msra.mxu0 %v2685
      %2693 = vmatprep.subr.mxu0 0.0
      %2694 = vmatpush1.xpose.msra.mxu0 %v2686
      %2695 = vmatprep.subr.mxu0 0.0
      %2696 = vmatpush1.xpose.msra.mxu0 0.0
      %2697 = vmatprep.subr.mxu0 0.0
      %2698 = vmatpush1.xpose.msra.mxu0 0.0
      %2699 = vmatprep.subr.mxu0 0.0
      %2700 = vmatpush1.xpose.msra.mxu0 0.0
      %2701 = vmatprep.subr.mxu0 0.0
      %2702 = vmatpush1.xpose.msra.mxu0 0.0
      %2703 = vmatprep.subr.mxu0 0.0
      %2704 = vmatpush1.xpose.msra.mxu0 0.0
      %2705 = vmatprep.subr.mxu0 0.0
      %2706 = vmatpush1.xpose.msra.mxu0 0.0
      %2707 = vmatprep.subr.mxu0 0.0
      %2708 = vmatpush1.xpose.msra.mxu0 0.0
      %2709 = vmatprep.subr.mxu0 0.0
      %2710 = vmatpush1.xpose.msra.mxu0 0.0
      %2711 = vmatprep.subr.mxu0 0.0
      %2712 = vmatpush1.xpose.msra.mxu0 0.0
      %2713 = vmatprep.subr.mxu0 0.0
      %2714 = vmatpush1.xpose.msra.mxu0 0.0
      %2715 = vmatprep.subr.mxu0 0.0
      %2716 = vmatpush1.xpose.msra.mxu0 0.0
      %2717 = vmatprep.subr.mxu0 0.0
      %2718 = vmatpush1.xpose.msra.mxu0 0.0
      %2719 = vmatprep.subr.mxu0 0.0
      %2720 = vmatpush1.xpose.msra.mxu0 0.0
      %2721 = vmatprep.subr.mxu0 0.0
      %2722 = vmatpush1.xpose.msra.mxu0 0.0
      %2723 = vmatprep.subr.mxu0 0.0
      %2724 = vmatpush1.xpose.msra.mxu0 0.0
      %2725 = vmatprep.subr.mxu0 0.0
      %2726 = vmatpush1.xpose.msra.mxu0 0.0
      %2727 = vmatprep.subr.mxu0 0.0
      %2728 = vmatpush1.xpose.msra.mxu0 0.0
      %2729 = vmatprep.subr.mxu0 0.0
      %2730 = vmatpush1.xpose.msra.mxu0 0.0
      %2731 = vmatprep.subr.mxu0 0.0
      %2732 = vmatpush1.xpose.msra.mxu0 0.0
      %2733 = vmatprep.subr.mxu0 0.0
      %2734 = vmatpush1.xpose.msra.mxu0 0.0
      %2735 = vmatprep.subr.mxu0 0.0
      %2736 = vmatpush1.xpose.msra.mxu0 0.0
      %2737 = vmatprep.subr.mxu0 0.0
      %2738 = vmatpush1.xpose.msra.mxu0 0.0
      %2739 = vmatprep.subr.mxu0 0.0
      %2740 = vmatpush1.xpose.msra.mxu0 0.0
      %2741 = vmatprep.subr.mxu0 0.0
      %2742 = vmatpush1.xpose.msra.mxu0 0.0
      %2743 = vmatprep.subr.mxu0 0.0
      %2744 = vmatpush1.xpose.msra.mxu0 0.0
      %2745 = vmatprep.subr.mxu0 0.0
      %2746 = vmatpush1.xpose.msra.mxu0 0.0
      %2747 = vmatprep.subr.mxu0 0.0
      %2748 = vmatpush1.xpose.msra.mxu0 0.0
      %2749 = vmatprep.subr.mxu0 0.0
      %2750 = vmatpush1.xpose.msra.mxu0 0.0
      %2751 = vmatprep.mubr.f32.mxu0 0.0
      %2752 = vmatmul.mubr.f32.gmra.mrb[0].mxu0 %v205
      %v2753 = vpop.f32.mrb[0].mxu0
      %v2754 = vadd.f32 0.0, %v2753
      %v2755 = vpop.f32.mrb[0].mxu0
      %2756 = vdwg.mxu0
      %v2757 = vsub.f32 %v2754, %v314
      %2759 = vrot.lane.b32.xlu0 %v2757, 64
      %v2760 = vpop.permute.xlu0 %2759
      %2762 = vst.msk [vmem:[%s204 + $0x18] sm:$0x7f] %vm804, %v2760
      %v2763 = vsel %vm2671, %v312, 128
      %v2764 = vsel %vm2672, %v312, 128
      %v2765 = vsel %vm2673, %v312, 128
      %v2766 = vsel %vm2674, %v312, 128
      %v2767 = vand.u32 %v2763, 65535
      %v2768 = vshra.s32 %v2763, 16
      %v2769 = vcvt.s32.f32 %v2767
      %v2770 = vcvt.s32.f32 %v2768
      %2771 = vmin.xlane.f32.xlu0 %v2770
      %v2772 = vpop.xlane.xlu0 %2771
      %vm2773 = vcmp.eq.f32.partialorder %v2770, %v2772
      %v2774 = vsel %vm2773, %v2769, inf
      %2775 = vmin.xlane.f32.xlu0 %v2774
      %v2776 = vpop.xlane.xlu0 %2775
      %v2777 = vcvt.f32.s32 %v2776
      %v2778 = vcvt.f32.s32 %v2772
      %v2779 = vshll.u32 %v2778, 16
      %v2780 = vadd.s32 %v2779, %v2777
      %v2781 = vand.u32 %v2764, 65535
      %v2782 = vshra.s32 %v2764, 16
      %v2783 = vcvt.s32.f32 %v2781
      %v2784 = vcvt.s32.f32 %v2782
      %2785 = vmin.xlane.f32.xlu0 %v2784
      %v2786 = vpop.xlane.xlu0 %2785
      %vm2787 = vcmp.eq.f32.partialorder %v2784, %v2786
      %v2788 = vsel %vm2787, %v2783, inf
      %2789 = vmin.xlane.f32.xlu0 %v2788
      %v2790 = vpop.xlane.xlu0 %2789
      %v2791 = vcvt.f32.s32 %v2790
      %v2792 = vcvt.f32.s32 %v2786
      %v2793 = vshll.u32 %v2792, 16
      %v2794 = vadd.s32 %v2793, %v2791
      %v2795 = vand.u32 %v2765, 65535
      %v2796 = vshra.s32 %v2765, 16
      %v2797 = vcvt.s32.f32 %v2795
      %v2798 = vcvt.s32.f32 %v2796
      %2799 = vmin.xlane.f32.xlu0 %v2798
      %v2800 = vpop.xlane.xlu0 %2799
      %vm2801 = vcmp.eq.f32.partialorder %v2798, %v2800
      %v2802 = vsel %vm2801, %v2797, inf
      %2803 = vmin.xlane.f32.xlu0 %v2802
      %v2804 = vpop.xlane.xlu0 %2803
      %v2805 = vcvt.f32.s32 %v2804
      %v2806 = vcvt.f32.s32 %v2800
      %v2807 = vshll.u32 %v2806, 16
      %v2808 = vadd.s32 %v2807, %v2805
      %v2809 = vand.u32 %v2766, 65535
      %v2810 = vshra.s32 %v2766, 16
      %v2811 = vcvt.s32.f32 %v2809
      %v2812 = vcvt.s32.f32 %v2810
      %2813 = vmin.xlane.f32.xlu0 %v2812
      %v2814 = vpop.xlane.xlu0 %2813
      %vm2815 = vcmp.eq.f32.partialorder %v2812, %v2814
      %v2816 = vsel %vm2815, %v2811, inf
      %2817 = vmin.xlane.f32.xlu0 %v2816
      %v2818 = vpop.xlane.xlu0 %2817
      %v2819 = vcvt.f32.s32 %v2818
      %v2820 = vcvt.f32.s32 %v2814
      %v2821 = vshll.u32 %v2820, 16
      %v2822 = vadd.s32 %v2821, %v2819
      %vm2823 = vcmp.lt.s32.totalorder %v2780, 128
      %vm2824 = vcmp.lt.s32.totalorder %v2794, 128
      %vm2825 = vcmp.lt.s32.totalorder %v2808, 128
      %vm2826 = vcmp.lt.s32.totalorder %v2822, 128
      %v2827 = vsel %vm2823, %v2780, %v379
      %v2828 = vsel %vm2824, %v2794, %v380
      %v2829 = vsel %vm2825, %v2808, %v381
      %v2830 = vsel %vm2826, %v2822, %v382
      %vm2831 = vcmp.eq.s32.totalorder %v312, %v2827
      %vm2832 = vcmp.eq.s32.totalorder %v312, %v2828
      %vm2833 = vcmp.eq.s32.totalorder %v312, %v2829
      %vm2834 = vcmp.eq.s32.totalorder %v312, %v2830
      %v2835 = vsel %vm2831, 1, 0
      %v2836 = vsel %vm2832, 1, 0
      %v2837 = vsel %vm2833, 1, 0
      %v2838 = vsel %vm2834, 1, 0
      %v2839 = vcvt.s32.f32 %v2835
      %v2840 = vcvt.s32.f32 %v2836
      %v2841 = vcvt.s32.f32 %v2837
      %v2842 = vcvt.s32.f32 %v2838
      %2843 = vmatprep.subr.mxu0 0.0
      %2844 = vmatpush1.xpose.msra.mxu0 %v2839
      %2845 = vmatprep.subr.mxu0 0.0
      %2846 = vmatpush1.xpose.msra.mxu0 %v2840
      %2847 = vmatprep.subr.mxu0 0.0
      %2848 = vmatpush1.xpose.msra.mxu0 %v2841
      %2849 = vmatprep.subr.mxu0 0.0
      %2850 = vmatpush1.xpose.msra.mxu0 %v2842
      %2851 = vmatprep.subr.mxu0 0.0
      %2852 = vmatpush1.xpose.msra.mxu0 0.0
      %2853 = vmatprep.subr.mxu0 0.0
      %2854 = vmatpush1.xpose.msra.mxu0 0.0
      %2855 = vmatprep.subr.mxu0 0.0
      %2856 = vmatpush1.xpose.msra.mxu0 0.0
      %2857 = vmatprep.subr.mxu0 0.0
      %2858 = vmatpush1.xpose.msra.mxu0 0.0
      %2859 = vmatprep.subr.mxu0 0.0
      %2860 = vmatpush1.xpose.msra.mxu0 0.0
      %2861 = vmatprep.subr.mxu0 0.0
      %2862 = vmatpush1.xpose.msra.mxu0 0.0
      %2863 = vmatprep.subr.mxu0 0.0
      %2864 = vmatpush1.xpose.msra.mxu0 0.0
      %2865 = vmatprep.subr.mxu0 0.0
      %2866 = vmatpush1.xpose.msra.mxu0 0.0
      %2867 = vmatprep.subr.mxu0 0.0
      %2868 = vmatpush1.xpose.msra.mxu0 0.0
      %2869 = vmatprep.subr.mxu0 0.0
      %2870 = vmatpush1.xpose.msra.mxu0 0.0
      %2871 = vmatprep.subr.mxu0 0.0
      %2872 = vmatpush1.xpose.msra.mxu0 0.0
      %2873 = vmatprep.subr.mxu0 0.0
      %2874 = vmatpush1.xpose.msra.mxu0 0.0
      %2875 = vmatprep.subr.mxu0 0.0
      %2876 = vmatpush1.xpose.msra.mxu0 0.0
      %2877 = vmatprep.subr.mxu0 0.0
      %2878 = vmatpush1.xpose.msra.mxu0 0.0
      %2879 = vmatprep.subr.mxu0 0.0
      %2880 = vmatpush1.xpose.msra.mxu0 0.0
      %2881 = vmatprep.subr.mxu0 0.0
      %2882 = vmatpush1.xpose.msra.mxu0 0.0
      %2883 = vmatprep.subr.mxu0 0.0
      %2884 = vmatpush1.xpose.msra.mxu0 0.0
      %2885 = vmatprep.subr.mxu0 0.0
      %2886 = vmatpush1.xpose.msra.mxu0 0.0
      %2887 = vmatprep.subr.mxu0 0.0
      %2888 = vmatpush1.xpose.msra.mxu0 0.0
      %2889 = vmatprep.subr.mxu0 0.0
      %2890 = vmatpush1.xpose.msra.mxu0 0.0
      %2891 = vmatprep.subr.mxu0 0.0
      %2892 = vmatpush1.xpose.msra.mxu0 0.0
      %2893 = vmatprep.subr.mxu0 0.0
      %2894 = vmatpush1.xpose.msra.mxu0 0.0
      %2895 = vmatprep.subr.mxu0 0.0
      %2896 = vmatpush1.xpose.msra.mxu0 0.0
      %2897 = vmatprep.subr.mxu0 0.0
      %2898 = vmatpush1.xpose.msra.mxu0 0.0
      %2899 = vmatprep.subr.mxu0 0.0
      %2900 = vmatpush1.xpose.msra.mxu0 0.0
      %2901 = vmatprep.subr.mxu0 0.0
      %2902 = vmatpush1.xpose.msra.mxu0 0.0
      %2903 = vmatprep.subr.mxu0 0.0
      %2904 = vmatpush1.xpose.msra.mxu0 0.0
      %2905 = vmatprep.subr.mxu0 0.0
      %2906 = vmatpush1.xpose.msra.mxu0 0.0
      %2907 = vmatprep.mubr.f32.mxu0 0.0
      %2908 = vmatmul.mubr.f32.gmra.mrb[0].mxu0 %v205
      %v2909 = vpop.f32.mrb[0].mxu0
      %v2910 = vadd.f32 0.0, %v2909
      %v2911 = vpop.f32.mrb[0].mxu0
      %2912 = vdwg.mxu0
      %v2913 = vsub.f32 %v2910, %v314
      %2915 = vrot.lane.b32.xlu0 %v2913, 96
      %v2916 = vpop.permute.xlu0 %2915
      %2918 = vst.msk [vmem:[%s204 + $0x18] sm:$0x7f] %vm969, %v2916
      %p2919 = scmp.lt.s32.totalorder %s14, 1
      %s2920 = scalar_select %p2919, %s14, 1
      %s2921 = smul.addr %s2920, 4
      %s2922 = smul.addr %s2921, 8
      %s2923 = scalar_lea.vmem %s3, %s2922
      // Predicated region
      $region33: #{local_grouper.3} parent=31 // pred_check
        %p2924 = pneg %p110
      $region34: #{local_grouper.3} parent=31 // pred_check_branch
        %2926 = sbr.rel (%p2924) target = $region36
      $region35: #{local_grouper.3} parent=31 // pred_region
        _
      $region36: #{local_grouper.3} parent=31 // pred_fallthru
        _
    $region32: #{local_grouper.3} parent=5 // pred_fallthru
      _
    %p2927 = scmp.le.s32.totalorder 2, %s9
    // Predicated region
    $region37: #{local_grouper.3} parent=5 // pred_check
      %p2928 = pneg %p2927
    $region38: #{local_grouper.3} parent=5 // pred_check_branch
      %2930 = sbr.rel (%p2928) target = $region40
    $region39: #{local_grouper.3} parent=5 // pred_region
      %s2931 = ssub.s32 %s9, 2
      // Predicated region
      $region41: #{local_grouper.3} parent=39 // pred_check
        %p2932 = pneg %p116
      $region42: #{local_grouper.3} parent=39 // pred_check_branch
        %2934 = sbr.rel (%p2932) target = $region44
      $region43: #{local_grouper.3} parent=39 // pred_region
        %p2935 = scmp.lt.s32.totalorder %s15, 1
        %s2936 = scalar_select %p2935, %s15, 1
        %s2937 = smul.addr %s2936, 4
        %s2938 = smul.addr %s2937, 8
        %s2939 = scalar_lea.vmem %s3, %s2938
      $region44: #{local_grouper.3} parent=39 // pred_fallthru
        _
    $region40: #{local_grouper.3} parent=5 // pred_fallthru
      _
  $region6: #{local_grouper.3} parent=0 // loop_footer
    %s13 = sadd.s32 1, %s9
  $region7: #{local_grouper.3} parent=0 // loop_footer_branch
    %8 = sbr.rel target = $region3
  $region8: #{local_grouper.3} parent=0 // loop_exit
    _

</llo_original>
